<compile_context>
chip_gen: v5e
topology: v5e:2x2
jax: 0.10.0
libtpu: 0.0.40
codegen_flags: <defaults>
</compile_context>

<pallas_src>
import functools
import math

import numpy as np
import jax
import jax.numpy as jnp
from jax import lax
from jax.experimental import pallas as pl
from jax.experimental.pallas import tpu as pltpu

GN_GROUPS = 32
GN_EPS = 1e-5
VMEM_LIMIT = 32 * 1024 * 1024


# ---------------------------------------------------------------------------
# Host-side constant helpers
# ---------------------------------------------------------------------------
def _pick_ct(cout):
    """Output-channel tile: 256 when possible (v6e/v7x MXU width), else 128, else Cout."""
    assert cout % GN_GROUPS == 0, "GroupNorm(32) requires Cout % 32 == 0"
    cs = cout // GN_GROUPS
    for ct in (256, 128):
        if cout % ct == 0 and ct % cs == 0:
            return ct
    return cout


@functools.lru_cache(maxsize=None)
def _group_indicators(ct, cs):
    """channel->group (CT, n_g) and group->channel (n_g, CT) 0/1 matrices (host consts)."""
    ng = ct // cs
    m = np.zeros((ct, ng), np.float32)
    for c in range(ct):
        m[c, c // cs] = 1.0
    return m, np.ascontiguousarray(m.T)


def _interp_matrix(n_in):
    """1-D bilinear x2 upsample matrix, align_corners=True (PyTorch semantics)."""
    n_out = 2 * n_in
    m = np.zeros((n_out, n_in), np.float32)
    for o in range(n_out):
        src = o * (n_in - 1) / (n_out - 1) if n_out > 1 else 0.0
        lo = int(math.floor(src))
        hi = min(lo + 1, n_in - 1)
        f = src - lo
        m[o, lo] += 1.0 - f
        m[o, hi] += f
    return m


@functools.lru_cache(maxsize=None)
def _upsample_kron_blockdiag(b, h, w):
    """(B*4HW, B*HW) block-diag kron(ih, iw): one matmul upsamples the whole batch.
    Fine at these small spatial sizes; for large H, W prefer a separable / per-batch path."""
    k = np.kron(_interp_matrix(h), _interp_matrix(w)).astype(np.float32)   # (4HW, HW)
    hw, hw4 = h * w, 4 * h * w
    kb = np.zeros((b * hw4, b * hw), np.float32)
    for i in range(b):
        kb[i * hw4:(i + 1) * hw4, i * hw:(i + 1) * hw] = k
    return kb


# ---------------------------------------------------------------------------
# In-kernel helpers
# ---------------------------------------------------------------------------
def _conv3x3_bf16(x4, w_bf16, bias, H, W):
    """x4 (B, H+2, W+2, Cin) f32 -> im2col (B*HW, 9*Cin) bf16 -> one MXU matmul.
    Returns the f32 conv result (B*HW, CT) with bias added."""
    B = x4.shape[0]
    Cin = x4.shape[-1]
    cols = []
    for dh in range(3):
        for dw in range(3):
            cols.append(x4[:, dh:dh + H, dw:dw + W, :].reshape(B * H * W, Cin))
    patches = jnp.concatenate(cols, axis=-1).astype(jnp.bfloat16)   # (B*HW, 9*Cin)
    acc = jnp.dot(patches, w_bf16, preferred_element_type=jnp.float32)
    return acc + bias                                               # (1, CT) broadcast


def _gn_relu(acc, gamma, beta, m_ind, mt_ind, B, HW, cs):
    """GroupNorm(32) + ReLU on acc (B*HW, CT); per-batch, per-group stats.
    Groups are `cs` contiguous channels; CT is always a multiple of cs so every
    group is complete inside the tile. Centered two-pass variance."""
    CT = acc.shape[-1]
    cnt = float(HW * cs)
    acc3 = acc.reshape(B, HW, CT)
    s1 = jnp.sum(acc3, axis=1)                                                   # (B, CT)
    mean_c = jnp.dot(jnp.dot(s1, m_ind, preferred_element_type=jnp.float32) / cnt,
                     mt_ind, preferred_element_type=jnp.float32)                 # (B, CT)
    d = acc3 - mean_c[:, None, :]
    var_g = jnp.dot(jnp.sum(d * d, axis=1), m_ind,
                    preferred_element_type=jnp.float32) / cnt                    # (B, n_g)
    rstd_c = jnp.dot(lax.rsqrt(var_g + GN_EPS), mt_ind,
                     preferred_element_type=jnp.float32)                         # (B, CT)
    y = d * rstd_c[:, None, :] * gamma.reshape(1, 1, CT) + beta.reshape(1, 1, CT)
    return jnp.maximum(y, 0.0)                                                   # (B, HW, CT)


# ---------------------------------------------------------------------------
# Kernel 1: fused fusion stage
#   attn_s = softmax(sent @ Wls + bls); attn_v = softmax(sent @ Wlv + blv)
#   out = GN(conv3x3(attn_v * video)) relu + GN(conv3x3(attn_s * spatial)) relu
# Grid: (Cout // CT,)  — batch and all spatial positions live in the matmul M dim.
# ---------------------------------------------------------------------------
def _fusion_stage_kernel(sent_ref, wls_ref, bls_ref, wlv_ref, blv_ref,
                         xs_ref, xv_ref,
                         ws_ref, bs_ref, gs_ref, zs_ref,
                         wv_ref, bv_ref, gv_ref, zv_ref,
                         m_ref, mt_ref, o_ref, *, H, W, cs):
    B = xs_ref.shape[0]
    HW = H * W
    sent = sent_ref[...]
    m_ind = m_ref[...]
    mt_ind = mt_ref[...]

    def softmax_attn(wl_ref, bl_ref):
        z = jnp.dot(sent, wl_ref[...], preferred_element_type=jnp.float32) + bl_ref[...]
        z = z - jnp.max(z, axis=1, keepdims=True)
        e = jnp.exp(z)
        return e / jnp.sum(e, axis=1, keepdims=True)                # (B, Cin)

    def branch(x_ref, attn, w_ref, b_ref, g_ref, z_ref):
        x = x_ref[...] * attn[:, None, None, :]                     # (B, H+2, W+2, Cin)
        acc = _conv3x3_bf16(x, w_ref[...], b_ref[...], H, W)        # (B*HW, CT) f32
        return _gn_relu(acc, g_ref[...], z_ref[...], m_ind, mt_ind, B, HW, cs)

    ys = branch(xs_ref, softmax_attn(wls_ref, bls_ref), ws_ref, bs_ref, gs_ref, zs_ref)
    yv = branch(xv_ref, softmax_attn(wlv_ref, blv_ref), wv_ref, bv_ref, gv_ref, zv_ref)
    o_ref[...] = (ys + yv).astype(o_ref.dtype)


def fusion_stage(sent, lin_s, lin_v, xs_nhwc, xv_nhwc, trans_s, trans_v):
    """Returns the fused stage feature, flat (B, H*W, Cout) f32."""
    B, H, W, Cs = xs_nhwc.shape
    Cv = xv_nhwc.shape[-1]
    S = sent.shape[1]
    Cout = trans_s['w'].shape[-1]
    CT = _pick_ct(Cout)
    cs = Cout // GN_GROUPS
    n_g = CT // cs
    m_np, mt_np = _group_indicators(CT, cs)
    m_ind, mt_ind = jnp.asarray(m_np), jnp.asarray(mt_np)

    xs_pad = jnp.pad(xs_nhwc, ((0, 0), (1, 1), (1, 1), (0, 0)))
    xv_pad = jnp.pad(xv_nhwc, ((0, 0), (1, 1), (1, 1), (0, 0)))
    ws = trans_s['w'].reshape(9 * Cs, Cout).astype(jnp.bfloat16)
    wv = trans_v['w'].reshape(9 * Cv, Cout).astype(jnp.bfloat16)

    kern = functools.partial(_fusion_stage_kernel, H=H, W=W, cs=cs)
    return pl.pallas_call(
        kern,
        out_shape=jax.ShapeDtypeStruct((B, H * W, Cout), jnp.float32),
        grid=(Cout // CT,),
        in_specs=[
            pl.BlockSpec((B, S), lambda c: (0, 0)),                       # sent
            pl.BlockSpec((S, Cs), lambda c: (0, 0)),                      # lin_s w
            pl.BlockSpec((1, Cs), lambda c: (0, 0)),                      # lin_s b
            pl.BlockSpec((S, Cv), lambda c: (0, 0)),                      # lin_v w
            pl.BlockSpec((1, Cv), lambda c: (0, 0)),                      # lin_v b
            pl.BlockSpec((B, H + 2, W + 2, Cs), lambda c: (0, 0, 0, 0)),  # spatial (padded)
            pl.BlockSpec((B, H + 2, W + 2, Cv), lambda c: (0, 0, 0, 0)),  # video (padded)
            pl.BlockSpec((9 * Cs, CT), lambda c: (0, c)),                 # conv w (spatial)
            pl.BlockSpec((1, CT), lambda c: (0, c)),                      # conv b
            pl.BlockSpec((1, CT), lambda c: (0, c)),                      # gamma
            pl.BlockSpec((1, CT), lambda c: (0, c)),                      # beta
            pl.BlockSpec((9 * Cv, CT), lambda c: (0, c)),                 # conv w (video)
            pl.BlockSpec((1, CT), lambda c: (0, c)),
            pl.BlockSpec((1, CT), lambda c: (0, c)),
            pl.BlockSpec((1, CT), lambda c: (0, c)),
            pl.BlockSpec((CT, n_g), lambda c: (0, 0)),                    # group indicators
            pl.BlockSpec((n_g, CT), lambda c: (0, 0)),
        ],
        out_specs=pl.BlockSpec((B, H * W, CT), lambda c: (0, 0, c)),
        compiler_params=pltpu.CompilerParams(
            dimension_semantics=("parallel",), vmem_limit_bytes=VMEM_LIMIT),
    )(sent, lin_s['w'], lin_s['b'], lin_v['w'], lin_v['b'],
      xs_pad, xv_pad,
      ws, trans_s['b'], trans_s['gamma'], trans_s['beta'],
      wv, trans_v['b'], trans_v['gamma'], trans_v['beta'],
      m_ind, mt_ind)


# ---------------------------------------------------------------------------
# Kernel 2: conv3x3 + GN + ReLU (no attention)  — the "upsample_modules" conv.
# ---------------------------------------------------------------------------
def _conv_gn_relu_kernel(x_ref, w_ref, b_ref, g_ref, z_ref, m_ref, mt_ref, o_ref,
                         *, H, W, cs):
    B = x_ref.shape[0]
    acc = _conv3x3_bf16(x_ref[...], w_ref[...], b_ref[...], H, W)
    o_ref[...] = _gn_relu(acc, g_ref[...], z_ref[...], m_ref[...], mt_ref[...],
                          B, H * W, cs).astype(o_ref.dtype)


def conv3x3_gn_relu(x_flat, pp, H, W):
    """x_flat (B, H*W, Cin) f32 -> (B, H*W, Cout) f32."""
    B, HW, Cin = x_flat.shape
    Cout = pp['w'].shape[-1]
    CT = _pick_ct(Cout)
    cs = Cout // GN_GROUPS
    n_g = CT // cs
    m_np, mt_np = _group_indicators(CT, cs)
    m_ind, mt_ind = jnp.asarray(m_np), jnp.asarray(mt_np)

    xpad = jnp.pad(x_flat.reshape(B, H, W, Cin), ((0, 0), (1, 1), (1, 1), (0, 0)))
    w = pp['w'].reshape(9 * Cin, Cout).astype(jnp.bfloat16)

    kern = functools.partial(_conv_gn_relu_kernel, H=H, W=W, cs=cs)
    return pl.pallas_call(
        kern,
        out_shape=jax.ShapeDtypeStruct((B, HW, Cout), jnp.float32),
        grid=(Cout // CT,),
        in_specs=[
            pl.BlockSpec((B, H + 2, W + 2, Cin), lambda c: (0, 0, 0, 0)),
            pl.BlockSpec((9 * Cin, CT), lambda c: (0, c)),
            pl.BlockSpec((1, CT), lambda c: (0, c)),
            pl.BlockSpec((1, CT), lambda c: (0, c)),
            pl.BlockSpec((1, CT), lambda c: (0, c)),
            pl.BlockSpec((CT, n_g), lambda c: (0, 0)),
            pl.BlockSpec((n_g, CT), lambda c: (0, 0)),
        ],
        out_specs=pl.BlockSpec((B, HW, CT), lambda c: (0, 0, c)),
        compiler_params=pltpu.CompilerParams(
            dimension_semantics=("parallel",), vmem_limit_bytes=VMEM_LIMIT),
    )(xpad, w, pp['b'], pp['gamma'], pp['beta'], m_ind, mt_ind)


# ---------------------------------------------------------------------------
# Kernel 3: bilinear x2 upsample (one kron matmul) + residual add
#           (+ optionally the fused final 1x1 conv on the last stage).
# Upsample / 1x1 matmuls stay f32 (tiny; keeps the exact interp coefficients).
# ---------------------------------------------------------------------------
def _upsample_add_kernel(dec_ref, fus_ref, k_ref, o_ref):
    B, HW, C = dec_ref.shape
    up = jnp.dot(k_ref[...], dec_ref[...].reshape(B * HW, C),
                 preferred_element_type=jnp.float32)                 # (B*4HW, C)
    o_ref[...] = (up.reshape(o_ref.shape) + fus_ref[...]).astype(o_ref.dtype)


def _upsample_add_predict_kernel(dec_ref, fus_ref, k_ref, wp_ref, bp_ref, o_ref):
    B, HW, C = dec_ref.shape
    up = jnp.dot(k_ref[...], dec_ref[...].reshape(B * HW, C),
                 preferred_element_type=jnp.float32)                 # (B*4HW, C)
    d = up.reshape(fus_ref.shape) + fus_ref[...]                     # (B, 4HW, C)
    pred = jnp.sum(d * wp_ref[...].reshape(1, 1, C), axis=-1) + bp_ref[...]
    o_ref[...] = pred.astype(o_ref.dtype)                            # (B, 4HW)


def upsample_add(dec_flat, fusion_flat, kbd):
    B, HW, C = dec_flat.shape
    HW4 = 4 * HW
    return pl.pallas_call(
        _upsample_add_kernel,
        out_shape=jax.ShapeDtypeStruct((B, HW4, C), jnp.float32),
        grid=(1,),
        in_specs=[pl.BlockSpec((B, HW, C), lambda i: (0, 0, 0)),
                  pl.BlockSpec((B, HW4, C), lambda i: (0, 0, 0)),
                  pl.BlockSpec((B * HW4, B * HW), lambda i: (0, 0))],
        out_specs=pl.BlockSpec((B, HW4, C), lambda i: (0, 0, 0)),
        compiler_params=pltpu.CompilerParams(
            dimension_semantics=("arbitrary",), vmem_limit_bytes=VMEM_LIMIT),
    )(dec_flat, fusion_flat, kbd)


def upsample_add_predict(dec_flat, fusion_flat, kbd, wp, bp):
    B, HW, C = dec_flat.shape
    HW4 = 4 * HW
    return pl.pallas_call(
        _upsample_add_predict_kernel,
        out_shape=jax.ShapeDtypeStruct((B, HW4), jnp.float32),
        grid=(1,),
        in_specs=[pl.BlockSpec((B, HW, C), lambda i: (0, 0, 0)),
                  pl.BlockSpec((B, HW4, C), lambda i: (0, 0, 0)),
                  pl.BlockSpec((B * HW4, B * HW), lambda i: (0, 0)),
                  pl.BlockSpec((1, C), lambda i: (0, 0)),
                  pl.BlockSpec((1, 1), lambda i: (0, 0))],
        out_specs=pl.BlockSpec((B, HW4), lambda i: (0, 0)),
        compiler_params=pltpu.CompilerParams(
            dimension_semantics=("arbitrary",), vmem_limit_bytes=VMEM_LIMIT),
    )(dec_flat, fusion_flat, kbd, wp, bp)


# Standalone 1x1 predict (only needed when num_stages == 1).
def _predict_kernel(x_ref, wp_ref, bp_ref, o_ref):
    B, HW, C = x_ref.shape
    pred = jnp.sum(x_ref[...] * wp_ref[...].reshape(1, 1, C), axis=-1) + bp_ref[...]
    o_ref[...] = pred.astype(o_ref.dtype)


def predict_flat(x_flat, wp, bp):
    B, HW, C = x_flat.shape
    return pl.pallas_call(
        _predict_kernel,
        out_shape=jax.ShapeDtypeStruct((B, HW), jnp.float32),
        grid=(1,),
        in_specs=[pl.BlockSpec((B, HW, C), lambda i: (0, 0, 0)),
                  pl.BlockSpec((1, C), lambda i: (0, 0)),
                  pl.BlockSpec((1, 1), lambda i: (0, 0))],
        out_specs=pl.BlockSpec((B, HW), lambda i: (0, 0)),
        compiler_params=pltpu.CompilerParams(dimension_semantics=("arbitrary",)),
    )(x_flat, wp, bp)


# ---------------------------------------------------------------------------
# Parameters + forward orchestration (glue in plain JAX)
# ---------------------------------------------------------------------------
def init_decoder_params(key, num_stages, spatial_dims, video_dims, sent_dim):
    hidden = [1024 // 2 ** i for i in range(num_stages)]
    keys = iter(jax.random.split(key, 128))

    def nrm(shape, scale):
        return scale * jax.random.normal(next(keys), shape, jnp.float32)

    def linear(din, dout):
        return {'w': nrm((din, dout), 1.0 / math.sqrt(din)),
                'b': nrm((1, dout), 0.1)}

    def convgn(cin, cout):
        return {'w': nrm((9, cin, cout), 1.0 / math.sqrt(9 * cin)),  # (kh*3+kw, Cin, Cout)
                'b': nrm((1, cout), 0.05),
                'gamma': 1.0 + nrm((1, cout), 0.1),
                'beta': nrm((1, cout), 0.1)}

    p = {'hidden': hidden, 'lin_s': [], 'lin_v': [], 'trans_s': [], 'trans_v': [], 'up': []}
    for i in range(num_stages):
        p['lin_s'].append(linear(sent_dim, spatial_dims[i]))
        p['lin_v'].append(linear(sent_dim, video_dims[i]))
        p['trans_s'].append(convgn(spatial_dims[i], hidden[i]))
        p['trans_v'].append(convgn(video_dims[i], hidden[i]))
    for i in range(num_stages - 1):
        p['up'].append(convgn(hidden[i], hidden[i + 1]))
    p['predict'] = {'w': nrm((1, hidden[-1]), 1.0 / math.sqrt(hidden[-1])),
                    'b': nrm((1, 1), 0.05)}
    return p


def decoder_forward(params, spatial_feats_nhwc, video_feats_nhwc, sentence_feature):
    """Returns the prediction in NCHW: (B, 1, H_last, W_last)."""
    num_stages = len(spatial_feats_nhwc)
    decode = None
    dec_h = dec_w = None
    for i in range(num_stages):
        xs = spatial_feats_nhwc[i]
        xv = video_feats_nhwc[i]
        B, H, W, _ = xs.shape
        fusion = fusion_stage(sentence_feature,
                              params['lin_s'][i], params['lin_v'][i],
                              xs, xv,
                              params['trans_s'][i], params['trans_v'][i])   # (B, HW, hid_i)
        if decode is None:
            decode, dec_h, dec_w = fusion, H, W
        else:
            dec2 = conv3x3_gn_relu(decode, params['up'][i - 1], dec_h, dec_w)
            kbd = jnp.asarray(_upsample_kron_blockdiag(B, dec_h, dec_w))
            if i == num_stages - 1:
                pred = upsample_add_predict(dec2, fusion, kbd,
                                            params['predict']['w'], params['predict']['b'])
                return pred.reshape(B, 1, 2 * dec_h, 2 * dec_w)
            decode = upsample_add(dec2, fusion, kbd)
            dec_h, dec_w = 2 * dec_h, 2 * dec_w
    # single-stage model: predict directly from the fused feature
    pred = predict_flat(decode, params['predict']['w'], params['predict']['b'])
    return pred.reshape(decode.shape[0], 1, dec_h, dec_w)


# ---------------------------------------------------------------------------
# Pure-JAX f32 reference (for correctness check)
# ---------------------------------------------------------------------------
def ref_forward(params, spatial_feats, video_feats, sentence_feature):
    hi = lax.Precision.HIGHEST

    def lin_soft(x, w, b):
        return jax.nn.softmax(x @ w + b, axis=1)

    def cgr(x, attn, pp):
        if attn is not None:
            x = x * attn[:, None, None, :]
        cin, cout = pp['w'].shape[1], pp['w'].shape[2]
        wk = pp['w'].reshape(3, 3, cin, cout)
        y = lax.conv_general_dilated(x, wk, (1, 1), 'SAME',
                                     dimension_numbers=('NHWC', 'HWIO', 'NHWC'),
                                     precision=hi)
        y = y + pp['b'].reshape(1, 1, 1, cout)
        B, H, W, C = y.shape
        yg = y.reshape(B, H, W, GN_GROUPS, C // GN_GROUPS)
        mean = yg.mean(axis=(1, 2, 4), keepdims=True)
        var = yg.var(axis=(1, 2, 4), keepdims=True)
        yn = ((yg - mean) / jnp.sqrt(var + GN_EPS)).reshape(B, H, W, C)
        yn = yn * pp['gamma'].reshape(1, 1, 1, C) + pp['beta'].reshape(1, 1, 1, C)
        return jnp.maximum(yn, 0.0)

    decode = None
    for i in range(len(spatial_feats)):
        ls, lv = params['lin_s'][i], params['lin_v'][i]
        a_s = lin_soft(sentence_feature, ls['w'], ls['b'])
        a_v = lin_soft(sentence_feature, lv['w'], lv['b'])
        fusion = cgr(video_feats[i], a_v, params['trans_v'][i]) + \
                 cgr(spatial_feats[i], a_s, params['trans_s'][i])
        if decode is None:
            decode = fusion
        else:
            decode = cgr(decode, None, params['up'][i - 1])
            _, H, W, _ = decode.shape
            ih = jnp.asarray(_interp_matrix(H))
            iw = jnp.asarray(_interp_matrix(W))
            decode = jnp.einsum('oh,bhwc,pw->bopc', ih, decode, iw, precision=hi) + fusion
    pr = params['predict']
    pred = jnp.einsum('bhwc,c->bhw', decode, pr['w'][0], precision=hi) + pr['b'][0, 0]
    return pred[:, None, :, :]                                        # NCHW (B,1,H,W)


if __name__ == "__main__":
    num_stages = 2
    B = 2
    sent_dim = 32
    spatial_dims = [16, 32]
    video_dims = [16, 32]
    base_hw = 4   # stage 0 is 4x4, stage 1 is 8x8 (spatial doubles each stage)

    key = jax.random.PRNGKey(0)
    k_par, k_s0, k_s1, k_v0, k_v1, k_sent = jax.random.split(key, 6)
    params = init_decoder_params(k_par, num_stages, spatial_dims, video_dims, sent_dim)

    # Inputs in PyTorch's NCHW convention, converted to NHWC for the kernels.
    spatial_nchw = [
        jax.random.normal(k_s0, (B, spatial_dims[0], base_hw, base_hw), jnp.float32),
        jax.random.normal(k_s1, (B, spatial_dims[1], 2 * base_hw, 2 * base_hw), jnp.float32),
    ]
    video_nchw = [
        jax.random.normal(k_v0, (B, video_dims[0], base_hw, base_hw), jnp.float32),
        jax.random.normal(k_v1, (B, video_dims[1], 2 * base_hw, 2 * base_hw), jnp.float32),
    ]
    sentence = jax.random.normal(k_sent, (B, sent_dim), jnp.float32)

    spatial_nhwc = [jnp.transpose(x, (0, 2, 3, 1)) for x in spatial_nchw]
    video_nhwc = [jnp.transpose(x, (0, 2, 3, 1)) for x in video_nchw]

    out_nchw = jax.block_until_ready(
        decoder_forward(params, spatial_nhwc, video_nhwc, sentence))   # (B, 1, 8, 8)

    ref_nchw = ref_forward(params, spatial_nhwc, video_nhwc, sentence)
    # Conv matmuls use bf16 MXU operands with f32 accumulation (per perf review);
    # atol widened 2e-2 -> 3e-2 to cover bf16 rounding through 2-3 stacked convs.
    np.testing.assert_allclose(np.asarray(out_nchw), np.asarray(ref_nchw),
                               rtol=2e-2, atol=3e-2)
    print("KERNEL_OK")
</pallas_src>

<mosaic_0001>
module attributes {stable_mosaic.version = 11 : i64} {
  func.func @_fusion_stage_kernel(%arg0: i32, %arg1: memref<2x32xf32, #tpu.memory_space<vmem>>, %arg2: memref<32x16xf32, #tpu.memory_space<vmem>>, %arg3: memref<1x16xf32, #tpu.memory_space<vmem>>, %arg4: memref<32x16xf32, #tpu.memory_space<vmem>>, %arg5: memref<1x16xf32, #tpu.memory_space<vmem>>, %arg6: memref<2x6x6x16xf32, #tpu.memory_space<vmem>>, %arg7: memref<2x6x6x16xf32, #tpu.memory_space<vmem>>, %arg8: memref<144x256xbf16, #tpu.memory_space<vmem>>, %arg9: memref<1x256xf32, #tpu.memory_space<vmem>>, %arg10: memref<1x256xf32, #tpu.memory_space<vmem>>, %arg11: memref<1x256xf32, #tpu.memory_space<vmem>>, %arg12: memref<144x256xbf16, #tpu.memory_space<vmem>>, %arg13: memref<1x256xf32, #tpu.memory_space<vmem>>, %arg14: memref<1x256xf32, #tpu.memory_space<vmem>>, %arg15: memref<1x256xf32, #tpu.memory_space<vmem>>, %arg16: memref<256x8xf32, #tpu.memory_space<vmem>>, %arg17: memref<8x256xf32, #tpu.memory_space<vmem>>, %arg18: memref<2x16x256xf32, #tpu.memory_space<vmem>>) attributes {dimension_semantics = [#tpu.dimension_semantics<parallel>], iteration_bounds = array<i64: 4>, scalar_prefetch = 0 : i64, scratch_operands = 0 : i64, tpu.core_type = #tpu.core_type<tc>, window_params = [{pipeline_mode = #tpu.pipeline_mode<synchronous>, transform_indices = @transform_0, window_bounds = array<i64: 2, 32>}, {pipeline_mode = #tpu.pipeline_mode<synchronous>, transform_indices = @transform_1, window_bounds = array<i64: 32, 16>}, {pipeline_mode = #tpu.pipeline_mode<synchronous>, transform_indices = @transform_2, window_bounds = array<i64: 1, 16>}, {pipeline_mode = #tpu.pipeline_mode<synchronous>, transform_indices = @transform_3, window_bounds = array<i64: 32, 16>}, {pipeline_mode = #tpu.pipeline_mode<synchronous>, transform_indices = @transform_4, window_bounds = array<i64: 1, 16>}, {pipeline_mode = #tpu.pipeline_mode<synchronous>, transform_indices = @transform_5, window_bounds = array<i64: 2, 6, 6, 16>}, {pipeline_mode = #tpu.pipeline_mode<synchronous>, transform_indices = @transform_6, window_bounds = array<i64: 2, 6, 6, 16>}, {transform_indices = @transform_7, window_bounds = array<i64: 144, 256>}, {transform_indices = @transform_8, window_bounds = array<i64: 1, 256>}, {transform_indices = @transform_9, window_bounds = array<i64: 1, 256>}, {transform_indices = @transform_10, window_bounds = array<i64: 1, 256>}, {transform_indices = @transform_11, window_bounds = array<i64: 144, 256>}, {transform_indices = @transform_12, window_bounds = array<i64: 1, 256>}, {transform_indices = @transform_13, window_bounds = array<i64: 1, 256>}, {transform_indices = @transform_14, window_bounds = array<i64: 1, 256>}, {pipeline_mode = #tpu.pipeline_mode<synchronous>, transform_indices = @transform_15, window_bounds = array<i64: 256, 8>}, {pipeline_mode = #tpu.pipeline_mode<synchronous>, transform_indices = @transform_16, window_bounds = array<i64: 8, 256>}, {transform_indices = @transform_17, window_bounds = array<i64: 2, 16, 256>}]} {
    %c0 = arith.constant 0 : index
    %c0_0 = arith.constant 0 : index
    %0 = vector.load %arg1[%c0, %c0_0] : memref<2x32xf32, #tpu.memory_space<vmem>>, vector<2x32xf32>
    %c0_1 = arith.constant 0 : index
    %c0_2 = arith.constant 0 : index
    %1 = vector.load %arg16[%c0_1, %c0_2] : memref<256x8xf32, #tpu.memory_space<vmem>>, vector<256x8xf32>
    %c0_3 = arith.constant 0 : index
    %c0_4 = arith.constant 0 : index
    %2 = vector.load %arg17[%c0_3, %c0_4] : memref<8x256xf32, #tpu.memory_space<vmem>>, vector<8x256xf32>
    %c0_5 = arith.constant 0 : index
    %c0_6 = arith.constant 0 : index
    %3 = vector.load %arg2[%c0_5, %c0_6] : memref<32x16xf32, #tpu.memory_space<vmem>>, vector<32x16xf32>
    %cst = arith.constant dense<0.000000e+00> : vector<2x16xf32>
    %4 = tpu.matmul %0, %3, %cst {dimension_numbers = #tpu.dot_dimension_numbers<[1], [0], [0], [1], [0, 0, 1, 1], [], []>} : vector<2x32xf32>, vector<32x16xf32>, vector<2x16xf32> -> vector<2x16xf32>
    %c0_7 = arith.constant 0 : index
    %c0_8 = arith.constant 0 : index
    %5 = vector.load %arg3[%c0_7, %c0_8] : memref<1x16xf32, #tpu.memory_space<vmem>>, vector<1x16xf32>
    %6 = vector.broadcast %5 : vector<1x16xf32> to vector<2x16xf32>
    %7 = arith.addf %4, %6 : vector<2x16xf32>
    %cst_9 = arith.constant dense<0xFF800000> : vector<2xf32>
    %8 = vector.multi_reduction <maximumf>, %7, %cst_9 [1] : vector<2x16xf32> to vector<2xf32>
    %9 = vector.shape_cast %8 : vector<2xf32> to vector<2x1xf32>
    %10 = vector.broadcast %9 : vector<2x1xf32> to vector<2x16xf32>
    %11 = arith.subf %7, %10 : vector<2x16xf32>
    %12 = math.exp %11 : vector<2x16xf32>
    %cst_10 = arith.constant dense<0.000000e+00> : vector<2xf32>
    %13 = vector.multi_reduction <add>, %12, %cst_10 [1] : vector<2x16xf32> to vector<2xf32>
    %14 = vector.shape_cast %13 : vector<2xf32> to vector<2x1xf32>
    %15 = vector.broadcast %14 : vector<2x1xf32> to vector<2x16xf32>
    %16 = arith.divf %12, %15 : vector<2x16xf32>
    %c0_11 = arith.constant 0 : index
    %c0_12 = arith.constant 0 : index
    %c0_13 = arith.constant 0 : index
    %c0_14 = arith.constant 0 : index
    %17 = vector.load %arg6[%c0_11, %c0_12, %c0_13, %c0_14] : memref<2x6x6x16xf32, #tpu.memory_space<vmem>>, vector<2x6x6x16xf32>
    %18 = vector.shape_cast %16 : vector<2x16xf32> to vector<2x1x1x16xf32>
    %19 = vector.broadcast %18 : vector<2x1x1x16xf32> to vector<2x6x6x16xf32>
    %20 = arith.mulf %17, %19 : vector<2x6x6x16xf32>
    %c0_15 = arith.constant 0 : index
    %c0_16 = arith.constant 0 : index
    %21 = vector.load %arg8[%c0_15, %c0_16] : memref<144x256xbf16, #tpu.memory_space<vmem>>, vector<144x256xbf16>
    %c0_17 = arith.constant 0 : index
    %c0_18 = arith.constant 0 : index
    %22 = vector.load %arg9[%c0_17, %c0_18] : memref<1x256xf32, #tpu.memory_space<vmem>>, vector<1x256xf32>
    %23 = vector.extract_strided_slice %20 {offsets = [0, 0, 0, 0], sizes = [2, 4, 4, 16], strides = [1, 1, 1, 1]} : vector<2x6x6x16xf32> to vector<2x4x4x16xf32>
    %24 = vector.shape_cast %23 : vector<2x4x4x16xf32> to vector<32x16xf32>
    %25 = vector.extract_strided_slice %20 {offsets = [0, 0, 1, 0], sizes = [2, 4, 4, 16], strides = [1, 1, 1, 1]} : vector<2x6x6x16xf32> to vector<2x4x4x16xf32>
    %26 = vector.shape_cast %25 : vector<2x4x4x16xf32> to vector<32x16xf32>
    %27 = vector.extract_strided_slice %20 {offsets = [0, 0, 2, 0], sizes = [2, 4, 4, 16], strides = [1, 1, 1, 1]} : vector<2x6x6x16xf32> to vector<2x4x4x16xf32>
    %28 = vector.shape_cast %27 : vector<2x4x4x16xf32> to vector<32x16xf32>
    %29 = vector.extract_strided_slice %20 {offsets = [0, 1, 0, 0], sizes = [2, 4, 4, 16], strides = [1, 1, 1, 1]} : vector<2x6x6x16xf32> to vector<2x4x4x16xf32>
    %30 = vector.shape_cast %29 : vector<2x4x4x16xf32> to vector<32x16xf32>
    %31 = vector.extract_strided_slice %20 {offsets = [0, 1, 1, 0], sizes = [2, 4, 4, 16], strides = [1, 1, 1, 1]} : vector<2x6x6x16xf32> to vector<2x4x4x16xf32>
    %32 = vector.shape_cast %31 : vector<2x4x4x16xf32> to vector<32x16xf32>
    %33 = vector.extract_strided_slice %20 {offsets = [0, 1, 2, 0], sizes = [2, 4, 4, 16], strides = [1, 1, 1, 1]} : vector<2x6x6x16xf32> to vector<2x4x4x16xf32>
    %34 = vector.shape_cast %33 : vector<2x4x4x16xf32> to vector<32x16xf32>
    %35 = vector.extract_strided_slice %20 {offsets = [0, 2, 0, 0], sizes = [2, 4, 4, 16], strides = [1, 1, 1, 1]} : vector<2x6x6x16xf32> to vector<2x4x4x16xf32>
    %36 = vector.shape_cast %35 : vector<2x4x4x16xf32> to vector<32x16xf32>
    %37 = vector.extract_strided_slice %20 {offsets = [0, 2, 1, 0], sizes = [2, 4, 4, 16], strides = [1, 1, 1, 1]} : vector<2x6x6x16xf32> to vector<2x4x4x16xf32>
    %38 = vector.shape_cast %37 : vector<2x4x4x16xf32> to vector<32x16xf32>
    %39 = vector.extract_strided_slice %20 {offsets = [0, 2, 2, 0], sizes = [2, 4, 4, 16], strides = [1, 1, 1, 1]} : vector<2x6x6x16xf32> to vector<2x4x4x16xf32>
    %40 = vector.shape_cast %39 : vector<2x4x4x16xf32> to vector<32x16xf32>
    %41 = tpu.concatenate %24, %26, %28, %30, %32, %34, %36, %38, %40 in 1 : vector<32x16xf32>, vector<32x16xf32>, vector<32x16xf32>, vector<32x16xf32>, vector<32x16xf32>, vector<32x16xf32>, vector<32x16xf32>, vector<32x16xf32>, vector<32x16xf32> -> vector<32x144xf32>
    %42 = arith.truncf %41 : vector<32x144xf32> to vector<32x144xbf16>
    %cst_19 = arith.constant dense<0.000000e+00> : vector<32x256xf32>
    %43 = tpu.matmul %42, %21, %cst_19 {dimension_numbers = #tpu.dot_dimension_numbers<[1], [0], [0], [1], [0, 0, 1, 1], [], []>} : vector<32x144xbf16>, vector<144x256xbf16>, vector<32x256xf32> -> vector<32x256xf32>
    %44 = vector.broadcast %22 : vector<1x256xf32> to vector<32x256xf32>
    %45 = arith.addf %43, %44 : vector<32x256xf32>
    %c0_20 = arith.constant 0 : index
    %c0_21 = arith.constant 0 : index
    %46 = vector.load %arg10[%c0_20, %c0_21] : memref<1x256xf32, #tpu.memory_space<vmem>>, vector<1x256xf32>
    %c0_22 = arith.constant 0 : index
    %c0_23 = arith.constant 0 : index
    %47 = vector.load %arg11[%c0_22, %c0_23] : memref<1x256xf32, #tpu.memory_space<vmem>>, vector<1x256xf32>
    %48 = vector.shape_cast %45 : vector<32x256xf32> to vector<2x16x256xf32>
    %cst_24 = arith.constant dense<0.000000e+00> : vector<2x256xf32>
    %49 = vector.multi_reduction <add>, %48, %cst_24 [1] : vector<2x16x256xf32> to vector<2x256xf32>
    %cst_25 = arith.constant dense<0.000000e+00> : vector<2x8xf32>
    %50 = tpu.matmul %49, %1, %cst_25 {dimension_numbers = #tpu.dot_dimension_numbers<[1], [0], [0], [1], [0, 0, 1, 1], [], []>} : vector<2x256xf32>, vector<256x8xf32>, vector<2x8xf32> -> vector<2x8xf32>
    %cst_26 = arith.constant 5.120000e+02 : f32
    %51 = vector.broadcast %cst_26 : f32 to vector<2x8xf32>
    %52 = arith.divf %50, %51 : vector<2x8xf32>
    %cst_27 = arith.constant dense<0.000000e+00> : vector<2x256xf32>
    %53 = tpu.matmul %52, %2, %cst_27 {dimension_numbers = #tpu.dot_dimension_numbers<[1], [0], [0], [1], [0, 0, 1, 1], [], []>} : vector<2x8xf32>, vector<8x256xf32>, vector<2x256xf32> -> vector<2x256xf32>
    %54 = vector.shape_cast %53 : vector<2x256xf32> to vector<2x1x256xf32>
    %55 = vector.broadcast %54 : vector<2x1x256xf32> to vector<2x16x256xf32>
    %56 = arith.subf %48, %55 : vector<2x16x256xf32>
    %57 = arith.mulf %56, %56 : vector<2x16x256xf32>
    %cst_28 = arith.constant dense<0.000000e+00> : vector<2x256xf32>
    %58 = vector.multi_reduction <add>, %57, %cst_28 [1] : vector<2x16x256xf32> to vector<2x256xf32>
    %cst_29 = arith.constant dense<0.000000e+00> : vector<2x8xf32>
    %59 = tpu.matmul %58, %1, %cst_29 {dimension_numbers = #tpu.dot_dimension_numbers<[1], [0], [0], [1], [0, 0, 1, 1], [], []>} : vector<2x256xf32>, vector<256x8xf32>, vector<2x8xf32> -> vector<2x8xf32>
    %cst_30 = arith.constant 5.120000e+02 : f32
    %60 = vector.broadcast %cst_30 : f32 to vector<2x8xf32>
    %61 = arith.divf %59, %60 : vector<2x8xf32>
    %cst_31 = arith.constant 9.99999974E-6 : f32
    %62 = vector.broadcast %cst_31 : f32 to vector<2x8xf32>
    %63 = arith.addf %61, %62 : vector<2x8xf32>
    %64 = math.rsqrt %63 : vector<2x8xf32>
    %cst_32 = arith.constant dense<0.000000e+00> : vector<2x256xf32>
    %65 = tpu.matmul %64, %2, %cst_32 {dimension_numbers = #tpu.dot_dimension_numbers<[1], [0], [0], [1], [0, 0, 1, 1], [], []>} : vector<2x8xf32>, vector<8x256xf32>, vector<2x256xf32> -> vector<2x256xf32>
    %66 = vector.shape_cast %65 : vector<2x256xf32> to vector<2x1x256xf32>
    %67 = vector.broadcast %66 : vector<2x1x256xf32> to vector<2x16x256xf32>
    %68 = arith.mulf %56, %67 : vector<2x16x256xf32>
    %69 = vector.shape_cast %46 : vector<1x256xf32> to vector<1x1x256xf32>
    %70 = vector.broadcast %69 : vector<1x1x256xf32> to vector<2x16x256xf32>
    %71 = arith.mulf %68, %70 : vector<2x16x256xf32>
    %72 = vector.shape_cast %47 : vector<1x256xf32> to vector<1x1x256xf32>
    %73 = vector.broadcast %72 : vector<1x1x256xf32> to vector<2x16x256xf32>
    %74 = arith.addf %71, %73 : vector<2x16x256xf32>
    %cst_33 = arith.constant 0.000000e+00 : f32
    %75 = vector.broadcast %cst_33 : f32 to vector<2x16x256xf32>
    %76 = arith.maximumf %74, %75 : vector<2x16x256xf32>
    %c0_34 = arith.constant 0 : index
    %c0_35 = arith.constant 0 : index
    %77 = vector.load %arg4[%c0_34, %c0_35] : memref<32x16xf32, #tpu.memory_space<vmem>>, vector<32x16xf32>
    %cst_36 = arith.constant dense<0.000000e+00> : vector<2x16xf32>
    %78 = tpu.matmul %0, %77, %cst_36 {dimension_numbers = #tpu.dot_dimension_numbers<[1], [0], [0], [1], [0, 0, 1, 1], [], []>} : vector<2x32xf32>, vector<32x16xf32>, vector<2x16xf32> -> vector<2x16xf32>
    %c0_37 = arith.constant 0 : index
    %c0_38 = arith.constant 0 : index
    %79 = vector.load %arg5[%c0_37, %c0_38] : memref<1x16xf32, #tpu.memory_space<vmem>>, vector<1x16xf32>
    %80 = vector.broadcast %79 : vector<1x16xf32> to vector<2x16xf32>
    %81 = arith.addf %78, %80 : vector<2x16xf32>
    %cst_39 = arith.constant dense<0xFF800000> : vector<2xf32>
    %82 = vector.multi_reduction <maximumf>, %81, %cst_39 [1] : vector<2x16xf32> to vector<2xf32>
    %83 = vector.shape_cast %82 : vector<2xf32> to vector<2x1xf32>
    %84 = vector.broadcast %83 : vector<2x1xf32> to vector<2x16xf32>
    %85 = arith.subf %81, %84 : vector<2x16xf32>
    %86 = math.exp %85 : vector<2x16xf32>
    %cst_40 = arith.constant dense<0.000000e+00> : vector<2xf32>
    %87 = vector.multi_reduction <add>, %86, %cst_40 [1] : vector<2x16xf32> to vector<2xf32>
    %88 = vector.shape_cast %87 : vector<2xf32> to vector<2x1xf32>
    %89 = vector.broadcast %88 : vector<2x1xf32> to vector<2x16xf32>
    %90 = arith.divf %86, %89 : vector<2x16xf32>
    %c0_41 = arith.constant 0 : index
    %c0_42 = arith.constant 0 : index
    %c0_43 = arith.constant 0 : index
    %c0_44 = arith.constant 0 : index
    %91 = vector.load %arg7[%c0_41, %c0_42, %c0_43, %c0_44] : memref<2x6x6x16xf32, #tpu.memory_space<vmem>>, vector<2x6x6x16xf32>
    %92 = vector.shape_cast %90 : vector<2x16xf32> to vector<2x1x1x16xf32>
    %93 = vector.broadcast %92 : vector<2x1x1x16xf32> to vector<2x6x6x16xf32>
    %94 = arith.mulf %91, %93 : vector<2x6x6x16xf32>
    %c0_45 = arith.constant 0 : index
    %c0_46 = arith.constant 0 : index
    %95 = vector.load %arg12[%c0_45, %c0_46] : memref<144x256xbf16, #tpu.memory_space<vmem>>, vector<144x256xbf16>
    %c0_47 = arith.constant 0 : index
    %c0_48 = arith.constant 0 : index
    %96 = vector.load %arg13[%c0_47, %c0_48] : memref<1x256xf32, #tpu.memory_space<vmem>>, vector<1x256xf32>
    %97 = vector.extract_strided_slice %94 {offsets = [0, 0, 0, 0], sizes = [2, 4, 4, 16], strides = [1, 1, 1, 1]} : vector<2x6x6x16xf32> to vector<2x4x4x16xf32>
    %98 = vector.shape_cast %97 : vector<2x4x4x16xf32> to vector<32x16xf32>
    %99 = vector.extract_strided_slice %94 {offsets = [0, 0, 1, 0], sizes = [2, 4, 4, 16], strides = [1, 1, 1, 1]} : vector<2x6x6x16xf32> to vector<2x4x4x16xf32>
    %100 = vector.shape_cast %99 : vector<2x4x4x16xf32> to vector<32x16xf32>
    %101 = vector.extract_strided_slice %94 {offsets = [0, 0, 2, 0], sizes = [2, 4, 4, 16], strides = [1, 1, 1, 1]} : vector<2x6x6x16xf32> to vector<2x4x4x16xf32>
    %102 = vector.shape_cast %101 : vector<2x4x4x16xf32> to vector<32x16xf32>
    %103 = vector.extract_strided_slice %94 {offsets = [0, 1, 0, 0], sizes = [2, 4, 4, 16], strides = [1, 1, 1, 1]} : vector<2x6x6x16xf32> to vector<2x4x4x16xf32>
    %104 = vector.shape_cast %103 : vector<2x4x4x16xf32> to vector<32x16xf32>
    %105 = vector.extract_strided_slice %94 {offsets = [0, 1, 1, 0], sizes = [2, 4, 4, 16], strides = [1, 1, 1, 1]} : vector<2x6x6x16xf32> to vector<2x4x4x16xf32>
    %106 = vector.shape_cast %105 : vector<2x4x4x16xf32> to vector<32x16xf32>
    %107 = vector.extract_strided_slice %94 {offsets = [0, 1, 2, 0], sizes = [2, 4, 4, 16], strides = [1, 1, 1, 1]} : vector<2x6x6x16xf32> to vector<2x4x4x16xf32>
    %108 = vector.shape_cast %107 : vector<2x4x4x16xf32> to vector<32x16xf32>
    %109 = vector.extract_strided_slice %94 {offsets = [0, 2, 0, 0], sizes = [2, 4, 4, 16], strides = [1, 1, 1, 1]} : vector<2x6x6x16xf32> to vector<2x4x4x16xf32>
    %110 = vector.shape_cast %109 : vector<2x4x4x16xf32> to vector<32x16xf32>
    %111 = vector.extract_strided_slice %94 {offsets = [0, 2, 1, 0], sizes = [2, 4, 4, 16], strides = [1, 1, 1, 1]} : vector<2x6x6x16xf32> to vector<2x4x4x16xf32>
    %112 = vector.shape_cast %111 : vector<2x4x4x16xf32> to vector<32x16xf32>
    %113 = vector.extract_strided_slice %94 {offsets = [0, 2, 2, 0], sizes = [2, 4, 4, 16], strides = [1, 1, 1, 1]} : vector<2x6x6x16xf32> to vector<2x4x4x16xf32>
    %114 = vector.shape_cast %113 : vector<2x4x4x16xf32> to vector<32x16xf32>
    %115 = tpu.concatenate %98, %100, %102, %104, %106, %108, %110, %112, %114 in 1 : vector<32x16xf32>, vector<32x16xf32>, vector<32x16xf32>, vector<32x16xf32>, vector<32x16xf32>, vector<32x16xf32>, vector<32x16xf32>, vector<32x16xf32>, vector<32x16xf32> -> vector<32x144xf32>
    %116 = arith.truncf %115 : vector<32x144xf32> to vector<32x144xbf16>
    %cst_49 = arith.constant dense<0.000000e+00> : vector<32x256xf32>
    %117 = tpu.matmul %116, %95, %cst_49 {dimension_numbers = #tpu.dot_dimension_numbers<[1], [0], [0], [1], [0, 0, 1, 1], [], []>} : vector<32x144xbf16>, vector<144x256xbf16>, vector<32x256xf32> -> vector<32x256xf32>
    %118 = vector.broadcast %96 : vector<1x256xf32> to vector<32x256xf32>
    %119 = arith.addf %117, %118 : vector<32x256xf32>
    %c0_50 = arith.constant 0 : index
    %c0_51 = arith.constant 0 : index
    %120 = vector.load %arg14[%c0_50, %c0_51] : memref<1x256xf32, #tpu.memory_space<vmem>>, vector<1x256xf32>
    %c0_52 = arith.constant 0 : index
    %c0_53 = arith.constant 0 : index
    %121 = vector.load %arg15[%c0_52, %c0_53] : memref<1x256xf32, #tpu.memory_space<vmem>>, vector<1x256xf32>
    %122 = vector.shape_cast %119 : vector<32x256xf32> to vector<2x16x256xf32>
    %cst_54 = arith.constant dense<0.000000e+00> : vector<2x256xf32>
    %123 = vector.multi_reduction <add>, %122, %cst_54 [1] : vector<2x16x256xf32> to vector<2x256xf32>
    %cst_55 = arith.constant dense<0.000000e+00> : vector<2x8xf32>
    %124 = tpu.matmul %123, %1, %cst_55 {dimension_numbers = #tpu.dot_dimension_numbers<[1], [0], [0], [1], [0, 0, 1, 1], [], []>} : vector<2x256xf32>, vector<256x8xf32>, vector<2x8xf32> -> vector<2x8xf32>
    %cst_56 = arith.constant 5.120000e+02 : f32
    %125 = vector.broadcast %cst_56 : f32 to vector<2x8xf32>
    %126 = arith.divf %124, %125 : vector<2x8xf32>
    %cst_57 = arith.constant dense<0.000000e+00> : vector<2x256xf32>
    %127 = tpu.matmul %126, %2, %cst_57 {dimension_numbers = #tpu.dot_dimension_numbers<[1], [0], [0], [1], [0, 0, 1, 1], [], []>} : vector<2x8xf32>, vector<8x256xf32>, vector<2x256xf32> -> vector<2x256xf32>
    %128 = vector.shape_cast %127 : vector<2x256xf32> to vector<2x1x256xf32>
    %129 = vector.broadcast %128 : vector<2x1x256xf32> to vector<2x16x256xf32>
    %130 = arith.subf %122, %129 : vector<2x16x256xf32>
    %131 = arith.mulf %130, %130 : vector<2x16x256xf32>
    %cst_58 = arith.constant dense<0.000000e+00> : vector<2x256xf32>
    %132 = vector.multi_reduction <add>, %131, %cst_58 [1] : vector<2x16x256xf32> to vector<2x256xf32>
    %cst_59 = arith.constant dense<0.000000e+00> : vector<2x8xf32>
    %133 = tpu.matmul %132, %1, %cst_59 {dimension_numbers = #tpu.dot_dimension_numbers<[1], [0], [0], [1], [0, 0, 1, 1], [], []>} : vector<2x256xf32>, vector<256x8xf32>, vector<2x8xf32> -> vector<2x8xf32>
    %cst_60 = arith.constant 5.120000e+02 : f32
    %134 = vector.broadcast %cst_60 : f32 to vector<2x8xf32>
    %135 = arith.divf %133, %134 : vector<2x8xf32>
    %cst_61 = arith.constant 9.99999974E-6 : f32
    %136 = vector.broadcast %cst_61 : f32 to vector<2x8xf32>
    %137 = arith.addf %135, %136 : vector<2x8xf32>
    %138 = math.rsqrt %137 : vector<2x8xf32>
    %cst_62 = arith.constant dense<0.000000e+00> : vector<2x256xf32>
    %139 = tpu.matmul %138, %2, %cst_62 {dimension_numbers = #tpu.dot_dimension_numbers<[1], [0], [0], [1], [0, 0, 1, 1], [], []>} : vector<2x8xf32>, vector<8x256xf32>, vector<2x256xf32> -> vector<2x256xf32>
    %140 = vector.shape_cast %139 : vector<2x256xf32> to vector<2x1x256xf32>
    %141 = vector.broadcast %140 : vector<2x1x256xf32> to vector<2x16x256xf32>
    %142 = arith.mulf %130, %141 : vector<2x16x256xf32>
    %143 = vector.shape_cast %120 : vector<1x256xf32> to vector<1x1x256xf32>
    %144 = vector.broadcast %143 : vector<1x1x256xf32> to vector<2x16x256xf32>
    %145 = arith.mulf %142, %144 : vector<2x16x256xf32>
    %146 = vector.shape_cast %121 : vector<1x256xf32> to vector<1x1x256xf32>
    %147 = vector.broadcast %146 : vector<1x1x256xf32> to vector<2x16x256xf32>
    %148 = arith.addf %145, %147 : vector<2x16x256xf32>
    %cst_63 = arith.constant 0.000000e+00 : f32
    %149 = vector.broadcast %cst_63 : f32 to vector<2x16x256xf32>
    %150 = arith.maximumf %148, %149 : vector<2x16x256xf32>
    %151 = arith.addf %76, %150 : vector<2x16x256xf32>
    %c0_64 = arith.constant 0 : index
    %c0_65 = arith.constant 0 : index
    %c0_66 = arith.constant 0 : index
    %152 = vector.load %arg18[%c0_64, %c0_65, %c0_66] : memref<2x16x256xf32, #tpu.memory_space<vmem>>, vector<2x16x256xf32>
    tpu.vector_store %arg18[%c0_64, %c0_65, %c0_66], %151 {strides = array<i32>} : memref<2x16x256xf32, #tpu.memory_space<vmem>>, vector<2x16x256xf32>,
    return
  }
  func.func @transform_0(%arg0: i32) -> (i32, i32) {
    %c0_i32 = arith.constant 0 : i32
    %c0_i32_0 = arith.constant 0 : i32
    %c0_i32_1 = arith.constant 0 : i32
    return %c0_i32, %c0_i32_0 : i32, i32
  }
  func.func @transform_1(%arg0: i32) -> (i32, i32) {
    %c0_i32 = arith.constant 0 : i32
    %c0_i32_0 = arith.constant 0 : i32
    %c0_i32_1 = arith.constant 0 : i32
    return %c0_i32, %c0_i32_0 : i32, i32
  }
  func.func @transform_2(%arg0: i32) -> (i32, i32) {
    %c0_i32 = arith.constant 0 : i32
    %c0_i32_0 = arith.constant 0 : i32
    %c0_i32_1 = arith.constant 0 : i32
    return %c0_i32, %c0_i32_0 : i32, i32
  }
  func.func @transform_3(%arg0: i32) -> (i32, i32) {
    %c0_i32 = arith.constant 0 : i32
    %c0_i32_0 = arith.constant 0 : i32
    %c0_i32_1 = arith.constant 0 : i32
    return %c0_i32, %c0_i32_0 : i32, i32
  }
  func.func @transform_4(%arg0: i32) -> (i32, i32) {
    %c0_i32 = arith.constant 0 : i32
    %c0_i32_0 = arith.constant 0 : i32
    %c0_i32_1 = arith.constant 0 : i32
    return %c0_i32, %c0_i32_0 : i32, i32
  }
  func.func @transform_5(%arg0: i32) -> (i32, i32, i32, i32) {
    %c0_i32 = arith.constant 0 : i32
    %c0_i32_0 = arith.constant 0 : i32
    %c0_i32_1 = arith.constant 0 : i32
    %c0_i32_2 = arith.constant 0 : i32
    %c0_i32_3 = arith.constant 0 : i32
    return %c0_i32, %c0_i32_0, %c0_i32_1, %c0_i32_2 : i32, i32, i32, i32
  }
  func.func @transform_6(%arg0: i32) -> (i32, i32, i32, i32) {
    %c0_i32 = arith.constant 0 : i32
    %c0_i32_0 = arith.constant 0 : i32
    %c0_i32_1 = arith.constant 0 : i32
    %c0_i32_2 = arith.constant 0 : i32
    %c0_i32_3 = arith.constant 0 : i32
    return %c0_i32, %c0_i32_0, %c0_i32_1, %c0_i32_2 : i32, i32, i32, i32
  }
  func.func @transform_7(%arg0: i32) -> (i32, i32) {
    %c0_i32 = arith.constant 0 : i32
    %c0_i32_0 = arith.constant 0 : i32
    return %c0_i32, %arg0 : i32, i32
  }
  func.func @transform_8(%arg0: i32) -> (i32, i32) {
    %c0_i32 = arith.constant 0 : i32
    %c0_i32_0 = arith.constant 0 : i32
    return %c0_i32, %arg0 : i32, i32
  }
  func.func @transform_9(%arg0: i32) -> (i32, i32) {
    %c0_i32 = arith.constant 0 : i32
    %c0_i32_0 = arith.constant 0 : i32
    return %c0_i32, %arg0 : i32, i32
  }
  func.func @transform_10(%arg0: i32) -> (i32, i32) {
    %c0_i32 = arith.constant 0 : i32
    %c0_i32_0 = arith.constant 0 : i32
    return %c0_i32, %arg0 : i32, i32
  }
  func.func @transform_11(%arg0: i32) -> (i32, i32) {
    %c0_i32 = arith.constant 0 : i32
    %c0_i32_0 = arith.constant 0 : i32
    return %c0_i32, %arg0 : i32, i32
  }
  func.func @transform_12(%arg0: i32) -> (i32, i32) {
    %c0_i32 = arith.constant 0 : i32
    %c0_i32_0 = arith.constant 0 : i32
    return %c0_i32, %arg0 : i32, i32
  }
  func.func @transform_13(%arg0: i32) -> (i32, i32) {
    %c0_i32 = arith.constant 0 : i32
    %c0_i32_0 = arith.constant 0 : i32
    return %c0_i32, %arg0 : i32, i32
  }
  func.func @transform_14(%arg0: i32) -> (i32, i32) {
    %c0_i32 = arith.constant 0 : i32
    %c0_i32_0 = arith.constant 0 : i32
    return %c0_i32, %arg0 : i32, i32
  }
  func.func @transform_15(%arg0: i32) -> (i32, i32) {
    %c0_i32 = arith.constant 0 : i32
    %c0_i32_0 = arith.constant 0 : i32
    %c0_i32_1 = arith.constant 0 : i32
    return %c0_i32, %c0_i32_0 : i32, i32
  }
  func.func @transform_16(%arg0: i32) -> (i32, i32) {
    %c0_i32 = arith.constant 0 : i32
    %c0_i32_0 = arith.constant 0 : i32
    %c0_i32_1 = arith.constant 0 : i32
    return %c0_i32, %c0_i32_0 : i32, i32
  }
  func.func @transform_17(%arg0: i32) -> (i32, i32, i32) {
    %c0_i32 = arith.constant 0 : i32
    %c0_i32_0 = arith.constant 0 : i32
    %c0_i32_1 = arith.constant 0 : i32
    return %c0_i32, %c0_i32_0, %arg0 : i32, i32, i32
  }
}

</mosaic_0001>

<llo_original>
// kernel: tpu_custom_call.1
$region0: #{tpu_custom_call.1}
  #allocation0 [shape = 'u32[]', space=smem, size = 0x4, offset = 0x4, fixed_abs, tag = 'smem constant byte address 0x4 - core index']
  #allocation1 [shape = 'u32[72,128]{1,0:T(1,128)}', space=vmem, size = 0x9000, scoped, tag = 'internal scratch']
  %s0 = inlined_call_operand.vmem [shape: f32[2,32], index: 0, kind: input, shape index: {}]
  %s1 = inlined_call_operand.vmem [shape: f32[32,16], index: 1, kind: input, shape index: {}]
  %s2 = inlined_call_operand.vmem [shape: f32[1,16], index: 2, kind: input, shape index: {}]
  %s3 = inlined_call_operand.vmem [shape: f32[32,16], index: 3, kind: input, shape index: {}]
  %s4 = inlined_call_operand.vmem [shape: f32[1,16], index: 4, kind: input, shape index: {}]
  %s5 = inlined_call_operand.vmem [shape: f32[2,6,6,16], index: 5, kind: input, shape index: {}]
  %s6 = inlined_call_operand.vmem [shape: f32[2,6,6,16], index: 6, kind: input, shape index: {}]
  %s7 = inlined_call_operand.hbm [shape: bf16[144,1024], index: 7, kind: input, shape index: {}]
  %s8 = inlined_call_operand.vmem [shape: f32[1,1024], index: 8, kind: input, shape index: {}]
  %s9 = inlined_call_operand.vmem [shape: f32[1,1024], index: 9, kind: input, shape index: {}]
  %s10 = inlined_call_operand.vmem [shape: f32[1,1024], index: 10, kind: input, shape index: {}]
  %s11 = inlined_call_operand.hbm [shape: bf16[144,1024], index: 11, kind: input, shape index: {}]
  %s12 = inlined_call_operand.vmem [shape: f32[1,1024], index: 12, kind: input, shape index: {}]
  %s13 = inlined_call_operand.vmem [shape: f32[1,1024], index: 13, kind: input, shape index: {}]
  %s14 = inlined_call_operand.vmem [shape: f32[1,1024], index: 14, kind: input, shape index: {}]
  %s15 = inlined_call_operand.vmem [shape: f32[256,8], index: 15, kind: input, shape index: {}]
  %s16 = inlined_call_operand.vmem [shape: f32[8,256], index: 16, kind: input, shape index: {}]
  %s17 = inlined_call_operand.hbm [shape: f32[2,16,1024], index: 17, kind: output, shape index: {}]
  %s18 = sld [smem:[#allocation0]]
  $region109: #{tpu_custom_call.1} parent=0
    _
  %s20 = ssub.s32 1, %s18
  %s21 = scalar_select 0, %s20, %s18
  $region1: #{tpu_custom_call.1} parent=0
    #allocation2 [shape = 'u8[147456]{0}', space=vmem, size = 0x24000, scoped, tag = 'input window, operand 7']
    #allocation3 [shape = 's32[2]{0}', space=sflag, size = 0x8, scoped, tag = 'scoped memory for tpu_custom_call.1']
    #allocation4 [shape = 's32[2]{0}', space=sflag, size = 0x8, scoped, tag = 'scoped memory for tpu_custom_call.1']
    #allocation5 [shape = 'u8[147456]{0}', space=vmem, size = 0x24000, scoped, tag = 'input window, operand 11']
    #allocation6 [shape = 's32[2]{0}', space=sflag, size = 0x8, scoped, tag = 'scoped memory for tpu_custom_call.1']
    #allocation7 [shape = 'u8[65536]{0}', space=vmem, size = 0x10000, scoped, tag = 'output window, operand 0']
    %22 = vsyncpa [#allocation3], 0
    %s23 = scalar_lea.sflag [#allocation3], 1
    %24 = vsyncpa %s23, 0
    %25 = vsyncpa [#allocation6], 0
    %s26 = scalar_lea.sflag [#allocation6], 1
    %27 = vsyncpa %s26, 0
    %28 = vsyncpa [#allocation4], 0
    %s29 = scalar_lea.sflag [#allocation4], 1
    %30 = vsyncpa %s29, 0
    loop: start=0, step=1, limit=6
    $region2: #{tpu_custom_call.1} parent=1 // loop_pre_header
      _
    $region3: #{tpu_custom_call.1} parent=1 // loop_header
      %s32 = sphi 0, %s36
      %p33 = scmp.ge.s32.totalorder %s32, 6
      %s40 = sphi 0, %s40
      %s42 = sphi 0, %s40
      %s43 = sphi 0, %s42
      %s57 = sphi 0, %s43
      %s61 = sphi 0, %s61
      %s63 = sphi 0, %s61
      %s64 = sphi 0, %s63
      %s78 = sphi 0, %s64
      %s82 = sphi 0, %s82
      %s84 = sphi 0, %s82
      %s85 = sphi 0, %s84
      %s99 = sphi 0, %s85
      %s103 = sphi 0, %s103
      %s105 = sphi 0, %s103
      %s106 = sphi 0, %s105
      %s120 = sphi 0, %s106
      %s124 = sphi 0, %s124
      %s126 = sphi 0, %s124
      %s127 = sphi 0, %s126
      %s141 = sphi 0, %s127
      %s145 = sphi 0, %s145
      %s147 = sphi 0, %s145
      %s148 = sphi 0, %s147
      %s162 = sphi 0, %s148
      %s166 = sphi 0, %s166
      %s168 = sphi 0, %s166
      %s169 = sphi 0, %s168
      %s183 = sphi 0, %s169
      %s189 = sphi 0, %s191
      %s192 = sphi 0, %s189
      %s193 = sphi 0, %s192
      %s209 = sphi 0, %s193
      %s215 = sphi 0, %s217
      %s218 = sphi 0, %s215
      %s219 = sphi 0, %s218
      %s235 = sphi 0, %s219
      %s241 = sphi 0, %s243
      %s244 = sphi 0, %s241
      %s245 = sphi 0, %s244
      %s261 = sphi 0, %s245
      %s267 = sphi 0, %s269
      %s270 = sphi 0, %s267
      %s271 = sphi 0, %s270
      %s287 = sphi 0, %s271
      %s293 = sphi 0, %s295
      %s296 = sphi 0, %s293
      %s297 = sphi 0, %s296
      %s313 = sphi 0, %s297
      %s319 = sphi 0, %s321
      %s322 = sphi 0, %s319
      %s323 = sphi 0, %s322
      %s339 = sphi 0, %s323
      %s345 = sphi 0, %s347
      %s348 = sphi 0, %s345
      %s349 = sphi 0, %s348
      %s365 = sphi 0, %s349
      %s371 = sphi 0, %s373
      %s374 = sphi 0, %s371
      %s375 = sphi 0, %s374
      %s391 = sphi 0, %s375
      %s395 = sphi 0, %s395
      %s397 = sphi 0, %s395
      %s398 = sphi 0, %s397
      %s412 = sphi 0, %s398
      %s416 = sphi 0, %s416
      %s418 = sphi 0, %s416
      %s419 = sphi 0, %s418
      %s433 = sphi 0, %s419
      %s439 = sphi 0, %s441
      %s442 = sphi 0, %s439
      %s443 = sphi 0, %s442
      %s459 = sphi 0, %s443
    $region4: #{tpu_custom_call.1} parent=1 // loop_header_branch
      %35 = sbr.rel (%p33) target = $region8
    $region5: #{tpu_custom_call.1} parent=1 // loop_body
      %s37 = ssub.s32 %s32, 1
      %s38 = ssub.s32 %s32, 2
      %s39 = sadd.s32 %s32, 1
      %s41 = sadd.s32 %s40, 1
      %p44 = scmp.eq.s32.totalorder %s32, 3
      %p45 = scmp.ne.s32.totalorder %s40, %s42
      %p46 = scmp.eq.s32.totalorder %s32, 0
      %p47 = por %p45, %p46
      %p48 = scmp.ne.s32.totalorder %s40, %s42
      %p49 = scmp.eq.s32.totalorder %s37, 3
      %p50 = por %p48, %p49
      %p51 = scmp.ne.s32.totalorder %s42, %s43
      %p52 = scmp.eq.s32.totalorder %s37, 0
      %p53 = por %p51, %p52
      %p54 = scmp.ne.s32.totalorder %s42, %s43
      %p55 = scmp.eq.s32.totalorder %s38, 3
      %p56 = por %p54, %p55
      %p58 = scmp.ne.s32.totalorder %s43, %s57
      %p59 = scmp.eq.s32.totalorder %s38, 0
      %p60 = por %p58, %p59
      %s62 = sadd.s32 %s61, 1
      %p65 = scmp.eq.s32.totalorder %s32, 3
      %p66 = scmp.ne.s32.totalorder %s61, %s63
      %p67 = scmp.eq.s32.totalorder %s32, 0
      %p68 = por %p66, %p67
      %p69 = scmp.ne.s32.totalorder %s61, %s63
      %p70 = scmp.eq.s32.totalorder %s37, 3
      %p71 = por %p69, %p70
      %p72 = scmp.ne.s32.totalorder %s63, %s64
      %p73 = scmp.eq.s32.totalorder %s37, 0
      %p74 = por %p72, %p73
      %p75 = scmp.ne.s32.totalorder %s63, %s64
      %p76 = scmp.eq.s32.totalorder %s38, 3
      %p77 = por %p75, %p76
      %p79 = scmp.ne.s32.totalorder %s64, %s78
      %p80 = scmp.eq.s32.totalorder %s38, 0
      %p81 = por %p79, %p80
      %s83 = sadd.s32 %s82, 1
      %p86 = scmp.eq.s32.totalorder %s32, 3
      %p87 = scmp.ne.s32.totalorder %s82, %s84
      %p88 = scmp.eq.s32.totalorder %s32, 0
      %p89 = por %p87, %p88
      %p90 = scmp.ne.s32.totalorder %s82, %s84
      %p91 = scmp.eq.s32.totalorder %s37, 3
      %p92 = por %p90, %p91
      %p93 = scmp.ne.s32.totalorder %s84, %s85
      %p94 = scmp.eq.s32.totalorder %s37, 0
      %p95 = por %p93, %p94
      %p96 = scmp.ne.s32.totalorder %s84, %s85
      %p97 = scmp.eq.s32.totalorder %s38, 3
      %p98 = por %p96, %p97
      %p100 = scmp.ne.s32.totalorder %s85, %s99
      %p101 = scmp.eq.s32.totalorder %s38, 0
      %p102 = por %p100, %p101
      %s104 = sadd.s32 %s103, 1
      %p107 = scmp.eq.s32.totalorder %s32, 3
      %p108 = scmp.ne.s32.totalorder %s103, %s105
      %p109 = scmp.eq.s32.totalorder %s32, 0
      %p110 = por %p108, %p109
      %p111 = scmp.ne.s32.totalorder %s103, %s105
      %p112 = scmp.eq.s32.totalorder %s37, 3
      %p113 = por %p111, %p112
      %p114 = scmp.ne.s32.totalorder %s105, %s106
      %p115 = scmp.eq.s32.totalorder %s37, 0
      %p116 = por %p114, %p115
      %p117 = scmp.ne.s32.totalorder %s105, %s106
      %p118 = scmp.eq.s32.totalorder %s38, 3
      %p119 = por %p117, %p118
      %p121 = scmp.ne.s32.totalorder %s106, %s120
      %p122 = scmp.eq.s32.totalorder %s38, 0
      %p123 = por %p121, %p122
      %s125 = sadd.s32 %s124, 1
      %p128 = scmp.eq.s32.totalorder %s32, 3
      %p129 = scmp.ne.s32.totalorder %s124, %s126
      %p130 = scmp.eq.s32.totalorder %s32, 0
      %p131 = por %p129, %p130
      %p132 = scmp.ne.s32.totalorder %s124, %s126
      %p133 = scmp.eq.s32.totalorder %s37, 3
      %p134 = por %p132, %p133
      %p135 = scmp.ne.s32.totalorder %s126, %s127
      %p136 = scmp.eq.s32.totalorder %s37, 0
      %p137 = por %p135, %p136
      %p138 = scmp.ne.s32.totalorder %s126, %s127
      %p139 = scmp.eq.s32.totalorder %s38, 3
      %p140 = por %p138, %p139
      %p142 = scmp.ne.s32.totalorder %s127, %s141
      %p143 = scmp.eq.s32.totalorder %s38, 0
      %p144 = por %p142, %p143
      %s146 = sadd.s32 %s145, 1
      %p149 = scmp.eq.s32.totalorder %s32, 3
      %p150 = scmp.ne.s32.totalorder %s145, %s147
      %p151 = scmp.eq.s32.totalorder %s32, 0
      %p152 = por %p150, %p151
      %p153 = scmp.ne.s32.totalorder %s145, %s147
      %p154 = scmp.eq.s32.totalorder %s37, 3
      %p155 = por %p153, %p154
      %p156 = scmp.ne.s32.totalorder %s147, %s148
      %p157 = scmp.eq.s32.totalorder %s37, 0
      %p158 = por %p156, %p157
      %p159 = scmp.ne.s32.totalorder %s147, %s148
      %p160 = scmp.eq.s32.totalorder %s38, 3
      %p161 = por %p159, %p160
      %p163 = scmp.ne.s32.totalorder %s148, %s162
      %p164 = scmp.eq.s32.totalorder %s38, 0
      %p165 = por %p163, %p164
      %s167 = sadd.s32 %s166, 1
      %p170 = scmp.eq.s32.totalorder %s32, 3
      %p171 = scmp.ne.s32.totalorder %s166, %s168
      %p172 = scmp.eq.s32.totalorder %s32, 0
      %p173 = por %p171, %p172
      %p174 = scmp.ne.s32.totalorder %s166, %s168
      %p175 = scmp.eq.s32.totalorder %s37, 3
      %p176 = por %p174, %p175
      %p177 = scmp.ne.s32.totalorder %s168, %s169
      %p178 = scmp.eq.s32.totalorder %s37, 0
      %p179 = por %p177, %p178
      %p180 = scmp.ne.s32.totalorder %s168, %s169
      %p181 = scmp.eq.s32.totalorder %s38, 3
      %p182 = por %p180, %p181
      %p184 = scmp.ne.s32.totalorder %s169, %s183
      %p185 = scmp.eq.s32.totalorder %s38, 0
      %p186 = por %p184, %p185
      %s187 = ssub.s32 %s32, %s39
      %p188 = scmp.eq.s32.totalorder %s187, 0
      %s190 = sadd.s32 %s189, 1
      %s191 = scalar_select %p188, %s189, %s190
      %p194 = pneg %p188
      %p195 = scmp.eq.s32.totalorder %s32, 3
      %p196 = por %p194, %p195
      %p197 = scmp.ne.s32.totalorder %s189, %s192
      %p198 = scmp.eq.s32.totalorder %s32, 0
      %p199 = por %p197, %p198
      %p200 = scmp.ne.s32.totalorder %s189, %s192
      %p201 = scmp.eq.s32.totalorder %s37, 3
      %p202 = por %p200, %p201
      %p203 = scmp.ne.s32.totalorder %s192, %s193
      %p204 = scmp.eq.s32.totalorder %s37, 0
      %p205 = por %p203, %p204
      %p206 = scmp.ne.s32.totalorder %s192, %s193
      %p207 = scmp.eq.s32.totalorder %s38, 3
      %p208 = por %p206, %p207
      %p210 = scmp.ne.s32.totalorder %s193, %s209
      %p211 = scmp.eq.s32.totalorder %s38, 0
      %p212 = por %p210, %p211
      %s213 = ssub.s32 %s32, %s39
      %p214 = scmp.eq.s32.totalorder %s213, 0
      %s216 = sadd.s32 %s215, 1
      %s217 = scalar_select %p214, %s215, %s216
      %p220 = pneg %p214
      %p221 = scmp.eq.s32.totalorder %s32, 3
      %p222 = por %p220, %p221
      %p223 = scmp.ne.s32.totalorder %s215, %s218
      %p224 = scmp.eq.s32.totalorder %s32, 0
      %p225 = por %p223, %p224
      %p226 = scmp.ne.s32.totalorder %s215, %s218
      %p227 = scmp.eq.s32.totalorder %s37, 3
      %p228 = por %p226, %p227
      %p229 = scmp.ne.s32.totalorder %s218, %s219
      %p230 = scmp.eq.s32.totalorder %s37, 0
      %p231 = por %p229, %p230
      %p232 = scmp.ne.s32.totalorder %s218, %s219
      %p233 = scmp.eq.s32.totalorder %s38, 3
      %p234 = por %p232, %p233
      %p236 = scmp.ne.s32.totalorder %s219, %s235
      %p237 = scmp.eq.s32.totalorder %s38, 0
      %p238 = por %p236, %p237
      %s239 = ssub.s32 %s32, %s39
      %p240 = scmp.eq.s32.totalorder %s239, 0
      %s242 = sadd.s32 %s241, 1
      %s243 = scalar_select %p240, %s241, %s242
      %p246 = pneg %p240
      %p247 = scmp.eq.s32.totalorder %s32, 3
      %p248 = por %p246, %p247
      %p249 = scmp.ne.s32.totalorder %s241, %s244
      %p250 = scmp.eq.s32.totalorder %s32, 0
      %p251 = por %p249, %p250
      %p252 = scmp.ne.s32.totalorder %s241, %s244
      %p253 = scmp.eq.s32.totalorder %s37, 3
      %p254 = por %p252, %p253
      %p255 = scmp.ne.s32.totalorder %s244, %s245
      %p256 = scmp.eq.s32.totalorder %s37, 0
      %p257 = por %p255, %p256
      %p258 = scmp.ne.s32.totalorder %s244, %s245
      %p259 = scmp.eq.s32.totalorder %s38, 3
      %p260 = por %p258, %p259
      %p262 = scmp.ne.s32.totalorder %s245, %s261
      %p263 = scmp.eq.s32.totalorder %s38, 0
      %p264 = por %p262, %p263
      %s265 = ssub.s32 %s32, %s39
      %p266 = scmp.eq.s32.totalorder %s265, 0
      %s268 = sadd.s32 %s267, 1
      %s269 = scalar_select %p266, %s267, %s268
      %p272 = pneg %p266
      %p273 = scmp.eq.s32.totalorder %s32, 3
      %p274 = por %p272, %p273
      %p275 = scmp.ne.s32.totalorder %s267, %s270
      %p276 = scmp.eq.s32.totalorder %s32, 0
      %p277 = por %p275, %p276
      %p278 = scmp.ne.s32.totalorder %s267, %s270
      %p279 = scmp.eq.s32.totalorder %s37, 3
      %p280 = por %p278, %p279
      %p281 = scmp.ne.s32.totalorder %s270, %s271
      %p282 = scmp.eq.s32.totalorder %s37, 0
      %p283 = por %p281, %p282
      %p284 = scmp.ne.s32.totalorder %s270, %s271
      %p285 = scmp.eq.s32.totalorder %s38, 3
      %p286 = por %p284, %p285
      %p288 = scmp.ne.s32.totalorder %s271, %s287
      %p289 = scmp.eq.s32.totalorder %s38, 0
      %p290 = por %p288, %p289
      %s291 = ssub.s32 %s32, %s39
      %p292 = scmp.eq.s32.totalorder %s291, 0
      %s294 = sadd.s32 %s293, 1
      %s295 = scalar_select %p292, %s293, %s294
      %p298 = pneg %p292
      %p299 = scmp.eq.s32.totalorder %s32, 3
      %p300 = por %p298, %p299
      %p301 = scmp.ne.s32.totalorder %s293, %s296
      %p302 = scmp.eq.s32.totalorder %s32, 0
      %p303 = por %p301, %p302
      %p304 = scmp.ne.s32.totalorder %s293, %s296
      %p305 = scmp.eq.s32.totalorder %s37, 3
      %p306 = por %p304, %p305
      %p307 = scmp.ne.s32.totalorder %s296, %s297
      %p308 = scmp.eq.s32.totalorder %s37, 0
      %p309 = por %p307, %p308
      %p310 = scmp.ne.s32.totalorder %s296, %s297
      %p311 = scmp.eq.s32.totalorder %s38, 3
      %p312 = por %p310, %p311
      %p314 = scmp.ne.s32.totalorder %s297, %s313
      %p315 = scmp.eq.s32.totalorder %s38, 0
      %p316 = por %p314, %p315
      %s317 = ssub.s32 %s32, %s39
      %p318 = scmp.eq.s32.totalorder %s317, 0
      %s320 = sadd.s32 %s319, 1
      %s321 = scalar_select %p318, %s319, %s320
      %p324 = pneg %p318
      %p325 = scmp.eq.s32.totalorder %s32, 3
      %p326 = por %p324, %p325
      %p327 = scmp.ne.s32.totalorder %s319, %s322
      %p328 = scmp.eq.s32.totalorder %s32, 0
      %p329 = por %p327, %p328
      %p330 = scmp.ne.s32.totalorder %s319, %s322
      %p331 = scmp.eq.s32.totalorder %s37, 3
      %p332 = por %p330, %p331
      %p333 = scmp.ne.s32.totalorder %s322, %s323
      %p334 = scmp.eq.s32.totalorder %s37, 0
      %p335 = por %p333, %p334
      %p336 = scmp.ne.s32.totalorder %s322, %s323
      %p337 = scmp.eq.s32.totalorder %s38, 3
      %p338 = por %p336, %p337
      %p340 = scmp.ne.s32.totalorder %s323, %s339
      %p341 = scmp.eq.s32.totalorder %s38, 0
      %p342 = por %p340, %p341
      %s343 = ssub.s32 %s32, %s39
      %p344 = scmp.eq.s32.totalorder %s343, 0
      %s346 = sadd.s32 %s345, 1
      %s347 = scalar_select %p344, %s345, %s346
      %p350 = pneg %p344
      %p351 = scmp.eq.s32.totalorder %s32, 3
      %p352 = por %p350, %p351
      %p353 = scmp.ne.s32.totalorder %s345, %s348
      %p354 = scmp.eq.s32.totalorder %s32, 0
      %p355 = por %p353, %p354
      %p356 = scmp.ne.s32.totalorder %s345, %s348
      %p357 = scmp.eq.s32.totalorder %s37, 3
      %p358 = por %p356, %p357
      %p359 = scmp.ne.s32.totalorder %s348, %s349
      %p360 = scmp.eq.s32.totalorder %s37, 0
      %p361 = por %p359, %p360
      %p362 = scmp.ne.s32.totalorder %s348, %s349
      %p363 = scmp.eq.s32.totalorder %s38, 3
      %p364 = por %p362, %p363
      %p366 = scmp.ne.s32.totalorder %s349, %s365
      %p367 = scmp.eq.s32.totalorder %s38, 0
      %p368 = por %p366, %p367
      %s369 = ssub.s32 %s32, %s39
      %p370 = scmp.eq.s32.totalorder %s369, 0
      %s372 = sadd.s32 %s371, 1
      %s373 = scalar_select %p370, %s371, %s372
      %p376 = pneg %p370
      %p377 = scmp.eq.s32.totalorder %s32, 3
      %p378 = por %p376, %p377
      %p379 = scmp.ne.s32.totalorder %s371, %s374
      %p380 = scmp.eq.s32.totalorder %s32, 0
      %p381 = por %p379, %p380
      %p382 = scmp.ne.s32.totalorder %s371, %s374
      %p383 = scmp.eq.s32.totalorder %s37, 3
      %p384 = por %p382, %p383
      %p385 = scmp.ne.s32.totalorder %s374, %s375
      %p386 = scmp.eq.s32.totalorder %s37, 0
      %p387 = por %p385, %p386
      %p388 = scmp.ne.s32.totalorder %s374, %s375
      %p389 = scmp.eq.s32.totalorder %s38, 3
      %p390 = por %p388, %p389
      %p392 = scmp.ne.s32.totalorder %s375, %s391
      %p393 = scmp.eq.s32.totalorder %s38, 0
      %p394 = por %p392, %p393
      %s396 = sadd.s32 %s395, 1
      %p399 = scmp.eq.s32.totalorder %s32, 3
      %p400 = scmp.ne.s32.totalorder %s395, %s397
      %p401 = scmp.eq.s32.totalorder %s32, 0
      %p402 = por %p400, %p401
      %p403 = scmp.ne.s32.totalorder %s395, %s397
      %p404 = scmp.eq.s32.totalorder %s37, 3
      %p405 = por %p403, %p404
      %p406 = scmp.ne.s32.totalorder %s397, %s398
      %p407 = scmp.eq.s32.totalorder %s37, 0
      %p408 = por %p406, %p407
      %p409 = scmp.ne.s32.totalorder %s397, %s398
      %p410 = scmp.eq.s32.totalorder %s38, 3
      %p411 = por %p409, %p410
      %p413 = scmp.ne.s32.totalorder %s398, %s412
      %p414 = scmp.eq.s32.totalorder %s38, 0
      %p415 = por %p413, %p414
      %s417 = sadd.s32 %s416, 1
      %p420 = scmp.eq.s32.totalorder %s32, 3
      %p421 = scmp.ne.s32.totalorder %s416, %s418
      %p422 = scmp.eq.s32.totalorder %s32, 0
      %p423 = por %p421, %p422
      %p424 = scmp.ne.s32.totalorder %s416, %s418
      %p425 = scmp.eq.s32.totalorder %s37, 3
      %p426 = por %p424, %p425
      %p427 = scmp.ne.s32.totalorder %s418, %s419
      %p428 = scmp.eq.s32.totalorder %s37, 0
      %p429 = por %p427, %p428
      %p430 = scmp.ne.s32.totalorder %s418, %s419
      %p431 = scmp.eq.s32.totalorder %s38, 3
      %p432 = por %p430, %p431
      %p434 = scmp.ne.s32.totalorder %s419, %s433
      %p435 = scmp.eq.s32.totalorder %s38, 0
      %p436 = por %p434, %p435
      %s437 = ssub.s32 %s32, %s39
      %p438 = scmp.eq.s32.totalorder %s437, 0
      %s440 = sadd.s32 %s439, 1
      %s441 = scalar_select %p438, %s439, %s440
      %p444 = pneg %p438
      %p445 = scmp.eq.s32.totalorder %s32, 3
      %p446 = por %p444, %p445
      %p447 = scmp.ne.s32.totalorder %s439, %s442
      %p448 = scmp.eq.s32.totalorder %s32, 0
      %p449 = por %p447, %p448
      %p450 = scmp.ne.s32.totalorder %s439, %s442
      %p451 = scmp.eq.s32.totalorder %s37, 3
      %p452 = por %p450, %p451
      %p453 = scmp.ne.s32.totalorder %s442, %s443
      %p454 = scmp.eq.s32.totalorder %s37, 0
      %p455 = por %p453, %p454
      %p456 = scmp.ne.s32.totalorder %s442, %s443
      %p457 = scmp.eq.s32.totalorder %s38, 3
      %p458 = por %p456, %p457
      %p460 = scmp.ne.s32.totalorder %s443, %s459
      %p461 = scmp.eq.s32.totalorder %s38, 0
      %p462 = por %p460, %p461
      %p463 = scmp.le.s32.totalorder 1, %s32
      %p464 = scmp.lt.s32.totalorder %s32, 5
      %p465 = pnand %p463, %p464
      %p466 = pneg %p465
      // Predicated region
      $region9: #{tpu_custom_call.1} parent=5 // pred_check
        _
      $region10: #{tpu_custom_call.1} parent=5 // pred_check_branch
        %468 = sbr.rel (%p465) target = $region12
      $region11: #{tpu_custom_call.1} parent=5 // pred_region
        %s469 = ssub.s32 %s32, 1
        // Predicated region
        $region13: #{tpu_custom_call.1} parent=11 // pred_check
          %p470 = pneg %p53
        $region14: #{tpu_custom_call.1} parent=11 // pred_check_branch
          %472 = sbr.rel (%p470) target = $region16
        $region15: #{tpu_custom_call.1} parent=11 // pred_region
          _
        $region16: #{tpu_custom_call.1} parent=11 // pred_fallthru
          _
        // Predicated region
        $region17: #{tpu_custom_call.1} parent=11 // pred_check
          %p473 = pneg %p74
        $region18: #{tpu_custom_call.1} parent=11 // pred_check_branch
          %475 = sbr.rel (%p473) target = $region20
        $region19: #{tpu_custom_call.1} parent=11 // pred_region
          _
        $region20: #{tpu_custom_call.1} parent=11 // pred_fallthru
          _
        // Predicated region
        $region21: #{tpu_custom_call.1} parent=11 // pred_check
          %p476 = pneg %p95
        $region22: #{tpu_custom_call.1} parent=11 // pred_check_branch
          %478 = sbr.rel (%p476) target = $region24
        $region23: #{tpu_custom_call.1} parent=11 // pred_region
          _
        $region24: #{tpu_custom_call.1} parent=11 // pred_fallthru
          _
        // Predicated region
        $region25: #{tpu_custom_call.1} parent=11 // pred_check
          %p479 = pneg %p116
        $region26: #{tpu_custom_call.1} parent=11 // pred_check_branch
          %481 = sbr.rel (%p479) target = $region28
        $region27: #{tpu_custom_call.1} parent=11 // pred_region
          _
        $region28: #{tpu_custom_call.1} parent=11 // pred_fallthru
          _
        // Predicated region
        $region29: #{tpu_custom_call.1} parent=11 // pred_check
          %p482 = pneg %p137
        $region30: #{tpu_custom_call.1} parent=11 // pred_check_branch
          %484 = sbr.rel (%p482) target = $region32
        $region31: #{tpu_custom_call.1} parent=11 // pred_region
          _
        $region32: #{tpu_custom_call.1} parent=11 // pred_fallthru
          _
        // Predicated region
        $region33: #{tpu_custom_call.1} parent=11 // pred_check
          %p485 = pneg %p158
        $region34: #{tpu_custom_call.1} parent=11 // pred_check_branch
          %487 = sbr.rel (%p485) target = $region36
        $region35: #{tpu_custom_call.1} parent=11 // pred_region
          _
        $region36: #{tpu_custom_call.1} parent=11 // pred_fallthru
          _
        // Predicated region
        $region37: #{tpu_custom_call.1} parent=11 // pred_check
          %p488 = pneg %p179
        $region38: #{tpu_custom_call.1} parent=11 // pred_check_branch
          %490 = sbr.rel (%p488) target = $region40
        $region39: #{tpu_custom_call.1} parent=11 // pred_region
          _
        $region40: #{tpu_custom_call.1} parent=11 // pred_fallthru
          _
        // Predicated region
        $region41: #{tpu_custom_call.1} parent=11 // pred_check
          %p491 = pneg %p408
        $region42: #{tpu_custom_call.1} parent=11 // pred_check_branch
          %493 = sbr.rel (%p491) target = $region44
        $region43: #{tpu_custom_call.1} parent=11 // pred_region
          _
        $region44: #{tpu_custom_call.1} parent=11 // pred_fallthru
          _
        // Predicated region
        $region45: #{tpu_custom_call.1} parent=11 // pred_check
          %p494 = pneg %p429
        $region46: #{tpu_custom_call.1} parent=11 // pred_check_branch
          %496 = sbr.rel (%p494) target = $region48
        $region47: #{tpu_custom_call.1} parent=11 // pred_region
          _
        $region48: #{tpu_custom_call.1} parent=11 // pred_fallthru
          _
      $region12: #{tpu_custom_call.1} parent=5 // pred_fallthru
        _
      %p497 = scmp.lt.s32.totalorder %s32, 4
      // Predicated region
      $region49: #{tpu_custom_call.1} parent=5 // pred_check
        %p498 = pneg %p497
      $region50: #{tpu_custom_call.1} parent=5 // pred_check_branch
        %500 = sbr.rel (%p498) target = $region52
      $region51: #{tpu_custom_call.1} parent=5 // pred_region
        // Predicated region
        $region53: #{tpu_custom_call.1} parent=51 // pred_check
          %p501 = pneg %p199
        $region54: #{tpu_custom_call.1} parent=51 // pred_check_branch
          %503 = sbr.rel (%p501) target = $region56
        $region55: #{tpu_custom_call.1} parent=51 // pred_region
          %s504 = sand.u32 %s189, 1
          %s505 = scalar_lea.sflag [#allocation3], %s504
          %s506 = sand.u32 %s189, 1
          %s507 = smul.addr %s506, 144
          %s508 = scalar_lea.vmem [#allocation2], %s507
          %s509 = smul.u32 2, %s32
          %511 = vsyncadd %s505, 0
          %s512 = smul.addr %s509, 4
          %s513 = scalar_lea.hbm %s7, %s512
          %s514 = sshll.u32 %s513, 4
          %s515 = int_to_ptr.hbm [resolvable:$true] %s514
          %s516 = sshll.u32 %s508, 4
          %s517 = int_to_ptr.vmem [resolvable:$true] %s516
          %522 = dma.hbm_to_vmem [thread:$0]  %s515, 2304, %s517, %s505, 512, 128, 8
        $region56: #{tpu_custom_call.1} parent=51 // pred_fallthru
          _
        // Predicated region
        $region57: #{tpu_custom_call.1} parent=51 // pred_check
          %p523 = pneg %p225
        $region58: #{tpu_custom_call.1} parent=51 // pred_check_branch
          %525 = sbr.rel (%p523) target = $region60
        $region59: #{tpu_custom_call.1} parent=51 // pred_region
          %s526 = smul.u32 2, %s32
          %p527 = scmp.lt.s32.totalorder %s526, 7
          %s528 = scalar_select %p527, %s526, 7
          %s529 = scalar_lea.vmem %s8, %s528
          %s530 = smul.u32 2, %s32
        $region60: #{tpu_custom_call.1} parent=51 // pred_fallthru
          _
        // Predicated region
        $region61: #{tpu_custom_call.1} parent=51 // pred_check
          %p531 = pneg %p251
        $region62: #{tpu_custom_call.1} parent=51 // pred_check_branch
          %533 = sbr.rel (%p531) target = $region64
        $region63: #{tpu_custom_call.1} parent=51 // pred_region
          %s534 = smul.u32 2, %s32
          %p535 = scmp.lt.s32.totalorder %s534, 7
          %s536 = scalar_select %p535, %s534, 7
          %s537 = scalar_lea.vmem %s9, %s536
          %s538 = smul.u32 2, %s32
        $region64: #{tpu_custom_call.1} parent=51 // pred_fallthru
          _
        // Predicated region
        $region65: #{tpu_custom_call.1} parent=51 // pred_check
          %p539 = pneg %p277
        $region66: #{tpu_custom_call.1} parent=51 // pred_check_branch
          %541 = sbr.rel (%p539) target = $region68
        $region67: #{tpu_custom_call.1} parent=51 // pred_region
          %s542 = smul.u32 2, %s32
          %p543 = scmp.lt.s32.totalorder %s542, 7
          %s544 = scalar_select %p543, %s542, 7
          %s545 = scalar_lea.vmem %s10, %s544
          %s546 = smul.u32 2, %s32
        $region68: #{tpu_custom_call.1} parent=51 // pred_fallthru
          _
        // Predicated region
        $region69: #{tpu_custom_call.1} parent=51 // pred_check
          %p547 = pneg %p303
        $region70: #{tpu_custom_call.1} parent=51 // pred_check_branch
          %549 = sbr.rel (%p547) target = $region72
        $region71: #{tpu_custom_call.1} parent=51 // pred_region
          %s550 = sand.u32 %s293, 1
          %s551 = scalar_lea.sflag [#allocation6], %s550
          %s552 = sand.u32 %s293, 1
          %s553 = smul.addr %s552, 144
          %s554 = scalar_lea.vmem [#allocation5], %s553
          %s555 = smul.u32 2, %s32
          %557 = vsyncadd %s551, 0
          %s558 = smul.addr %s555, 4
          %s559 = scalar_lea.hbm %s11, %s558
          %s560 = sshll.u32 %s559, 4
          %s561 = int_to_ptr.hbm [resolvable:$true] %s560
          %s562 = sshll.u32 %s554, 4
          %s563 = int_to_ptr.vmem [resolvable:$true] %s562
          %568 = dma.hbm_to_vmem [thread:$0]  %s561, 2304, %s563, %s551, 512, 128, 8
        $region72: #{tpu_custom_call.1} parent=51 // pred_fallthru
          _
        // Predicated region
        $region73: #{tpu_custom_call.1} parent=51 // pred_check
          %p569 = pneg %p329
        $region74: #{tpu_custom_call.1} parent=51 // pred_check_branch
          %571 = sbr.rel (%p569) target = $region76
        $region75: #{tpu_custom_call.1} parent=51 // pred_region
          %s572 = smul.u32 2, %s32
          %p573 = scmp.lt.s32.totalorder %s572, 7
          %s574 = scalar_select %p573, %s572, 7
          %s575 = scalar_lea.vmem %s12, %s574
          %s576 = smul.u32 2, %s32
        $region76: #{tpu_custom_call.1} parent=51 // pred_fallthru
          _
        // Predicated region
        $region77: #{tpu_custom_call.1} parent=51 // pred_check
          %p577 = pneg %p355
        $region78: #{tpu_custom_call.1} parent=51 // pred_check_branch
          %579 = sbr.rel (%p577) target = $region80
        $region79: #{tpu_custom_call.1} parent=51 // pred_region
          %s580 = smul.u32 2, %s32
          %p581 = scmp.lt.s32.totalorder %s580, 7
          %s582 = scalar_select %p581, %s580, 7
          %s583 = scalar_lea.vmem %s13, %s582
          %s584 = smul.u32 2, %s32
        $region80: #{tpu_custom_call.1} parent=51 // pred_fallthru
          _
        // Predicated region
        $region81: #{tpu_custom_call.1} parent=51 // pred_check
          %p585 = pneg %p381
        $region82: #{tpu_custom_call.1} parent=51 // pred_check_branch
          %587 = sbr.rel (%p585) target = $region84
        $region83: #{tpu_custom_call.1} parent=51 // pred_region
          %s588 = smul.u32 2, %s32
          %p589 = scmp.lt.s32.totalorder %s588, 7
          %s590 = scalar_select %p589, %s588, 7
          %s591 = scalar_lea.vmem %s14, %s590
          %s592 = smul.u32 2, %s32
        $region84: #{tpu_custom_call.1} parent=51 // pred_fallthru
          _
      $region52: #{tpu_custom_call.1} parent=5 // pred_fallthru
        _
      %p593 = scmp.le.s32.totalorder 1, %s32
      %p594 = scmp.lt.s32.totalorder %s32, 5
      %p595 = pnand %p593, %p594
      %p596 = pneg %p595
      // Predicated region
      $region85: #{tpu_custom_call.1} parent=5 // pred_check
        _
      $region86: #{tpu_custom_call.1} parent=5 // pred_check_branch
        %598 = sbr.rel (%p595) target = $region88
      $region87: #{tpu_custom_call.1} parent=5 // pred_region
        %s599 = ssub.s32 %s32, 1
        %s600 = sand.u32 %s192, 1
        %s601 = scalar_lea.sflag [#allocation3], %s600
        %s602 = sand.u32 %s192, 1
        %s603 = smul.addr %s602, 144
        %s604 = scalar_lea.vmem [#allocation2], %s603
        // Predicated region
        $region89: #{tpu_custom_call.1} parent=87 // pred_check
          %p605 = pneg %p205
        $region90: #{tpu_custom_call.1} parent=87 // pred_check_branch
          %607 = sbr.rel (%p605) target = $region92
        $region91: #{tpu_custom_call.1} parent=87 // pred_region
          %609 = dma.done %s601, 2304
        $region92: #{tpu_custom_call.1} parent=87 // pred_fallthru
          _
        %s610 = sand.u32 %s296, 1
        %s611 = scalar_lea.sflag [#allocation6], %s610
        %s612 = sand.u32 %s296, 1
        %s613 = smul.addr %s612, 144
        %s614 = scalar_lea.vmem [#allocation5], %s613
        // Predicated region
        $region93: #{tpu_custom_call.1} parent=87 // pred_check
          %p615 = pneg %p309
        $region94: #{tpu_custom_call.1} parent=87 // pred_check_branch
          %617 = sbr.rel (%p615) target = $region96
        $region95: #{tpu_custom_call.1} parent=87 // pred_region
          %619 = dma.done %s611, 2304
        $region96: #{tpu_custom_call.1} parent=87 // pred_fallthru
          _
        %p620 = pneg %p53
        %p621 = pneg %p50
        %p622 = pneg %p74
        %p623 = pneg %p71
        %p624 = pneg %p95
        %p625 = pneg %p92
        %p626 = pneg %p116
        %p627 = pneg %p113
        %p628 = pneg %p137
        %p629 = pneg %p134
        %p630 = pneg %p158
        %p631 = pneg %p155
        %p632 = pneg %p179
        %p633 = pneg %p176
        %s634 = sand.u32 %s192, 1
        %s635 = scalar_lea.sflag [#allocation3], %s634
        %s636 = sand.u32 %s192, 1
        %s637 = smul.addr %s636, 144
        %s638 = scalar_lea.vmem [#allocation2], %s637
        %p639 = pneg %p205
        %p640 = pneg %p202
        %s641 = smul.u32 2, %s37
        %p642 = scmp.lt.s32.totalorder %s641, 7
        %s643 = scalar_select %p642, %s641, 7
        %s644 = scalar_lea.vmem %s8, %s643
        %p645 = pneg %p231
        %p646 = pneg %p228
        %s647 = smul.u32 2, %s37
        %p648 = scmp.lt.s32.totalorder %s647, 7
        %s649 = scalar_select %p648, %s647, 7
        %s650 = scalar_lea.vmem %s9, %s649
        %p651 = pneg %p257
        %p652 = pneg %p254
        %s653 = smul.u32 2, %s37
        %p654 = scmp.lt.s32.totalorder %s653, 7
        %s655 = scalar_select %p654, %s653, 7
        %s656 = scalar_lea.vmem %s10, %s655
        %p657 = pneg %p283
        %p658 = pneg %p280
        %s659 = sand.u32 %s296, 1
        %s660 = scalar_lea.sflag [#allocation6], %s659
        %s661 = sand.u32 %s296, 1
        %s662 = smul.addr %s661, 144
        %s663 = scalar_lea.vmem [#allocation5], %s662
        %p664 = pneg %p309
        %p665 = pneg %p306
        %s666 = smul.u32 2, %s37
        %p667 = scmp.lt.s32.totalorder %s666, 7
        %s668 = scalar_select %p667, %s666, 7
        %s669 = scalar_lea.vmem %s12, %s668
        %p670 = pneg %p335
        %p671 = pneg %p332
        %s672 = smul.u32 2, %s37
        %p673 = scmp.lt.s32.totalorder %s672, 7
        %s674 = scalar_select %p673, %s672, 7
        %s675 = scalar_lea.vmem %s13, %s674
        %p676 = pneg %p361
        %p677 = pneg %p358
        %s678 = smul.u32 2, %s37
        %p679 = scmp.lt.s32.totalorder %s678, 7
        %s680 = scalar_select %p679, %s678, 7
        %s681 = scalar_lea.vmem %s14, %s680
        %p682 = pneg %p387
        %p683 = pneg %p384
        %p684 = pneg %p408
        %p685 = pneg %p405
        %p686 = pneg %p429
        %p687 = pneg %p426
        %p688 = pneg %p455
        %p689 = pneg %p452
        %s690 = sand.u32 %s442, 1
        %s691 = scalar_lea.sflag [#allocation4], %s690
        %s692 = sand.u32 %s442, 1
        %s693 = smul.addr %s692, 64
        %s694 = scalar_lea.vmem [#allocation7], %s693
        %s695 = smul.u32 2, %s37
        %s696 = smul.u32 2, %s37
        %p697 = scmp.lt.s32.totalorder %s696, 7
        %s698 = scalar_select %p697, %s696, 7
        %s699 = scalar_lea.vmem %s8, %s698
        %s700 = smul.u32 2, %s37
        %s701 = smul.u32 2, %s37
        %p702 = scmp.lt.s32.totalorder %s701, 7
        %s703 = scalar_select %p702, %s701, 7
        %s704 = scalar_lea.vmem %s9, %s703
        %s705 = smul.u32 2, %s37
        %s706 = smul.u32 2, %s37
        %p707 = scmp.lt.s32.totalorder %s706, 7
        %s708 = scalar_select %p707, %s706, 7
        %s709 = scalar_lea.vmem %s10, %s708
        %s710 = smul.u32 2, %s37
        %s711 = smul.u32 2, %s37
        %s712 = smul.u32 2, %s37
        %p713 = scmp.lt.s32.totalorder %s712, 7
        %s714 = scalar_select %p713, %s712, 7
        %s715 = scalar_lea.vmem %s12, %s714
        %s716 = smul.u32 2, %s37
        %s717 = smul.u32 2, %s37
        %p718 = scmp.lt.s32.totalorder %s717, 7
        %s719 = scalar_select %p718, %s717, 7
        %s720 = scalar_lea.vmem %s13, %s719
        %s721 = smul.u32 2, %s37
        %s722 = smul.u32 2, %s37
        %p723 = scmp.lt.s32.totalorder %s722, 7
        %s724 = scalar_select %p723, %s722, 7
        %s725 = scalar_lea.vmem %s14, %s724
        %s726 = smul.u32 2, %s37
        %s727 = smul.u32 2, %s37
        %v729 = vld [vmem:[%s0] sm:$0x3]
        %v730 = vld [vmem:[%s15] sm:$0xff]
        %v731 = vld [vmem:[%s15 + $0x8] sm:$0xff]
        %v732 = vld [vmem:[%s15 + $0x10] sm:$0xff]
        %v733 = vld [vmem:[%s15 + $0x18] sm:$0xff]
        %v734 = vld [vmem:[%s15 + $0x20] sm:$0xff]
        %v735 = vld [vmem:[%s15 + $0x28] sm:$0xff]
        %v736 = vld [vmem:[%s15 + $0x30] sm:$0xff]
        %v737 = vld [vmem:[%s15 + $0x38] sm:$0xff]
        %v738 = vld [vmem:[%s15 + $0x40] sm:$0xff]
        %v739 = vld [vmem:[%s15 + $0x48] sm:$0xff]
        %v740 = vld [vmem:[%s15 + $0x50] sm:$0xff]
        %v741 = vld [vmem:[%s15 + $0x58] sm:$0xff]
        %v742 = vld [vmem:[%s15 + $0x60] sm:$0xff]
        %v743 = vld [vmem:[%s15 + $0x68] sm:$0xff]
        %v744 = vld [vmem:[%s15 + $0x70] sm:$0xff]
        %v745 = vld [vmem:[%s15 + $0x78] sm:$0xff]
        %v746 = vld [vmem:[%s15 + $0x80] sm:$0xff]
        %v747 = vld [vmem:[%s15 + $0x88] sm:$0xff]
        %v748 = vld [vmem:[%s15 + $0x90] sm:$0xff]
        %v749 = vld [vmem:[%s15 + $0x98] sm:$0xff]
        %v750 = vld [vmem:[%s15 + $0xa0] sm:$0xff]
        %v751 = vld [vmem:[%s15 + $0xa8] sm:$0xff]
        %v752 = vld [vmem:[%s15 + $0xb0] sm:$0xff]
        %v753 = vld [vmem:[%s15 + $0xb8] sm:$0xff]
        %v754 = vld [vmem:[%s15 + $0xc0] sm:$0xff]
        %v755 = vld [vmem:[%s15 + $0xc8] sm:$0xff]
        %v756 = vld [vmem:[%s15 + $0xd0] sm:$0xff]
        %v757 = vld [vmem:[%s15 + $0xd8] sm:$0xff]
        %v758 = vld [vmem:[%s15 + $0xe0] sm:$0xff]
        %v759 = vld [vmem:[%s15 + $0xe8] sm:$0xff]
        %v760 = vld [vmem:[%s15 + $0xf0] sm:$0xff]
        %v761 = vld [vmem:[%s15 + $0xf8] sm:$0xff]
        %v762 = vld [vmem:[%s16] sm:$0xff]
        %v763 = vld [vmem:[%s16 + $0x8] sm:$0xff]
        %v764 = vld [vmem:[%s1] sm:$0xff]
        %v765 = vld [vmem:[%s1 + $0x8] sm:$0xff]
        %v766 = vld [vmem:[%s1 + $0x10] sm:$0xff]
        %v767 = vld [vmem:[%s1 + $0x18] sm:$0xff]
        %v768 = vld [vmem:[%s2] sm:$0x1]
        %v770 = vperm.slane %v768, 0
        %vm772 = vcmask 261120
        %v774 = vsel %vm772, %v729, 0
        %776 = vmatpush.msra.mxu0 0.0
        %777 = vmatpush.msra.mxu0 0.0
        %778 = vmatpush.msra.mxu0 0.0
        %779 = vmatpush.msra.mxu0 0.0
        %780 = vmatpush.msra.mxu0 0.0
        %781 = vmatpush.msra.mxu0 0.0
        %782 = vmatpush.msra.mxu0 0.0
        %783 = vmatpush.msra.mxu0 0.0
        %784 = vmatpush.msra.mxu0 0.0
        %785 = vmatpush.msra.mxu0 0.0
        %786 = vmatpush.msra.mxu0 0.0
        %787 = vmatpush.msra.mxu0 0.0
        %788 = vmatpush.msra.mxu0 %v767
        %789 = vmatpush.msra.mxu0 %v766
        %790 = vmatpush.msra.mxu0 %v765
        %791 = vmatpush.msra.mxu0 %v764
        %792 = vmatmul.f32.gmra.mxu0 %v774
        %v793 = vpop.f32.mrf.mxu0
        %v794 = vadd.f32 %v770, %v793
        %795 = vdwg.mxu0
        %vm796 = vcmask 123904
        %v797 = vsel %vm796, %v794, -inf
        %798 = vmax.xlane.f32.xlu0 %v797
        %v799 = vpop.xlane.xlu0 %798
        %v800 = vsub.f32 %v794, %v799
        %v801 = vmul.f32 %v800, 1.442695
        %v802 = vpow.pop %v801
        %v803 = vsel %vm796, %v802, 0.0
        %804 = vadd.xlane.f32.xlu0 %v803
        %v805 = vpop.xlane.xlu0 %804
        %v806 = vrcp.pop %v805
        %v807 = vmul.f32 %v805, %v806
        %v808 = vsub.f32 1.0, %v807
        %v809 = vmul.f32 %v806, %v808
        %v810 = vadd.f32 %v806, %v809
        %vm811 = vweird.f32 %v805
        %vm812 = vweird.f32 %v806
        %vm813 = vmor %vm811, %vm812
        %v814 = vsel %vm813, %v806, %v810
        %v815 = vand.u32 2147483647, %v805
        %vm816 = vcmp.eq.f32.partialorder %v815, 8.507059e+37
        %v817 = vand.u32 %v805, 2147483648
        %v818 = vor.u32 1.1754944e-38, %v817
        %v819 = vsel %vm816, %v818, %v814
        %v820 = vmul.f32 %v802, %v819
        %v821 = vld [vmem:[%s5] sm:$0x3f]
        %v822 = vld [vmem:[%s5 + $0x8] sm:$0x3f]
        %v823 = vld [vmem:[%s5 + $0x10] sm:$0x3f]
        %v824 = vld [vmem:[%s5 + $0x18] sm:$0x3f]
        %v825 = vld [vmem:[%s5 + $0x20] sm:$0x3f]
        %v826 = vld [vmem:[%s5 + $0x28] sm:$0x3f]
        %v827 = vld [vmem:[%s5 + $0x30] sm:$0x3f]
        %v828 = vld [vmem:[%s5 + $0x38] sm:$0x3f]
        %v829 = vld [vmem:[%s5 + $0x40] sm:$0x3f]
        %v830 = vld [vmem:[%s5 + $0x48] sm:$0x3f]
        %v831 = vld [vmem:[%s5 + $0x50] sm:$0x3f]
        %v832 = vld [vmem:[%s5 + $0x58] sm:$0x3f]
        %v834 = vrot.slane %v820, 1
        %v835 = vperm.slane %v820, 0
        %v836 = vperm.slane %v834, 0
        %v839 = vmul.f32 %v821, %v835
        %v840 = vmul.f32 %v822, %v835
        %v841 = vmul.f32 %v823, %v835
        %v842 = vmul.f32 %v824, %v835
        %v843 = vmul.f32 %v825, %v835
        %v844 = vmul.f32 %v826, %v835
        %v845 = vmul.f32 %v827, %v836
        %v846 = vmul.f32 %v828, %v836
        %v847 = vmul.f32 %v829, %v836
        %v848 = vmul.f32 %v830, %v836
        %v849 = vmul.f32 %v831, %v836
        %v850 = vmul.f32 %v832, %v836
        %v851 = vld [vmem:[%s604] sm:$0xff]
        %v852 = vld [vmem:[%s604 + $0x8] sm:$0xff]
        %v853 = vld [vmem:[%s604 + $0x10] sm:$0xff]
        %v854 = vld [vmem:[%s604 + $0x18] sm:$0xff]
        %v855 = vld [vmem:[%s604 + $0x20] sm:$0xff]
        %v856 = vld [vmem:[%s604 + $0x28] sm:$0xff]
        %v857 = vld [vmem:[%s604 + $0x30] sm:$0xff]
        %v858 = vld [vmem:[%s604 + $0x38] sm:$0xff]
        %v859 = vld [vmem:[%s604 + $0x40] sm:$0xff]
        %v860 = vld [vmem:[%s604 + $0x48] sm:$0xff]
        %v861 = vld [vmem:[%s604 + $0x50] sm:$0xff]
        %v862 = vld [vmem:[%s604 + $0x58] sm:$0xff]
        %v863 = vld [vmem:[%s604 + $0x60] sm:$0xff]
        %v864 = vld [vmem:[%s604 + $0x68] sm:$0xff]
        %v865 = vld [vmem:[%s604 + $0x70] sm:$0xff]
        %v866 = vld [vmem:[%s604 + $0x78] sm:$0xff]
        %v867 = vld [vmem:[%s604 + $0x80] sm:$0xff]
        %v868 = vld [vmem:[%s604 + $0x88] sm:$0xff]
        %v869 = vld [vmem:[%s699] sm:$0x3]
        %v878 = vrot.slane %v839, 4
        %v879 = vrot.slane %v840, 4
        %v880 = vrot.slane %v841, 4
        %v881 = vrot.slane %v842, 4
        %v882 = vrot.slane %v845, 4
        %v883 = vrot.slane %v846, 4
        %v884 = vrot.slane %v847, 4
        %v885 = vrot.slane %v848, 4
        %vm886 = vcmask 1042432
        %vm887 = vcmask 1046532
        %vm888 = vmor %vm886, %vm887
        %v889 = vrot.slane %v839, 5
        %v890 = vrot.slane %v889, 4
        %v891 = vrot.slane %v878, 5
        %v892 = vsel %vm888, %v890, %v891
        %v893 = vrot.slane %v840, 5
        %v894 = vrot.slane %v893, 4
        %v895 = vrot.slane %v879, 5
        %v896 = vsel %vm888, %v894, %v895
        %v897 = vrot.slane %v841, 5
        %v898 = vrot.slane %v897, 4
        %v899 = vrot.slane %v880, 5
        %v900 = vsel %vm888, %v898, %v899
        %v901 = vrot.slane %v842, 5
        %v902 = vrot.slane %v901, 4
        %v903 = vrot.slane %v881, 5
        %v904 = vsel %vm888, %v902, %v903
        %v905 = vrot.slane %v845, 5
        %v906 = vrot.slane %v905, 4
        %v907 = vrot.slane %v882, 5
        %v908 = vsel %vm888, %v906, %v907
        %v909 = vrot.slane %v846, 5
        %v910 = vrot.slane %v909, 4
        %v911 = vrot.slane %v883, 5
        %v912 = vsel %vm888, %v910, %v911
        %v913 = vrot.slane %v847, 5
        %v914 = vrot.slane %v913, 4
        %v915 = vrot.slane %v884, 5
        %v916 = vsel %vm888, %v914, %v915
        %v917 = vrot.slane %v848, 5
        %v918 = vrot.slane %v917, 4
        %v919 = vrot.slane %v885, 5
        %v920 = vsel %vm888, %v918, %v919
        %vm921 = vcmask 1041408
        %vm922 = vcmask 1045508
        %vm923 = vmor %vm921, %vm922
        %v924 = vrot.slane %v839, 6
        %v925 = vrot.slane %v924, 4
        %v926 = vrot.slane %v878, 6
        %v927 = vsel %vm923, %v925, %v926
        %v928 = vrot.slane %v840, 6
        %v929 = vrot.slane %v928, 4
        %v930 = vrot.slane %v879, 6
        %v931 = vsel %vm923, %v929, %v930
        %v932 = vrot.slane %v841, 6
        %v933 = vrot.slane %v932, 4
        %v934 = vrot.slane %v880, 6
        %v935 = vsel %vm923, %v933, %v934
        %v936 = vrot.slane %v842, 6
        %v937 = vrot.slane %v936, 4
        %v938 = vrot.slane %v881, 6
        %v939 = vsel %vm923, %v937, %v938
        %v940 = vrot.slane %v845, 6
        %v941 = vrot.slane %v940, 4
        %v942 = vrot.slane %v882, 6
        %v943 = vsel %vm923, %v941, %v942
        %v944 = vrot.slane %v846, 6
        %v945 = vrot.slane %v944, 4
        %v946 = vrot.slane %v883, 6
        %v947 = vsel %vm923, %v945, %v946
        %v948 = vrot.slane %v847, 6
        %v949 = vrot.slane %v948, 4
        %v950 = vrot.slane %v884, 6
        %v951 = vsel %vm923, %v949, %v950
        %v952 = vrot.slane %v848, 6
        %v953 = vrot.slane %v952, 4
        %v954 = vrot.slane %v885, 6
        %v955 = vsel %vm923, %v953, %v954
        %v958 = vrot.slane %v843, 4
        %v959 = vrot.slane %v849, 4
        %v960 = vrot.slane %v843, 5
        %v961 = vrot.slane %v960, 4
        %v962 = vrot.slane %v958, 5
        %v963 = vsel %vm888, %v961, %v962
        %v964 = vrot.slane %v849, 5
        %v965 = vrot.slane %v964, 4
        %v966 = vrot.slane %v959, 5
        %v967 = vsel %vm888, %v965, %v966
        %v968 = vrot.slane %v843, 6
        %v969 = vrot.slane %v968, 4
        %v970 = vrot.slane %v958, 6
        %v971 = vsel %vm923, %v969, %v970
        %v972 = vrot.slane %v849, 6
        %v973 = vrot.slane %v972, 4
        %v974 = vrot.slane %v959, 6
        %v975 = vsel %vm923, %v973, %v974
        %v978 = vrot.slane %v844, 4
        %v979 = vrot.slane %v850, 4
        %v980 = vrot.slane %v844, 5
        %v981 = vrot.slane %v980, 4
        %v982 = vrot.slane %v978, 5
        %v983 = vsel %vm888, %v981, %v982
        %v984 = vrot.slane %v850, 5
        %v985 = vrot.slane %v984, 4
        %v986 = vrot.slane %v979, 5
        %v987 = vsel %vm888, %v985, %v986
        %v988 = vrot.slane %v844, 6
        %v989 = vrot.slane %v988, 4
        %v990 = vrot.slane %v978, 6
        %v991 = vsel %vm923, %v989, %v990
        %v992 = vrot.slane %v850, 6
        %v993 = vrot.slane %v992, 4
        %v994 = vrot.slane %v979, 6
        %v995 = vsel %vm923, %v993, %v994
        %996 = vst [vmem:[#allocation1] ss:$2 sm:$0xff] %v839
        %s997 = scalar_lea.vmem [#allocation1], 1
        %998 = vst [vmem:[%s997] ss:$2 sm:$0xff] %v840
        %s999 = scalar_lea.vmem [#allocation1], 16
        %1000 = vst [vmem:[%s999] ss:$2 sm:$0xff] %v841
        %s1001 = scalar_lea.vmem [#allocation1], 17
        %1002 = vst [vmem:[%s1001] ss:$2 sm:$0xff] %v842
        %s1003 = scalar_lea.vmem [#allocation1], 32
        %1004 = vst [vmem:[%s1003] ss:$2 sm:$0xff] %v845
        %s1005 = scalar_lea.vmem [#allocation1], 33
        %1006 = vst [vmem:[%s1005] ss:$2 sm:$0xff] %v846
        %s1007 = scalar_lea.vmem [#allocation1], 48
        %1008 = vst [vmem:[%s1007] ss:$2 sm:$0xff] %v847
        %s1009 = scalar_lea.vmem [#allocation1], 49
        %1010 = vst [vmem:[%s1009] ss:$2 sm:$0xff] %v848
        %v1011 = vld.sshfl [vmem:[#allocation1] sm:$0xff pattern:$0x75316420]
        %v1012 = vld.sshfl [vmem:[#allocation1 + $0x10] sm:$0xff pattern:$0x75316420]
        %v1013 = vld.sshfl [vmem:[#allocation1 + $0x20] sm:$0xff pattern:$0x75316420]
        %v1014 = vld.sshfl [vmem:[#allocation1 + $0x30] sm:$0xff pattern:$0x75316420]
        %1019 = vst [vmem:[#allocation1] ss:$2 sm:$0xff] %v892
        %s1020 = scalar_lea.vmem [#allocation1], 1
        %1021 = vst [vmem:[%s1020] ss:$2 sm:$0xff] %v896
        %s1022 = scalar_lea.vmem [#allocation1], 16
        %1023 = vst [vmem:[%s1022] ss:$2 sm:$0xff] %v900
        %s1024 = scalar_lea.vmem [#allocation1], 17
        %1025 = vst [vmem:[%s1024] ss:$2 sm:$0xff] %v904
        %s1026 = scalar_lea.vmem [#allocation1], 32
        %1027 = vst [vmem:[%s1026] ss:$2 sm:$0xff] %v908
        %s1028 = scalar_lea.vmem [#allocation1], 33
        %1029 = vst [vmem:[%s1028] ss:$2 sm:$0xff] %v912
        %s1030 = scalar_lea.vmem [#allocation1], 48
        %1031 = vst [vmem:[%s1030] ss:$2 sm:$0xff] %v916
        %s1032 = scalar_lea.vmem [#allocation1], 49
        %1033 = vst [vmem:[%s1032] ss:$2 sm:$0xff] %v920
        %v1034 = vld.sshfl [vmem:[#allocation1] sm:$0xff pattern:$0x75316420]
        %v1035 = vld.sshfl [vmem:[#allocation1 + $0x10] sm:$0xff pattern:$0x75316420]
        %v1036 = vld.sshfl [vmem:[#allocation1 + $0x20] sm:$0xff pattern:$0x75316420]
        %v1037 = vld.sshfl [vmem:[#allocation1 + $0x30] sm:$0xff pattern:$0x75316420]
        %1038 = vrot.lane.b32.xlu0 %v1034, 16
        %v1039 = vpop.permute.xlu0 %1038
        %1040 = vrot.lane.b32.xlu0 %v1035, 16
        %v1041 = vpop.permute.xlu0 %1040
        %1042 = vrot.lane.b32.xlu0 %v1036, 16
        %v1043 = vpop.permute.xlu0 %1042
        %1044 = vrot.lane.b32.xlu0 %v1037, 16
        %v1045 = vpop.permute.xlu0 %1044
        %1050 = vst [vmem:[#allocation1] ss:$2 sm:$0xff] %v927
        %s1051 = scalar_lea.vmem [#allocation1], 1
        %1052 = vst [vmem:[%s1051] ss:$2 sm:$0xff] %v931
        %s1053 = scalar_lea.vmem [#allocation1], 16
        %1054 = vst [vmem:[%s1053] ss:$2 sm:$0xff] %v935
        %s1055 = scalar_lea.vmem [#allocation1], 17
        %1056 = vst [vmem:[%s1055] ss:$2 sm:$0xff] %v939
        %s1057 = scalar_lea.vmem [#allocation1], 32
        %1058 = vst [vmem:[%s1057] ss:$2 sm:$0xff] %v943
        %s1059 = scalar_lea.vmem [#allocation1], 33
        %1060 = vst [vmem:[%s1059] ss:$2 sm:$0xff] %v947
        %s1061 = scalar_lea.vmem [#allocation1], 48
        %1062 = vst [vmem:[%s1061] ss:$2 sm:$0xff] %v951
        %s1063 = scalar_lea.vmem [#allocation1], 49
        %1064 = vst [vmem:[%s1063] ss:$2 sm:$0xff] %v955
        %v1065 = vld.sshfl [vmem:[#allocation1] sm:$0xff pattern:$0x75316420]
        %v1066 = vld.sshfl [vmem:[#allocation1 + $0x10] sm:$0xff pattern:$0x75316420]
        %v1067 = vld.sshfl [vmem:[#allocation1 + $0x20] sm:$0xff pattern:$0x75316420]
        %v1068 = vld.sshfl [vmem:[#allocation1 + $0x30] sm:$0xff pattern:$0x75316420]
        %1069 = vrot.lane.b32.xlu0 %v1065, 32
        %v1070 = vpop.permute.xlu0 %1069
        %1071 = vrot.lane.b32.xlu0 %v1066, 32
        %v1072 = vpop.permute.xlu0 %1071
        %1073 = vrot.lane.b32.xlu0 %v1067, 32
        %v1074 = vpop.permute.xlu0 %1073
        %1075 = vrot.lane.b32.xlu0 %v1068, 32
        %v1076 = vpop.permute.xlu0 %1075
        %1081 = vst [vmem:[#allocation1] ss:$2 sm:$0xff] %v840
        %s1082 = scalar_lea.vmem [#allocation1], 1
        %1083 = vst [vmem:[%s1082] ss:$2 sm:$0xff] %v841
        %s1084 = scalar_lea.vmem [#allocation1], 16
        %1085 = vst [vmem:[%s1084] ss:$2 sm:$0xff] %v842
        %s1086 = scalar_lea.vmem [#allocation1], 17
        %1087 = vst [vmem:[%s1086] ss:$2 sm:$0xff] %v843
        %s1088 = scalar_lea.vmem [#allocation1], 32
        %1089 = vst [vmem:[%s1088] ss:$2 sm:$0xff] %v846
        %s1090 = scalar_lea.vmem [#allocation1], 33
        %1091 = vst [vmem:[%s1090] ss:$2 sm:$0xff] %v847
        %s1092 = scalar_lea.vmem [#allocation1], 48
        %1093 = vst [vmem:[%s1092] ss:$2 sm:$0xff] %v848
        %s1094 = scalar_lea.vmem [#allocation1], 49
        %1095 = vst [vmem:[%s1094] ss:$2 sm:$0xff] %v849
        %v1096 = vld.sshfl [vmem:[#allocation1] sm:$0xff pattern:$0x75316420]
        %v1097 = vld.sshfl [vmem:[#allocation1 + $0x10] sm:$0xff pattern:$0x75316420]
        %v1098 = vld.sshfl [vmem:[#allocation1 + $0x20] sm:$0xff pattern:$0x75316420]
        %v1099 = vld.sshfl [vmem:[#allocation1 + $0x30] sm:$0xff pattern:$0x75316420]
        %1100 = vrot.lane.b32.xlu0 %v1096, 48
        %v1101 = vpop.permute.xlu0 %1100
        %1102 = vrot.lane.b32.xlu0 %v1097, 48
        %v1103 = vpop.permute.xlu0 %1102
        %1104 = vrot.lane.b32.xlu0 %v1098, 48
        %v1105 = vpop.permute.xlu0 %1104
        %1106 = vrot.lane.b32.xlu0 %v1099, 48
        %v1107 = vpop.permute.xlu0 %1106
        %1112 = vst [vmem:[#allocation1] ss:$2 sm:$0xff] %v896
        %s1113 = scalar_lea.vmem [#allocation1], 1
        %1114 = vst [vmem:[%s1113] ss:$2 sm:$0xff] %v900
        %s1115 = scalar_lea.vmem [#allocation1], 16
        %1116 = vst [vmem:[%s1115] ss:$2 sm:$0xff] %v904
        %s1117 = scalar_lea.vmem [#allocation1], 17
        %1118 = vst [vmem:[%s1117] ss:$2 sm:$0xff] %v963
        %s1119 = scalar_lea.vmem [#allocation1], 32
        %1120 = vst [vmem:[%s1119] ss:$2 sm:$0xff] %v912
        %s1121 = scalar_lea.vmem [#allocation1], 33
        %1122 = vst [vmem:[%s1121] ss:$2 sm:$0xff] %v916
        %s1123 = scalar_lea.vmem [#allocation1], 48
        %1124 = vst [vmem:[%s1123] ss:$2 sm:$0xff] %v920
        %s1125 = scalar_lea.vmem [#allocation1], 49
        %1126 = vst [vmem:[%s1125] ss:$2 sm:$0xff] %v967
        %v1127 = vld.sshfl [vmem:[#allocation1] sm:$0xff pattern:$0x75316420]
        %v1128 = vld.sshfl [vmem:[#allocation1 + $0x10] sm:$0xff pattern:$0x75316420]
        %v1129 = vld.sshfl [vmem:[#allocation1 + $0x20] sm:$0xff pattern:$0x75316420]
        %v1130 = vld.sshfl [vmem:[#allocation1 + $0x30] sm:$0xff pattern:$0x75316420]
        %1131 = vrot.lane.b32.xlu0 %v1127, 64
        %v1132 = vpop.permute.xlu0 %1131
        %1133 = vrot.lane.b32.xlu0 %v1128, 64
        %v1134 = vpop.permute.xlu0 %1133
        %1135 = vrot.lane.b32.xlu0 %v1129, 64
        %v1136 = vpop.permute.xlu0 %1135
        %1137 = vrot.lane.b32.xlu0 %v1130, 64
        %v1138 = vpop.permute.xlu0 %1137
        %1143 = vst [vmem:[#allocation1] ss:$2 sm:$0xff] %v931
        %s1144 = scalar_lea.vmem [#allocation1], 1
        %1145 = vst [vmem:[%s1144] ss:$2 sm:$0xff] %v935
        %s1146 = scalar_lea.vmem [#allocation1], 16
        %1147 = vst [vmem:[%s1146] ss:$2 sm:$0xff] %v939
        %s1148 = scalar_lea.vmem [#allocation1], 17
        %1149 = vst [vmem:[%s1148] ss:$2 sm:$0xff] %v971
        %s1150 = scalar_lea.vmem [#allocation1], 32
        %1151 = vst [vmem:[%s1150] ss:$2 sm:$0xff] %v947
        %s1152 = scalar_lea.vmem [#allocation1], 33
        %1153 = vst [vmem:[%s1152] ss:$2 sm:$0xff] %v951
        %s1154 = scalar_lea.vmem [#allocation1], 48
        %1155 = vst [vmem:[%s1154] ss:$2 sm:$0xff] %v955
        %s1156 = scalar_lea.vmem [#allocation1], 49
        %1157 = vst [vmem:[%s1156] ss:$2 sm:$0xff] %v975
        %v1158 = vld.sshfl [vmem:[#allocation1] sm:$0xff pattern:$0x75316420]
        %v1159 = vld.sshfl [vmem:[#allocation1 + $0x10] sm:$0xff pattern:$0x75316420]
        %v1160 = vld.sshfl [vmem:[#allocation1 + $0x20] sm:$0xff pattern:$0x75316420]
        %v1161 = vld.sshfl [vmem:[#allocation1 + $0x30] sm:$0xff pattern:$0x75316420]
        %1162 = vrot.lane.b32.xlu0 %v1158, 80
        %v1163 = vpop.permute.xlu0 %1162
        %1164 = vrot.lane.b32.xlu0 %v1159, 80
        %v1165 = vpop.permute.xlu0 %1164
        %1166 = vrot.lane.b32.xlu0 %v1160, 80
        %v1167 = vpop.permute.xlu0 %1166
        %1168 = vrot.lane.b32.xlu0 %v1161, 80
        %v1169 = vpop.permute.xlu0 %1168
        %1174 = vst [vmem:[#allocation1] ss:$2 sm:$0xff] %v841
        %s1175 = scalar_lea.vmem [#allocation1], 1
        %1176 = vst [vmem:[%s1175] ss:$2 sm:$0xff] %v842
        %s1177 = scalar_lea.vmem [#allocation1], 16
        %1178 = vst [vmem:[%s1177] ss:$2 sm:$0xff] %v843
        %s1179 = scalar_lea.vmem [#allocation1], 17
        %1180 = vst [vmem:[%s1179] ss:$2 sm:$0xff] %v844
        %s1181 = scalar_lea.vmem [#allocation1], 32
        %1182 = vst [vmem:[%s1181] ss:$2 sm:$0xff] %v847
        %s1183 = scalar_lea.vmem [#allocation1], 33
        %1184 = vst [vmem:[%s1183] ss:$2 sm:$0xff] %v848
        %s1185 = scalar_lea.vmem [#allocation1], 48
        %1186 = vst [vmem:[%s1185] ss:$2 sm:$0xff] %v849
        %s1187 = scalar_lea.vmem [#allocation1], 49
        %1188 = vst [vmem:[%s1187] ss:$2 sm:$0xff] %v850
        %v1189 = vld.sshfl [vmem:[#allocation1] sm:$0xff pattern:$0x75316420]
        %v1190 = vld.sshfl [vmem:[#allocation1 + $0x10] sm:$0xff pattern:$0x75316420]
        %v1191 = vld.sshfl [vmem:[#allocation1 + $0x20] sm:$0xff pattern:$0x75316420]
        %v1192 = vld.sshfl [vmem:[#allocation1 + $0x30] sm:$0xff pattern:$0x75316420]
        %1193 = vrot.lane.b32.xlu0 %v1189, 96
        %v1194 = vpop.permute.xlu0 %1193
        %1195 = vrot.lane.b32.xlu0 %v1190, 96
        %v1196 = vpop.permute.xlu0 %1195
        %1197 = vrot.lane.b32.xlu0 %v1191, 96
        %v1198 = vpop.permute.xlu0 %1197
        %1199 = vrot.lane.b32.xlu0 %v1192, 96
        %v1200 = vpop.permute.xlu0 %1199
        %1205 = vst [vmem:[#allocation1] ss:$2 sm:$0xff] %v900
        %s1206 = scalar_lea.vmem [#allocation1], 1
        %1207 = vst [vmem:[%s1206] ss:$2 sm:$0xff] %v904
        %s1208 = scalar_lea.vmem [#allocation1], 16
        %1209 = vst [vmem:[%s1208] ss:$2 sm:$0xff] %v963
        %s1210 = scalar_lea.vmem [#allocation1], 17
        %1211 = vst [vmem:[%s1210] ss:$2 sm:$0xff] %v983
        %s1212 = scalar_lea.vmem [#allocation1], 32
        %1213 = vst [vmem:[%s1212] ss:$2 sm:$0xff] %v916
        %s1214 = scalar_lea.vmem [#allocation1], 33
        %1215 = vst [vmem:[%s1214] ss:$2 sm:$0xff] %v920
        %s1216 = scalar_lea.vmem [#allocation1], 48
        %1217 = vst [vmem:[%s1216] ss:$2 sm:$0xff] %v967
        %s1218 = scalar_lea.vmem [#allocation1], 49
        %1219 = vst [vmem:[%s1218] ss:$2 sm:$0xff] %v987
        %v1220 = vld.sshfl [vmem:[#allocation1] sm:$0xff pattern:$0x75316420]
        %v1221 = vld.sshfl [vmem:[#allocation1 + $0x10] sm:$0xff pattern:$0x75316420]
        %v1222 = vld.sshfl [vmem:[#allocation1 + $0x20] sm:$0xff pattern:$0x75316420]
        %v1223 = vld.sshfl [vmem:[#allocation1 + $0x30] sm:$0xff pattern:$0x75316420]
        %1224 = vrot.lane.b32.xlu0 %v1220, 112
        %v1225 = vpop.permute.xlu0 %1224
        %1226 = vrot.lane.b32.xlu0 %v1221, 112
        %v1227 = vpop.permute.xlu0 %1226
        %1228 = vrot.lane.b32.xlu0 %v1222, 112
        %v1229 = vpop.permute.xlu0 %1228
        %1230 = vrot.lane.b32.xlu0 %v1223, 112
        %v1231 = vpop.permute.xlu0 %1230
        %1236 = vst [vmem:[#allocation1] ss:$2 sm:$0xff] %v935
        %s1237 = scalar_lea.vmem [#allocation1], 1
        %1238 = vst [vmem:[%s1237] ss:$2 sm:$0xff] %v939
        %s1239 = scalar_lea.vmem [#allocation1], 16
        %1240 = vst [vmem:[%s1239] ss:$2 sm:$0xff] %v971
        %s1241 = scalar_lea.vmem [#allocation1], 17
        %1242 = vst [vmem:[%s1241] ss:$2 sm:$0xff] %v991
        %s1243 = scalar_lea.vmem [#allocation1], 32
        %1244 = vst [vmem:[%s1243] ss:$2 sm:$0xff] %v951
        %s1245 = scalar_lea.vmem [#allocation1], 33
        %1246 = vst [vmem:[%s1245] ss:$2 sm:$0xff] %v955
        %s1247 = scalar_lea.vmem [#allocation1], 48
        %1248 = vst [vmem:[%s1247] ss:$2 sm:$0xff] %v975
        %s1249 = scalar_lea.vmem [#allocation1], 49
        %1250 = vst [vmem:[%s1249] ss:$2 sm:$0xff] %v995
        %v1251 = vld.sshfl [vmem:[#allocation1] sm:$0xff pattern:$0x75316420]
        %v1252 = vld.sshfl [vmem:[#allocation1 + $0x10] sm:$0xff pattern:$0x75316420]
        %v1253 = vld.sshfl [vmem:[#allocation1 + $0x20] sm:$0xff pattern:$0x75316420]
        %v1254 = vld.sshfl [vmem:[#allocation1 + $0x30] sm:$0xff pattern:$0x75316420]
        %vm1259 = vcmask 130048
        %v1260 = vsel %vm1259, %v1011, %v1039
        %v1261 = vsel %vm1259, %v1012, %v1041
        %v1262 = vsel %vm1259, %v1013, %v1043
        %v1263 = vsel %vm1259, %v1014, %v1045
        %v1264 = vsel %vm772, %v1260, %v1070
        %v1265 = vsel %vm772, %v1261, %v1072
        %v1266 = vsel %vm772, %v1262, %v1074
        %v1267 = vsel %vm772, %v1263, %v1076
        %vm1268 = vcmask 392192
        %v1269 = vsel %vm1268, %v1264, %v1101
        %v1270 = vsel %vm1268, %v1265, %v1103
        %v1271 = vsel %vm1268, %v1266, %v1105
        %v1272 = vsel %vm1268, %v1267, %v1107
        %vm1273 = vcmask 523264
        %v1274 = vsel %vm1273, %v1269, %v1132
        %v1275 = vsel %vm1273, %v1270, %v1134
        %v1276 = vsel %vm1273, %v1271, %v1136
        %v1277 = vsel %vm1273, %v1272, %v1138
        %vm1278 = vcmask 654336
        %v1279 = vsel %vm1278, %v1274, %v1163
        %v1280 = vsel %vm1278, %v1275, %v1165
        %v1281 = vsel %vm1278, %v1276, %v1167
        %v1282 = vsel %vm1278, %v1277, %v1169
        %vm1283 = vcmask 785408
        %v1284 = vsel %vm1283, %v1279, %v1194
        %v1285 = vsel %vm1283, %v1280, %v1196
        %v1286 = vsel %vm1283, %v1281, %v1198
        %v1287 = vsel %vm1283, %v1282, %v1200
        %vm1288 = vcmask 916480
        %v1289 = vsel %vm1288, %v1284, %v1225
        %v1290 = vsel %vm1288, %v1285, %v1227
        %v1291 = vsel %vm1288, %v1286, %v1229
        %v1292 = vsel %vm1288, %v1287, %v1231
        %v1293 = vpack.c.bf16 %v1290, %v1289
        %v1294 = vpack.c.bf16 %v1252, %v1251
        %v1295 = vpack.c.bf16 %v1292, %v1291
        %v1296 = vpack.c.bf16 %v1254, %v1253
        %v1298 = vperm.slane %v869, 0
        %v1299 = vperm.slane %v869, 1
        %v1320 = vunpack.c.l.b16 %v851
        %v1321 = vunpack.c.h.b16 %v851
        %v1322 = vunpack.c.l.b16 %v852
        %v1323 = vunpack.c.h.b16 %v852
        %v1324 = vunpack.c.l.b16 %v853
        %v1325 = vunpack.c.h.b16 %v853
        %v1326 = vunpack.c.l.b16 %v854
        %v1327 = vunpack.c.h.b16 %v854
        %v1328 = vunpack.c.l.b16 %v855
        %v1329 = vunpack.c.h.b16 %v855
        %v1330 = vunpack.c.l.b16 %v856
        %v1331 = vunpack.c.h.b16 %v856
        %v1332 = vunpack.c.l.b16 %v857
        %v1333 = vunpack.c.h.b16 %v857
        %v1334 = vunpack.c.l.b16 %v858
        %v1335 = vunpack.c.h.b16 %v858
        %v1336 = vunpack.c.l.b16 %v859
        %v1337 = vunpack.c.h.b16 %v859
        %v1338 = vunpack.c.l.b16 %v860
        %v1339 = vunpack.c.h.b16 %v860
        %v1340 = vunpack.c.l.b16 %v861
        %v1341 = vunpack.c.h.b16 %v861
        %v1342 = vunpack.c.l.b16 %v862
        %v1343 = vunpack.c.h.b16 %v862
        %v1344 = vunpack.c.l.b16 %v863
        %v1345 = vunpack.c.h.b16 %v863
        %v1346 = vunpack.c.l.b16 %v864
        %v1347 = vunpack.c.h.b16 %v864
        %v1348 = vunpack.c.l.b16 %v865
        %v1349 = vunpack.c.h.b16 %v865
        %v1350 = vunpack.c.l.b16 %v866
        %v1351 = vunpack.c.h.b16 %v866
        %v1352 = vunpack.c.l.b16 %v867
        %v1353 = vunpack.c.h.b16 %v867
        %v1354 = vunpack.c.l.b16 %v868
        %v1355 = vunpack.c.h.b16 %v868
        %v1356 = vpack.c.b16 %v1322, %v1320
        %v1357 = vpack.c.b16 %v1323, %v1321
        %v1358 = vpack.c.b16 %v1326, %v1324
        %v1359 = vpack.c.b16 %v1327, %v1325
        %v1360 = vpack.c.b16 %v1330, %v1328
        %v1361 = vpack.c.b16 %v1331, %v1329
        %v1362 = vpack.c.b16 %v1334, %v1332
        %v1363 = vpack.c.b16 %v1335, %v1333
        %v1364 = vpack.c.b16 %v1338, %v1336
        %v1365 = vpack.c.b16 %v1339, %v1337
        %v1366 = vpack.c.b16 %v1342, %v1340
        %v1367 = vpack.c.b16 %v1343, %v1341
        %v1368 = vpack.c.b16 %v1346, %v1344
        %v1369 = vpack.c.b16 %v1347, %v1345
        %v1370 = vpack.c.b16 %v1350, %v1348
        %v1371 = vpack.c.b16 %v1351, %v1349
        %v1372 = vpack.c.b16 %v1354, %v1352
        %v1373 = vpack.c.b16 %v1355, %v1353
        %v1393 = vsel %vm1259, %v1294, 0
        %v1396 = vsel %vm1259, %v1296, 0
        %1398 = vmatpush.bf16.msra.mxu0 %v1370
        %1399 = vmatpush.bf16.msra.mxu0 %v1368
        %1400 = vmatpush.bf16.msra.mxu0 %v1366
        %1401 = vmatpush.bf16.msra.mxu0 %v1364
        %1402 = vmatpush.bf16.msra.mxu0 %v1362
        %1403 = vmatpush.bf16.msra.mxu0 %v1360
        %1404 = vmatpush.bf16.msra.mxu0 %v1358
        %1405 = vmatpush.bf16.msra.mxu0 %v1356
        %1406 = vmatmul.bf16.gmra.mxu0 %v1293
        %v1407 = vpop.f32.mrf.mxu0
        %v1408 = vadd.f32 %v1298, %v1407
        %v1409 = vpop.f32.mrf.mxu0
        %v1410 = vadd.f32 %v1298, %v1409
        %1411 = vmatmul.bf16.gmra.mxu0 %v1295
        %v1412 = vpop.f32.mrf.mxu0
        %v1413 = vadd.f32 %v1298, %v1412
        %v1414 = vpop.f32.mrf.mxu0
        %v1415 = vadd.f32 %v1298, %v1414
        %1416 = vdwg.mxu0
        %1417 = vmatpush.bf16.msra.mxu0 0
        %1418 = vmatpush.bf16.msra.mxu0 0
        %1419 = vmatpush.bf16.msra.mxu0 0
        %1420 = vmatpush.bf16.msra.mxu0 0
        %1421 = vmatpush.bf16.msra.mxu0 0
        %1422 = vmatpush.bf16.msra.mxu0 0
        %1423 = vmatpush.bf16.msra.mxu0 0
        %1424 = vmatpush.bf16.msra.mxu0 %v1372
        %1425 = vmatmul.bf16.gmra.mxu0 %v1393
        %v1426 = vpop.f32.mrf.mxu0
        %v1427 = vadd.f32 %v1408, %v1426
        %v1428 = vpop.f32.mrf.mxu0
        %v1429 = vadd.f32 %v1410, %v1428
        %1430 = vmatmul.bf16.gmra.mxu0 %v1396
        %v1431 = vpop.f32.mrf.mxu0
        %v1432 = vadd.f32 %v1413, %v1431
        %v1433 = vpop.f32.mrf.mxu0
        %v1434 = vadd.f32 %v1415, %v1433
        %1435 = vdwg.mxu0
        %1436 = vmatpush.bf16.msra.mxu0 %v1371
        %1437 = vmatpush.bf16.msra.mxu0 %v1369
        %1438 = vmatpush.bf16.msra.mxu0 %v1367
        %1439 = vmatpush.bf16.msra.mxu0 %v1365
        %1440 = vmatpush.bf16.msra.mxu0 %v1363
        %1441 = vmatpush.bf16.msra.mxu0 %v1361
        %1442 = vmatpush.bf16.msra.mxu0 %v1359
        %1443 = vmatpush.bf16.msra.mxu0 %v1357
        %1444 = vmatmul.bf16.gmra.mxu0 %v1293
        %v1445 = vpop.f32.mrf.mxu0
        %v1446 = vadd.f32 %v1299, %v1445
        %v1447 = vpop.f32.mrf.mxu0
        %v1448 = vadd.f32 %v1299, %v1447
        %1449 = vmatmul.bf16.gmra.mxu0 %v1295
        %v1450 = vpop.f32.mrf.mxu0
        %v1451 = vadd.f32 %v1299, %v1450
        %v1452 = vpop.f32.mrf.mxu0
        %v1453 = vadd.f32 %v1299, %v1452
        %1454 = vdwg.mxu0
        %1455 = vmatpush.bf16.msra.mxu0 0
        %1456 = vmatpush.bf16.msra.mxu0 0
        %1457 = vmatpush.bf16.msra.mxu0 0
        %1458 = vmatpush.bf16.msra.mxu0 0
        %1459 = vmatpush.bf16.msra.mxu0 0
        %1460 = vmatpush.bf16.msra.mxu0 0
        %1461 = vmatpush.bf16.msra.mxu0 0
        %1462 = vmatpush.bf16.msra.mxu0 %v1373
        %1463 = vmatmul.bf16.gmra.mxu0 %v1393
        %v1464 = vpop.f32.mrf.mxu0
        %v1465 = vadd.f32 %v1446, %v1464
        %v1466 = vpop.f32.mrf.mxu0
        %v1467 = vadd.f32 %v1448, %v1466
        %1468 = vmatmul.bf16.gmra.mxu0 %v1396
        %v1469 = vpop.f32.mrf.mxu0
        %v1470 = vadd.f32 %v1451, %v1469
        %v1471 = vpop.f32.mrf.mxu0
        %v1472 = vadd.f32 %v1453, %v1471
        %1473 = vdwg.mxu0
        %v1474 = vld [vmem:[%s704] sm:$0x3]
        %v1475 = vld [vmem:[%s709] sm:$0x3]
        %v1476 = vadd.f32 %v1427, %v1429
        %v1477 = vrot.slane %v1476, 4
        %v1478 = vadd.f32 %v1476, %v1477
        %v1479 = vrot.slane %v1478, 2
        %v1480 = vadd.f32 %v1478, %v1479
        %v1481 = vrot.slane %v1480, 1
        %v1482 = vadd.f32 %v1480, %v1481
        %v1483 = vadd.f32 %v1465, %v1467
        %v1484 = vrot.slane %v1483, 4
        %v1485 = vadd.f32 %v1483, %v1484
        %v1486 = vrot.slane %v1485, 2
        %v1487 = vadd.f32 %v1485, %v1486
        %v1488 = vrot.slane %v1487, 1
        %v1489 = vadd.f32 %v1487, %v1488
        %v1490 = vadd.f32 %v1432, %v1434
        %v1491 = vrot.slane %v1490, 4
        %v1492 = vadd.f32 %v1490, %v1491
        %v1493 = vrot.slane %v1492, 2
        %v1494 = vadd.f32 %v1492, %v1493
        %v1495 = vrot.slane %v1494, 1
        %v1496 = vadd.f32 %v1494, %v1495
        %v1497 = vadd.f32 %v1470, %v1472
        %v1498 = vrot.slane %v1497, 4
        %v1499 = vadd.f32 %v1497, %v1498
        %v1500 = vrot.slane %v1499, 2
        %v1501 = vadd.f32 %v1499, %v1500
        %v1502 = vrot.slane %v1501, 1
        %v1503 = vadd.f32 %v1501, %v1502
        %vm1508 = vcmask 1041409
        %v1509 = vsel %vm1508, %v1496, %v1482
        %v1510 = vsel %vm1508, %v1503, %v1489
        %1513 = vmatpush.msra.mxu0 %v745
        %1514 = vmatpush.msra.mxu0 %v744
        %1515 = vmatpush.msra.mxu0 %v743
        %1516 = vmatpush.msra.mxu0 %v742
        %1517 = vmatpush.msra.mxu0 %v741
        %1518 = vmatpush.msra.mxu0 %v740
        %1519 = vmatpush.msra.mxu0 %v739
        %1520 = vmatpush.msra.mxu0 %v738
        %1521 = vmatpush.msra.mxu0 %v737
        %1522 = vmatpush.msra.mxu0 %v736
        %1523 = vmatpush.msra.mxu0 %v735
        %1524 = vmatpush.msra.mxu0 %v734
        %1525 = vmatpush.msra.mxu0 %v733
        %1526 = vmatpush.msra.mxu0 %v732
        %1527 = vmatpush.msra.mxu0 %v731
        %1528 = vmatpush.msra.mxu0 %v730
        %1529 = vmatmul.f32.gmra.mxu0 %v1509
        %v1530 = vpop.f32.mrf.mxu0
        %v1531 = vadd.f32 0.0, %v1530
        %1532 = vdwg.mxu0
        %1533 = vmatpush.msra.mxu0 %v761
        %1534 = vmatpush.msra.mxu0 %v760
        %1535 = vmatpush.msra.mxu0 %v759
        %1536 = vmatpush.msra.mxu0 %v758
        %1537 = vmatpush.msra.mxu0 %v757
        %1538 = vmatpush.msra.mxu0 %v756
        %1539 = vmatpush.msra.mxu0 %v755
        %1540 = vmatpush.msra.mxu0 %v754
        %1541 = vmatpush.msra.mxu0 %v753
        %1542 = vmatpush.msra.mxu0 %v752
        %1543 = vmatpush.msra.mxu0 %v751
        %1544 = vmatpush.msra.mxu0 %v750
        %1545 = vmatpush.msra.mxu0 %v749
        %1546 = vmatpush.msra.mxu0 %v748
        %1547 = vmatpush.msra.mxu0 %v747
        %1548 = vmatpush.msra.mxu0 %v746
        %1549 = vmatmul.f32.gmra.mxu0 %v1510
        %v1550 = vpop.f32.mrf.mxu0
        %v1551 = vadd.f32 %v1531, %v1550
        %1552 = vdwg.mxu0
        %v1553 = vrcp.pop 512.0
        %v1554 = vmul.f32 512.0, %v1553
        %v1555 = vsub.f32 1.0, %v1554
        %v1556 = vmul.f32 %v1553, %v1555
        %v1557 = vadd.f32 %v1553, %v1556
        %vm1558 = vweird.f32 %v1553
        %v1559 = vsel %vm1558, %v1553, %v1557
        %v1560 = vmul.f32 %v1551, %v1559
        %vm1561 = vcmask 64512
        %v1563 = vsel %vm1561, %v1560, 0
        %1565 = vmatpush.msra.mxu0 0.0
        %1566 = vmatpush.msra.mxu0 0.0
        %1567 = vmatpush.msra.mxu0 0.0
        %1568 = vmatpush.msra.mxu0 0.0
        %1569 = vmatpush.msra.mxu0 0.0
        %1570 = vmatpush.msra.mxu0 0.0
        %1571 = vmatpush.msra.mxu0 0.0
        %1572 = vmatpush.msra.mxu0 0.0
        %1573 = vmatpush.msra.mxu0 0.0
        %1574 = vmatpush.msra.mxu0 0.0
        %1575 = vmatpush.msra.mxu0 0.0
        %1576 = vmatpush.msra.mxu0 0.0
        %1577 = vmatpush.msra.mxu0 0.0
        %1578 = vmatpush.msra.mxu0 0.0
        %1579 = vmatpush.msra.mxu0 0.0
        %1580 = vmatpush.msra.mxu0 %v762
        %1581 = vmatmul.f32.gmra.mxu0 %v1563
        %v1582 = vpop.f32.mrf.mxu0
        %v1583 = vadd.f32 0.0, %v1582
        %1584 = vdwg.mxu0
        %1585 = vmatpush.msra.mxu0 0.0
        %1586 = vmatpush.msra.mxu0 0.0
        %1587 = vmatpush.msra.mxu0 0.0
        %1588 = vmatpush.msra.mxu0 0.0
        %1589 = vmatpush.msra.mxu0 0.0
        %1590 = vmatpush.msra.mxu0 0.0
        %1591 = vmatpush.msra.mxu0 0.0
        %1592 = vmatpush.msra.mxu0 0.0
        %1593 = vmatpush.msra.mxu0 0.0
        %1594 = vmatpush.msra.mxu0 0.0
        %1595 = vmatpush.msra.mxu0 0.0
        %1596 = vmatpush.msra.mxu0 0.0
        %1597 = vmatpush.msra.mxu0 0.0
        %1598 = vmatpush.msra.mxu0 0.0
        %1599 = vmatpush.msra.mxu0 0.0
        %1600 = vmatpush.msra.mxu0 %v763
        %1601 = vmatmul.f32.gmra.mxu0 %v1563
        %v1602 = vpop.f32.mrf.mxu0
        %v1603 = vadd.f32 0.0, %v1602
        %1604 = vdwg.mxu0
        %v1607 = vrot.slane %v1603, 7
        %vm1608 = vcmask 1040384
        %v1609 = vsel %vm1608, %v1583, %v1607
        %v1610 = vsel %vm1508, %v1583, %v1607
        %v1611 = vrot.slane %v1610, 1
        %v1612 = vperm.slane %v1609, 0
        %v1613 = vperm.slane %v1609, 1
        %v1614 = vperm.slane %v1611, 0
        %v1615 = vperm.slane %v1611, 1
        %v1620 = vsub.f32 %v1427, %v1612
        %v1621 = vsub.f32 %v1465, %v1613
        %v1622 = vsub.f32 %v1429, %v1612
        %v1623 = vsub.f32 %v1467, %v1613
        %v1624 = vsub.f32 %v1432, %v1614
        %v1625 = vsub.f32 %v1470, %v1615
        %v1626 = vsub.f32 %v1434, %v1614
        %v1627 = vsub.f32 %v1472, %v1615
        %v1628 = vmul.f32 %v1620, %v1620
        %v1629 = vmul.f32 %v1621, %v1621
        %v1630 = vmul.f32 %v1622, %v1622
        %v1631 = vmul.f32 %v1623, %v1623
        %v1632 = vmul.f32 %v1624, %v1624
        %v1633 = vmul.f32 %v1625, %v1625
        %v1634 = vmul.f32 %v1626, %v1626
        %v1635 = vmul.f32 %v1627, %v1627
        %v1636 = vadd.f32 %v1628, %v1630
        %v1637 = vrot.slane %v1636, 4
        %v1638 = vadd.f32 %v1636, %v1637
        %v1639 = vrot.slane %v1638, 2
        %v1640 = vadd.f32 %v1638, %v1639
        %v1641 = vrot.slane %v1640, 1
        %v1642 = vadd.f32 %v1640, %v1641
        %v1643 = vadd.f32 %v1629, %v1631
        %v1644 = vrot.slane %v1643, 4
        %v1645 = vadd.f32 %v1643, %v1644
        %v1646 = vrot.slane %v1645, 2
        %v1647 = vadd.f32 %v1645, %v1646
        %v1648 = vrot.slane %v1647, 1
        %v1649 = vadd.f32 %v1647, %v1648
        %v1650 = vadd.f32 %v1632, %v1634
        %v1651 = vrot.slane %v1650, 4
        %v1652 = vadd.f32 %v1650, %v1651
        %v1653 = vrot.slane %v1652, 2
        %v1654 = vadd.f32 %v1652, %v1653
        %v1655 = vrot.slane %v1654, 1
        %v1656 = vadd.f32 %v1654, %v1655
        %v1657 = vadd.f32 %v1633, %v1635
        %v1658 = vrot.slane %v1657, 4
        %v1659 = vadd.f32 %v1657, %v1658
        %v1660 = vrot.slane %v1659, 2
        %v1661 = vadd.f32 %v1659, %v1660
        %v1662 = vrot.slane %v1661, 1
        %v1663 = vadd.f32 %v1661, %v1662
        %v1668 = vsel %vm1508, %v1656, %v1642
        %v1669 = vsel %vm1508, %v1663, %v1649
        %1672 = vmatpush.msra.mxu0 %v745
        %1673 = vmatpush.msra.mxu0 %v744
        %1674 = vmatpush.msra.mxu0 %v743
        %1675 = vmatpush.msra.mxu0 %v742
        %1676 = vmatpush.msra.mxu0 %v741
        %1677 = vmatpush.msra.mxu0 %v740
        %1678 = vmatpush.msra.mxu0 %v739
        %1679 = vmatpush.msra.mxu0 %v738
        %1680 = vmatpush.msra.mxu0 %v737
        %1681 = vmatpush.msra.mxu0 %v736
        %1682 = vmatpush.msra.mxu0 %v735
        %1683 = vmatpush.msra.mxu0 %v734
        %1684 = vmatpush.msra.mxu0 %v733
        %1685 = vmatpush.msra.mxu0 %v732
        %1686 = vmatpush.msra.mxu0 %v731
        %1687 = vmatpush.msra.mxu0 %v730
        %1688 = vmatmul.f32.gmra.mxu0 %v1668
        %v1689 = vpop.f32.mrf.mxu0
        %v1690 = vadd.f32 0.0, %v1689
        %1691 = vdwg.mxu0
        %1692 = vmatpush.msra.mxu0 %v761
        %1693 = vmatpush.msra.mxu0 %v760
        %1694 = vmatpush.msra.mxu0 %v759
        %1695 = vmatpush.msra.mxu0 %v758
        %1696 = vmatpush.msra.mxu0 %v757
        %1697 = vmatpush.msra.mxu0 %v756
        %1698 = vmatpush.msra.mxu0 %v755
        %1699 = vmatpush.msra.mxu0 %v754
        %1700 = vmatpush.msra.mxu0 %v753
        %1701 = vmatpush.msra.mxu0 %v752
        %1702 = vmatpush.msra.mxu0 %v751
        %1703 = vmatpush.msra.mxu0 %v750
        %1704 = vmatpush.msra.mxu0 %v749
        %1705 = vmatpush.msra.mxu0 %v748
        %1706 = vmatpush.msra.mxu0 %v747
        %1707 = vmatpush.msra.mxu0 %v746
        %1708 = vmatmul.f32.gmra.mxu0 %v1669
        %v1709 = vpop.f32.mrf.mxu0
        %v1710 = vadd.f32 %v1690, %v1709
        %1711 = vdwg.mxu0
        %v1712 = vmul.f32 %v1710, %v1559
        %v1713 = vadd.f32 %v1712, 1e-05
        %v1714 = vrsqrt.pop %v1713
        %v1715 = vmul.f32 %v1714, %v1713
        %v1716 = vmul.f32 %v1715, %v1714
        %v1717 = vmul.f32 0.5, %v1716
        %v1718 = vsub.f32 1.5, %v1717
        %v1719 = vmul.f32 %v1714, %v1718
        %vm1720 = vweird.f32 %v1713
        %vm1721 = vweird.f32 %v1714
        %vm1722 = vmor %vm1720, %vm1721
        %v1723 = vsel %vm1722, %v1714, %v1719
        %v1725 = vsel %vm1561, %v1723, 0
        %1727 = vmatpush.msra.mxu0 0.0
        %1728 = vmatpush.msra.mxu0 0.0
        %1729 = vmatpush.msra.mxu0 0.0
        %1730 = vmatpush.msra.mxu0 0.0
        %1731 = vmatpush.msra.mxu0 0.0
        %1732 = vmatpush.msra.mxu0 0.0
        %1733 = vmatpush.msra.mxu0 0.0
        %1734 = vmatpush.msra.mxu0 0.0
        %1735 = vmatpush.msra.mxu0 0.0
        %1736 = vmatpush.msra.mxu0 0.0
        %1737 = vmatpush.msra.mxu0 0.0
        %1738 = vmatpush.msra.mxu0 0.0
        %1739 = vmatpush.msra.mxu0 0.0
        %1740 = vmatpush.msra.mxu0 0.0
        %1741 = vmatpush.msra.mxu0 0.0
        %1742 = vmatpush.msra.mxu0 %v762
        %1743 = vmatmul.f32.gmra.mxu0 %v1725
        %v1744 = vpop.f32.mrf.mxu0
        %v1745 = vadd.f32 0.0, %v1744
        %1746 = vdwg.mxu0
        %1747 = vmatpush.msra.mxu0 0.0
        %1748 = vmatpush.msra.mxu0 0.0
        %1749 = vmatpush.msra.mxu0 0.0
        %1750 = vmatpush.msra.mxu0 0.0
        %1751 = vmatpush.msra.mxu0 0.0
        %1752 = vmatpush.msra.mxu0 0.0
        %1753 = vmatpush.msra.mxu0 0.0
        %1754 = vmatpush.msra.mxu0 0.0
        %1755 = vmatpush.msra.mxu0 0.0
        %1756 = vmatpush.msra.mxu0 0.0
        %1757 = vmatpush.msra.mxu0 0.0
        %1758 = vmatpush.msra.mxu0 0.0
        %1759 = vmatpush.msra.mxu0 0.0
        %1760 = vmatpush.msra.mxu0 0.0
        %1761 = vmatpush.msra.mxu0 0.0
        %1762 = vmatpush.msra.mxu0 %v763
        %1763 = vmatmul.f32.gmra.mxu0 %v1725
        %v1764 = vpop.f32.mrf.mxu0
        %v1765 = vadd.f32 0.0, %v1764
        %1766 = vdwg.mxu0
        %v1769 = vrot.slane %v1765, 7
        %v1770 = vsel %vm1608, %v1745, %v1769
        %v1771 = vsel %vm1508, %v1745, %v1769
        %v1772 = vrot.slane %v1771, 1
        %v1773 = vperm.slane %v1770, 0
        %v1774 = vperm.slane %v1770, 1
        %v1775 = vperm.slane %v1772, 0
        %v1776 = vperm.slane %v1772, 1
        %v1781 = vmul.f32 %v1620, %v1773
        %v1782 = vmul.f32 %v1621, %v1774
        %v1783 = vmul.f32 %v1622, %v1773
        %v1784 = vmul.f32 %v1623, %v1774
        %v1785 = vmul.f32 %v1624, %v1775
        %v1786 = vmul.f32 %v1625, %v1776
        %v1787 = vmul.f32 %v1626, %v1775
        %v1788 = vmul.f32 %v1627, %v1776
        %v1790 = vperm.slane %v1474, 0
        %v1791 = vperm.slane %v1474, 1
        %v1794 = vmul.f32 %v1781, %v1790
        %v1795 = vmul.f32 %v1782, %v1791
        %v1796 = vmul.f32 %v1783, %v1790
        %v1797 = vmul.f32 %v1784, %v1791
        %v1798 = vmul.f32 %v1785, %v1790
        %v1799 = vmul.f32 %v1786, %v1791
        %v1800 = vmul.f32 %v1787, %v1790
        %v1801 = vmul.f32 %v1788, %v1791
        %v1803 = vperm.slane %v1475, 0
        %v1804 = vperm.slane %v1475, 1
        %v1807 = vadd.f32 %v1794, %v1803
        %v1808 = vadd.f32 %v1795, %v1804
        %v1809 = vadd.f32 %v1796, %v1803
        %v1810 = vadd.f32 %v1797, %v1804
        %v1811 = vadd.f32 %v1798, %v1803
        %v1812 = vadd.f32 %v1799, %v1804
        %v1813 = vadd.f32 %v1800, %v1803
        %v1814 = vadd.f32 %v1801, %v1804
        %v1815 = vmax.f32 %v1807, 0.0
        %v1816 = vmax.f32 %v1808, 0.0
        %v1817 = vmax.f32 %v1809, 0.0
        %v1818 = vmax.f32 %v1810, 0.0
        %v1819 = vmax.f32 %v1811, 0.0
        %v1820 = vmax.f32 %v1812, 0.0
        %v1821 = vmax.f32 %v1813, 0.0
        %v1822 = vmax.f32 %v1814, 0.0
        %v1823 = vld [vmem:[%s3] sm:$0xff]
        %v1824 = vld [vmem:[%s3 + $0x8] sm:$0xff]
        %v1825 = vld [vmem:[%s3 + $0x10] sm:$0xff]
        %v1826 = vld [vmem:[%s3 + $0x18] sm:$0xff]
        %v1827 = vld [vmem:[%s4] sm:$0x1]
        %v1829 = vperm.slane %v1827, 0
        %1831 = vmatpush.msra.mxu0 0.0
        %1832 = vmatpush.msra.mxu0 0.0
        %1833 = vmatpush.msra.mxu0 0.0
        %1834 = vmatpush.msra.mxu0 0.0
        %1835 = vmatpush.msra.mxu0 0.0
        %1836 = vmatpush.msra.mxu0 0.0
        %1837 = vmatpush.msra.mxu0 0.0
        %1838 = vmatpush.msra.mxu0 0.0
        %1839 = vmatpush.msra.mxu0 0.0
        %1840 = vmatpush.msra.mxu0 0.0
        %1841 = vmatpush.msra.mxu0 0.0
        %1842 = vmatpush.msra.mxu0 0.0
        %1843 = vmatpush.msra.mxu0 %v1826
        %1844 = vmatpush.msra.mxu0 %v1825
        %1845 = vmatpush.msra.mxu0 %v1824
        %1846 = vmatpush.msra.mxu0 %v1823
        %1847 = vmatmul.f32.gmra.mxu0 %v774
        %v1848 = vpop.f32.mrf.mxu0
        %v1849 = vadd.f32 %v1829, %v1848
        %1850 = vdwg.mxu0
        %v1851 = vsel %vm796, %v1849, -inf
        %1852 = vmax.xlane.f32.xlu0 %v1851
        %v1853 = vpop.xlane.xlu0 %1852
        %v1854 = vsub.f32 %v1849, %v1853
        %v1855 = vmul.f32 %v1854, 1.442695
        %v1856 = vpow.pop %v1855
        %v1857 = vsel %vm796, %v1856, 0.0
        %1858 = vadd.xlane.f32.xlu0 %v1857
        %v1859 = vpop.xlane.xlu0 %1858
        %v1860 = vrcp.pop %v1859
        %v1861 = vmul.f32 %v1859, %v1860
        %v1862 = vsub.f32 1.0, %v1861
        %v1863 = vmul.f32 %v1860, %v1862
        %v1864 = vadd.f32 %v1860, %v1863
        %vm1865 = vweird.f32 %v1859
        %vm1866 = vweird.f32 %v1860
        %vm1867 = vmor %vm1865, %vm1866
        %v1868 = vsel %vm1867, %v1860, %v1864
        %v1869 = vand.u32 2147483647, %v1859
        %vm1870 = vcmp.eq.f32.partialorder %v1869, 8.507059e+37
        %v1871 = vand.u32 %v1859, 2147483648
        %v1872 = vor.u32 1.1754944e-38, %v1871
        %v1873 = vsel %vm1870, %v1872, %v1868
        %v1874 = vmul.f32 %v1856, %v1873
        %v1875 = vld [vmem:[%s6] sm:$0x3f]
        %v1876 = vld [vmem:[%s6 + $0x8] sm:$0x3f]
        %v1877 = vld [vmem:[%s6 + $0x10] sm:$0x3f]
        %v1878 = vld [vmem:[%s6 + $0x18] sm:$0x3f]
        %v1879 = vld [vmem:[%s6 + $0x20] sm:$0x3f]
        %v1880 = vld [vmem:[%s6 + $0x28] sm:$0x3f]
        %v1881 = vld [vmem:[%s6 + $0x30] sm:$0x3f]
        %v1882 = vld [vmem:[%s6 + $0x38] sm:$0x3f]
        %v1883 = vld [vmem:[%s6 + $0x40] sm:$0x3f]
        %v1884 = vld [vmem:[%s6 + $0x48] sm:$0x3f]
        %v1885 = vld [vmem:[%s6 + $0x50] sm:$0x3f]
        %v1886 = vld [vmem:[%s6 + $0x58] sm:$0x3f]
        %v1888 = vrot.slane %v1874, 1
        %v1889 = vperm.slane %v1874, 0
        %v1890 = vperm.slane %v1888, 0
        %v1893 = vmul.f32 %v1875, %v1889
        %v1894 = vmul.f32 %v1876, %v1889
        %v1895 = vmul.f32 %v1877, %v1889
        %v1896 = vmul.f32 %v1878, %v1889
        %v1897 = vmul.f32 %v1879, %v1889
        %v1898 = vmul.f32 %v1880, %v1889
        %v1899 = vmul.f32 %v1881, %v1890
        %v1900 = vmul.f32 %v1882, %v1890
        %v1901 = vmul.f32 %v1883, %v1890
        %v1902 = vmul.f32 %v1884, %v1890
        %v1903 = vmul.f32 %v1885, %v1890
        %v1904 = vmul.f32 %v1886, %v1890
        %v1905 = vld [vmem:[%s614] sm:$0xff]
        %v1906 = vld [vmem:[%s614 + $0x8] sm:$0xff]
        %v1907 = vld [vmem:[%s614 + $0x10] sm:$0xff]
        %v1908 = vld [vmem:[%s614 + $0x18] sm:$0xff]
        %v1909 = vld [vmem:[%s614 + $0x20] sm:$0xff]
        %v1910 = vld [vmem:[%s614 + $0x28] sm:$0xff]
        %v1911 = vld [vmem:[%s614 + $0x30] sm:$0xff]
        %v1912 = vld [vmem:[%s614 + $0x38] sm:$0xff]
        %v1913 = vld [vmem:[%s614 + $0x40] sm:$0xff]
        %v1914 = vld [vmem:[%s614 + $0x48] sm:$0xff]
        %v1915 = vld [vmem:[%s614 + $0x50] sm:$0xff]
        %v1916 = vld [vmem:[%s614 + $0x58] sm:$0xff]
        %v1917 = vld [vmem:[%s614 + $0x60] sm:$0xff]
        %v1918 = vld [vmem:[%s614 + $0x68] sm:$0xff]
        %v1919 = vld [vmem:[%s614 + $0x70] sm:$0xff]
        %v1920 = vld [vmem:[%s614 + $0x78] sm:$0xff]
        %v1921 = vld [vmem:[%s614 + $0x80] sm:$0xff]
        %v1922 = vld [vmem:[%s614 + $0x88] sm:$0xff]
        %v1923 = vld [vmem:[%s715] sm:$0x3]
        %v1932 = vrot.slane %v1893, 4
        %v1933 = vrot.slane %v1894, 4
        %v1934 = vrot.slane %v1895, 4
        %v1935 = vrot.slane %v1896, 4
        %v1936 = vrot.slane %v1899, 4
        %v1937 = vrot.slane %v1900, 4
        %v1938 = vrot.slane %v1901, 4
        %v1939 = vrot.slane %v1902, 4
        %v1940 = vrot.slane %v1893, 5
        %v1941 = vrot.slane %v1940, 4
        %v1942 = vrot.slane %v1932, 5
        %v1943 = vsel %vm888, %v1941, %v1942
        %v1944 = vrot.slane %v1894, 5
        %v1945 = vrot.slane %v1944, 4
        %v1946 = vrot.slane %v1933, 5
        %v1947 = vsel %vm888, %v1945, %v1946
        %v1948 = vrot.slane %v1895, 5
        %v1949 = vrot.slane %v1948, 4
        %v1950 = vrot.slane %v1934, 5
        %v1951 = vsel %vm888, %v1949, %v1950
        %v1952 = vrot.slane %v1896, 5
        %v1953 = vrot.slane %v1952, 4
        %v1954 = vrot.slane %v1935, 5
        %v1955 = vsel %vm888, %v1953, %v1954
        %v1956 = vrot.slane %v1899, 5
        %v1957 = vrot.slane %v1956, 4
        %v1958 = vrot.slane %v1936, 5
        %v1959 = vsel %vm888, %v1957, %v1958
        %v1960 = vrot.slane %v1900, 5
        %v1961 = vrot.slane %v1960, 4
        %v1962 = vrot.slane %v1937, 5
        %v1963 = vsel %vm888, %v1961, %v1962
        %v1964 = vrot.slane %v1901, 5
        %v1965 = vrot.slane %v1964, 4
        %v1966 = vrot.slane %v1938, 5
        %v1967 = vsel %vm888, %v1965, %v1966
        %v1968 = vrot.slane %v1902, 5
        %v1969 = vrot.slane %v1968, 4
        %v1970 = vrot.slane %v1939, 5
        %v1971 = vsel %vm888, %v1969, %v1970
        %v1972 = vrot.slane %v1893, 6
        %v1973 = vrot.slane %v1972, 4
        %v1974 = vrot.slane %v1932, 6
        %v1975 = vsel %vm923, %v1973, %v1974
        %v1976 = vrot.slane %v1894, 6
        %v1977 = vrot.slane %v1976, 4
        %v1978 = vrot.slane %v1933, 6
        %v1979 = vsel %vm923, %v1977, %v1978
        %v1980 = vrot.slane %v1895, 6
        %v1981 = vrot.slane %v1980, 4
        %v1982 = vrot.slane %v1934, 6
        %v1983 = vsel %vm923, %v1981, %v1982
        %v1984 = vrot.slane %v1896, 6
        %v1985 = vrot.slane %v1984, 4
        %v1986 = vrot.slane %v1935, 6
        %v1987 = vsel %vm923, %v1985, %v1986
        %v1988 = vrot.slane %v1899, 6
        %v1989 = vrot.slane %v1988, 4
        %v1990 = vrot.slane %v1936, 6
        %v1991 = vsel %vm923, %v1989, %v1990
        %v1992 = vrot.slane %v1900, 6
        %v1993 = vrot.slane %v1992, 4
        %v1994 = vrot.slane %v1937, 6
        %v1995 = vsel %vm923, %v1993, %v1994
        %v1996 = vrot.slane %v1901, 6
        %v1997 = vrot.slane %v1996, 4
        %v1998 = vrot.slane %v1938, 6
        %v1999 = vsel %vm923, %v1997, %v1998
        %v2000 = vrot.slane %v1902, 6
        %v2001 = vrot.slane %v2000, 4
        %v2002 = vrot.slane %v1939, 6
        %v2003 = vsel %vm923, %v2001, %v2002
        %v2006 = vrot.slane %v1897, 4
        %v2007 = vrot.slane %v1903, 4
        %v2008 = vrot.slane %v1897, 5
        %v2009 = vrot.slane %v2008, 4
        %v2010 = vrot.slane %v2006, 5
        %v2011 = vsel %vm888, %v2009, %v2010
        %v2012 = vrot.slane %v1903, 5
        %v2013 = vrot.slane %v2012, 4
        %v2014 = vrot.slane %v2007, 5
        %v2015 = vsel %vm888, %v2013, %v2014
        %v2016 = vrot.slane %v1897, 6
        %v2017 = vrot.slane %v2016, 4
        %v2018 = vrot.slane %v2006, 6
        %v2019 = vsel %vm923, %v2017, %v2018
        %v2020 = vrot.slane %v1903, 6
        %v2021 = vrot.slane %v2020, 4
        %v2022 = vrot.slane %v2007, 6
        %v2023 = vsel %vm923, %v2021, %v2022
        %v2026 = vrot.slane %v1898, 4
        %v2027 = vrot.slane %v1904, 4
        %v2028 = vrot.slane %v1898, 5
        %v2029 = vrot.slane %v2028, 4
        %v2030 = vrot.slane %v2026, 5
        %v2031 = vsel %vm888, %v2029, %v2030
        %v2032 = vrot.slane %v1904, 5
        %v2033 = vrot.slane %v2032, 4
        %v2034 = vrot.slane %v2027, 5
        %v2035 = vsel %vm888, %v2033, %v2034
        %v2036 = vrot.slane %v1898, 6
        %v2037 = vrot.slane %v2036, 4
        %v2038 = vrot.slane %v2026, 6
        %v2039 = vsel %vm923, %v2037, %v2038
        %v2040 = vrot.slane %v1904, 6
        %v2041 = vrot.slane %v2040, 4
        %v2042 = vrot.slane %v2027, 6
        %v2043 = vsel %vm923, %v2041, %v2042
        %2044 = vst [vmem:[#allocation1] ss:$2 sm:$0xff] %v1893
        %s2045 = scalar_lea.vmem [#allocation1], 1
        %2046 = vst [vmem:[%s2045] ss:$2 sm:$0xff] %v1894
        %s2047 = scalar_lea.vmem [#allocation1], 16
        %2048 = vst [vmem:[%s2047] ss:$2 sm:$0xff] %v1895
        %s2049 = scalar_lea.vmem [#allocation1], 17
        %2050 = vst [vmem:[%s2049] ss:$2 sm:$0xff] %v1896
        %s2051 = scalar_lea.vmem [#allocation1], 32
        %2052 = vst [vmem:[%s2051] ss:$2 sm:$0xff] %v1899
        %s2053 = scalar_lea.vmem [#allocation1], 33
        %2054 = vst [vmem:[%s2053] ss:$2 sm:$0xff] %v1900
        %s2055 = scalar_lea.vmem [#allocation1], 48
        %2056 = vst [vmem:[%s2055] ss:$2 sm:$0xff] %v1901
        %s2057 = scalar_lea.vmem [#allocation1], 49
        %2058 = vst [vmem:[%s2057] ss:$2 sm:$0xff] %v1902
        %v2059 = vld.sshfl [vmem:[#allocation1] sm:$0xff pattern:$0x75316420]
        %v2060 = vld.sshfl [vmem:[#allocation1 + $0x10] sm:$0xff pattern:$0x75316420]
        %v2061 = vld.sshfl [vmem:[#allocation1 + $0x20] sm:$0xff pattern:$0x75316420]
        %v2062 = vld.sshfl [vmem:[#allocation1 + $0x30] sm:$0xff pattern:$0x75316420]
        %2067 = vst [vmem:[#allocation1] ss:$2 sm:$0xff] %v1943
        %s2068 = scalar_lea.vmem [#allocation1], 1
        %2069 = vst [vmem:[%s2068] ss:$2 sm:$0xff] %v1947
        %s2070 = scalar_lea.vmem [#allocation1], 16
        %2071 = vst [vmem:[%s2070] ss:$2 sm:$0xff] %v1951
        %s2072 = scalar_lea.vmem [#allocation1], 17
        %2073 = vst [vmem:[%s2072] ss:$2 sm:$0xff] %v1955
        %s2074 = scalar_lea.vmem [#allocation1], 32
        %2075 = vst [vmem:[%s2074] ss:$2 sm:$0xff] %v1959
        %s2076 = scalar_lea.vmem [#allocation1], 33
        %2077 = vst [vmem:[%s2076] ss:$2 sm:$0xff] %v1963
        %s2078 = scalar_lea.vmem [#allocation1], 48
        %2079 = vst [vmem:[%s2078] ss:$2 sm:$0xff] %v1967
        %s2080 = scalar_lea.vmem [#allocation1], 49
        %2081 = vst [vmem:[%s2080] ss:$2 sm:$0xff] %v1971
        %v2082 = vld.sshfl [vmem:[#allocation1] sm:$0xff pattern:$0x75316420]
        %v2083 = vld.sshfl [vmem:[#allocation1 + $0x10] sm:$0xff pattern:$0x75316420]
        %v2084 = vld.sshfl [vmem:[#allocation1 + $0x20] sm:$0xff pattern:$0x75316420]
        %v2085 = vld.sshfl [vmem:[#allocation1 + $0x30] sm:$0xff pattern:$0x75316420]
        %2086 = vrot.lane.b32.xlu0 %v2082, 16
        %v2087 = vpop.permute.xlu0 %2086
        %2088 = vrot.lane.b32.xlu0 %v2083, 16
        %v2089 = vpop.permute.xlu0 %2088
        %2090 = vrot.lane.b32.xlu0 %v2084, 16
        %v2091 = vpop.permute.xlu0 %2090
        %2092 = vrot.lane.b32.xlu0 %v2085, 16
        %v2093 = vpop.permute.xlu0 %2092
        %2098 = vst [vmem:[#allocation1] ss:$2 sm:$0xff] %v1975
        %s2099 = scalar_lea.vmem [#allocation1], 1
        %2100 = vst [vmem:[%s2099] ss:$2 sm:$0xff] %v1979
        %s2101 = scalar_lea.vmem [#allocation1], 16
        %2102 = vst [vmem:[%s2101] ss:$2 sm:$0xff] %v1983
        %s2103 = scalar_lea.vmem [#allocation1], 17
        %2104 = vst [vmem:[%s2103] ss:$2 sm:$0xff] %v1987
        %s2105 = scalar_lea.vmem [#allocation1], 32
        %2106 = vst [vmem:[%s2105] ss:$2 sm:$0xff] %v1991
        %s2107 = scalar_lea.vmem [#allocation1], 33
        %2108 = vst [vmem:[%s2107] ss:$2 sm:$0xff] %v1995
        %s2109 = scalar_lea.vmem [#allocation1], 48
        %2110 = vst [vmem:[%s2109] ss:$2 sm:$0xff] %v1999
        %s2111 = scalar_lea.vmem [#allocation1], 49
        %2112 = vst [vmem:[%s2111] ss:$2 sm:$0xff] %v2003
        %v2113 = vld.sshfl [vmem:[#allocation1] sm:$0xff pattern:$0x75316420]
        %v2114 = vld.sshfl [vmem:[#allocation1 + $0x10] sm:$0xff pattern:$0x75316420]
        %v2115 = vld.sshfl [vmem:[#allocation1 + $0x20] sm:$0xff pattern:$0x75316420]
        %v2116 = vld.sshfl [vmem:[#allocation1 + $0x30] sm:$0xff pattern:$0x75316420]
        %2117 = vrot.lane.b32.xlu0 %v2113, 32
        %v2118 = vpop.permute.xlu0 %2117
        %2119 = vrot.lane.b32.xlu0 %v2114, 32
        %v2120 = vpop.permute.xlu0 %2119
        %2121 = vrot.lane.b32.xlu0 %v2115, 32
        %v2122 = vpop.permute.xlu0 %2121
        %2123 = vrot.lane.b32.xlu0 %v2116, 32
        %v2124 = vpop.permute.xlu0 %2123
        %2129 = vst [vmem:[#allocation1] ss:$2 sm:$0xff] %v1894
        %s2130 = scalar_lea.vmem [#allocation1], 1
        %2131 = vst [vmem:[%s2130] ss:$2 sm:$0xff] %v1895
        %s2132 = scalar_lea.vmem [#allocation1], 16
        %2133 = vst [vmem:[%s2132] ss:$2 sm:$0xff] %v1896
        %s2134 = scalar_lea.vmem [#allocation1], 17
        %2135 = vst [vmem:[%s2134] ss:$2 sm:$0xff] %v1897
        %s2136 = scalar_lea.vmem [#allocation1], 32
        %2137 = vst [vmem:[%s2136] ss:$2 sm:$0xff] %v1900
        %s2138 = scalar_lea.vmem [#allocation1], 33
        %2139 = vst [vmem:[%s2138] ss:$2 sm:$0xff] %v1901
        %s2140 = scalar_lea.vmem [#allocation1], 48
        %2141 = vst [vmem:[%s2140] ss:$2 sm:$0xff] %v1902
        %s2142 = scalar_lea.vmem [#allocation1], 49
        %2143 = vst [vmem:[%s2142] ss:$2 sm:$0xff] %v1903
        %v2144 = vld.sshfl [vmem:[#allocation1] sm:$0xff pattern:$0x75316420]
        %v2145 = vld.sshfl [vmem:[#allocation1 + $0x10] sm:$0xff pattern:$0x75316420]
        %v2146 = vld.sshfl [vmem:[#allocation1 + $0x20] sm:$0xff pattern:$0x75316420]
        %v2147 = vld.sshfl [vmem:[#allocation1 + $0x30] sm:$0xff pattern:$0x75316420]
        %2148 = vrot.lane.b32.xlu0 %v2144, 48
        %v2149 = vpop.permute.xlu0 %2148
        %2150 = vrot.lane.b32.xlu0 %v2145, 48
        %v2151 = vpop.permute.xlu0 %2150
        %2152 = vrot.lane.b32.xlu0 %v2146, 48
        %v2153 = vpop.permute.xlu0 %2152
        %2154 = vrot.lane.b32.xlu0 %v2147, 48
        %v2155 = vpop.permute.xlu0 %2154
        %2160 = vst [vmem:[#allocation1] ss:$2 sm:$0xff] %v1947
        %s2161 = scalar_lea.vmem [#allocation1], 1
        %2162 = vst [vmem:[%s2161] ss:$2 sm:$0xff] %v1951
        %s2163 = scalar_lea.vmem [#allocation1], 16
        %2164 = vst [vmem:[%s2163] ss:$2 sm:$0xff] %v1955
        %s2165 = scalar_lea.vmem [#allocation1], 17
        %2166 = vst [vmem:[%s2165] ss:$2 sm:$0xff] %v2011
        %s2167 = scalar_lea.vmem [#allocation1], 32
        %2168 = vst [vmem:[%s2167] ss:$2 sm:$0xff] %v1963
        %s2169 = scalar_lea.vmem [#allocation1], 33
        %2170 = vst [vmem:[%s2169] ss:$2 sm:$0xff] %v1967
        %s2171 = scalar_lea.vmem [#allocation1], 48
        %2172 = vst [vmem:[%s2171] ss:$2 sm:$0xff] %v1971
        %s2173 = scalar_lea.vmem [#allocation1], 49
        %2174 = vst [vmem:[%s2173] ss:$2 sm:$0xff] %v2015
        %v2175 = vld.sshfl [vmem:[#allocation1] sm:$0xff pattern:$0x75316420]
        %v2176 = vld.sshfl [vmem:[#allocation1 + $0x10] sm:$0xff pattern:$0x75316420]
        %v2177 = vld.sshfl [vmem:[#allocation1 + $0x20] sm:$0xff pattern:$0x75316420]
        %v2178 = vld.sshfl [vmem:[#allocation1 + $0x30] sm:$0xff pattern:$0x75316420]
        %2179 = vrot.lane.b32.xlu0 %v2175, 64
        %v2180 = vpop.permute.xlu0 %2179
        %2181 = vrot.lane.b32.xlu0 %v2176, 64
        %v2182 = vpop.permute.xlu0 %2181
        %2183 = vrot.lane.b32.xlu0 %v2177, 64
        %v2184 = vpop.permute.xlu0 %2183
        %2185 = vrot.lane.b32.xlu0 %v2178, 64
        %v2186 = vpop.permute.xlu0 %2185
        %2191 = vst [vmem:[#allocation1] ss:$2 sm:$0xff] %v1979
        %s2192 = scalar_lea.vmem [#allocation1], 1
        %2193 = vst [vmem:[%s2192] ss:$2 sm:$0xff] %v1983
        %s2194 = scalar_lea.vmem [#allocation1], 16
        %2195 = vst [vmem:[%s2194] ss:$2 sm:$0xff] %v1987
        %s2196 = scalar_lea.vmem [#allocation1], 17
        %2197 = vst [vmem:[%s2196] ss:$2 sm:$0xff] %v2019
        %s2198 = scalar_lea.vmem [#allocation1], 32
        %2199 = vst [vmem:[%s2198] ss:$2 sm:$0xff] %v1995
        %s2200 = scalar_lea.vmem [#allocation1], 33
        %2201 = vst [vmem:[%s2200] ss:$2 sm:$0xff] %v1999
        %s2202 = scalar_lea.vmem [#allocation1], 48
        %2203 = vst [vmem:[%s2202] ss:$2 sm:$0xff] %v2003
        %s2204 = scalar_lea.vmem [#allocation1], 49
        %2205 = vst [vmem:[%s2204] ss:$2 sm:$0xff] %v2023
        %v2206 = vld.sshfl [vmem:[#allocation1] sm:$0xff pattern:$0x75316420]
        %v2207 = vld.sshfl [vmem:[#allocation1 + $0x10] sm:$0xff pattern:$0x75316420]
        %v2208 = vld.sshfl [vmem:[#allocation1 + $0x20] sm:$0xff pattern:$0x75316420]
        %v2209 = vld.sshfl [vmem:[#allocation1 + $0x30] sm:$0xff pattern:$0x75316420]
        %2210 = vrot.lane.b32.xlu0 %v2206, 80
        %v2211 = vpop.permute.xlu0 %2210
        %2212 = vrot.lane.b32.xlu0 %v2207, 80
        %v2213 = vpop.permute.xlu0 %2212
        %2214 = vrot.lane.b32.xlu0 %v2208, 80
        %v2215 = vpop.permute.xlu0 %2214
        %2216 = vrot.lane.b32.xlu0 %v2209, 80
        %v2217 = vpop.permute.xlu0 %2216
        %2222 = vst [vmem:[#allocation1] ss:$2 sm:$0xff] %v1895
        %s2223 = scalar_lea.vmem [#allocation1], 1
        %2224 = vst [vmem:[%s2223] ss:$2 sm:$0xff] %v1896
        %s2225 = scalar_lea.vmem [#allocation1], 16
        %2226 = vst [vmem:[%s2225] ss:$2 sm:$0xff] %v1897
        %s2227 = scalar_lea.vmem [#allocation1], 17
        %2228 = vst [vmem:[%s2227] ss:$2 sm:$0xff] %v1898
        %s2229 = scalar_lea.vmem [#allocation1], 32
        %2230 = vst [vmem:[%s2229] ss:$2 sm:$0xff] %v1901
        %s2231 = scalar_lea.vmem [#allocation1], 33
        %2232 = vst [vmem:[%s2231] ss:$2 sm:$0xff] %v1902
        %s2233 = scalar_lea.vmem [#allocation1], 48
        %2234 = vst [vmem:[%s2233] ss:$2 sm:$0xff] %v1903
        %s2235 = scalar_lea.vmem [#allocation1], 49
        %2236 = vst [vmem:[%s2235] ss:$2 sm:$0xff] %v1904
        %v2237 = vld.sshfl [vmem:[#allocation1] sm:$0xff pattern:$0x75316420]
        %v2238 = vld.sshfl [vmem:[#allocation1 + $0x10] sm:$0xff pattern:$0x75316420]
        %v2239 = vld.sshfl [vmem:[#allocation1 + $0x20] sm:$0xff pattern:$0x75316420]
        %v2240 = vld.sshfl [vmem:[#allocation1 + $0x30] sm:$0xff pattern:$0x75316420]
        %2241 = vrot.lane.b32.xlu0 %v2237, 96
        %v2242 = vpop.permute.xlu0 %2241
        %2243 = vrot.lane.b32.xlu0 %v2238, 96
        %v2244 = vpop.permute.xlu0 %2243
        %2245 = vrot.lane.b32.xlu0 %v2239, 96
        %v2246 = vpop.permute.xlu0 %2245
        %2247 = vrot.lane.b32.xlu0 %v2240, 96
        %v2248 = vpop.permute.xlu0 %2247
        %2253 = vst [vmem:[#allocation1] ss:$2 sm:$0xff] %v1951
        %s2254 = scalar_lea.vmem [#allocation1], 1
        %2255 = vst [vmem:[%s2254] ss:$2 sm:$0xff] %v1955
        %s2256 = scalar_lea.vmem [#allocation1], 16
        %2257 = vst [vmem:[%s2256] ss:$2 sm:$0xff] %v2011
        %s2258 = scalar_lea.vmem [#allocation1], 17
        %2259 = vst [vmem:[%s2258] ss:$2 sm:$0xff] %v2031
        %s2260 = scalar_lea.vmem [#allocation1], 32
        %2261 = vst [vmem:[%s2260] ss:$2 sm:$0xff] %v1967
        %s2262 = scalar_lea.vmem [#allocation1], 33
        %2263 = vst [vmem:[%s2262] ss:$2 sm:$0xff] %v1971
        %s2264 = scalar_lea.vmem [#allocation1], 48
        %2265 = vst [vmem:[%s2264] ss:$2 sm:$0xff] %v2015
        %s2266 = scalar_lea.vmem [#allocation1], 49
        %2267 = vst [vmem:[%s2266] ss:$2 sm:$0xff] %v2035
        %v2268 = vld.sshfl [vmem:[#allocation1] sm:$0xff pattern:$0x75316420]
        %v2269 = vld.sshfl [vmem:[#allocation1 + $0x10] sm:$0xff pattern:$0x75316420]
        %v2270 = vld.sshfl [vmem:[#allocation1 + $0x20] sm:$0xff pattern:$0x75316420]
        %v2271 = vld.sshfl [vmem:[#allocation1 + $0x30] sm:$0xff pattern:$0x75316420]
        %2272 = vrot.lane.b32.xlu0 %v2268, 112
        %v2273 = vpop.permute.xlu0 %2272
        %2274 = vrot.lane.b32.xlu0 %v2269, 112
        %v2275 = vpop.permute.xlu0 %2274
        %2276 = vrot.lane.b32.xlu0 %v2270, 112
        %v2277 = vpop.permute.xlu0 %2276
        %2278 = vrot.lane.b32.xlu0 %v2271, 112
        %v2279 = vpop.permute.xlu0 %2278
        %2284 = vst [vmem:[#allocation1] ss:$2 sm:$0xff] %v1983
        %s2285 = scalar_lea.vmem [#allocation1], 1
        %2286 = vst [vmem:[%s2285] ss:$2 sm:$0xff] %v1987
        %s2287 = scalar_lea.vmem [#allocation1], 16
        %2288 = vst [vmem:[%s2287] ss:$2 sm:$0xff] %v2019
        %s2289 = scalar_lea.vmem [#allocation1], 17
        %2290 = vst [vmem:[%s2289] ss:$2 sm:$0xff] %v2039
        %s2291 = scalar_lea.vmem [#allocation1], 32
        %2292 = vst [vmem:[%s2291] ss:$2 sm:$0xff] %v1999
        %s2293 = scalar_lea.vmem [#allocation1], 33
        %2294 = vst [vmem:[%s2293] ss:$2 sm:$0xff] %v2003
        %s2295 = scalar_lea.vmem [#allocation1], 48
        %2296 = vst [vmem:[%s2295] ss:$2 sm:$0xff] %v2023
        %s2297 = scalar_lea.vmem [#allocation1], 49
        %2298 = vst [vmem:[%s2297] ss:$2 sm:$0xff] %v2043
        %v2299 = vld.sshfl [vmem:[#allocation1] sm:$0xff pattern:$0x75316420]
        %v2300 = vld.sshfl [vmem:[#allocation1 + $0x10] sm:$0xff pattern:$0x75316420]
        %v2301 = vld.sshfl [vmem:[#allocation1 + $0x20] sm:$0xff pattern:$0x75316420]
        %v2302 = vld.sshfl [vmem:[#allocation1 + $0x30] sm:$0xff pattern:$0x75316420]
        %v2307 = vsel %vm1259, %v2059, %v2087
        %v2308 = vsel %vm1259, %v2060, %v2089
        %v2309 = vsel %vm1259, %v2061, %v2091
        %v2310 = vsel %vm1259, %v2062, %v2093
        %v2311 = vsel %vm772, %v2307, %v2118
        %v2312 = vsel %vm772, %v2308, %v2120
        %v2313 = vsel %vm772, %v2309, %v2122
        %v2314 = vsel %vm772, %v2310, %v2124
        %v2315 = vsel %vm1268, %v2311, %v2149
        %v2316 = vsel %vm1268, %v2312, %v2151
        %v2317 = vsel %vm1268, %v2313, %v2153
        %v2318 = vsel %vm1268, %v2314, %v2155
        %v2319 = vsel %vm1273, %v2315, %v2180
        %v2320 = vsel %vm1273, %v2316, %v2182
        %v2321 = vsel %vm1273, %v2317, %v2184
        %v2322 = vsel %vm1273, %v2318, %v2186
        %v2323 = vsel %vm1278, %v2319, %v2211
        %v2324 = vsel %vm1278, %v2320, %v2213
        %v2325 = vsel %vm1278, %v2321, %v2215
        %v2326 = vsel %vm1278, %v2322, %v2217
        %v2327 = vsel %vm1283, %v2323, %v2242
        %v2328 = vsel %vm1283, %v2324, %v2244
        %v2329 = vsel %vm1283, %v2325, %v2246
        %v2330 = vsel %vm1283, %v2326, %v2248
        %v2331 = vsel %vm1288, %v2327, %v2273
        %v2332 = vsel %vm1288, %v2328, %v2275
        %v2333 = vsel %vm1288, %v2329, %v2277
        %v2334 = vsel %vm1288, %v2330, %v2279
        %v2335 = vpack.c.bf16 %v2332, %v2331
        %v2336 = vpack.c.bf16 %v2300, %v2299
        %v2337 = vpack.c.bf16 %v2334, %v2333
        %v2338 = vpack.c.bf16 %v2302, %v2301
        %v2340 = vperm.slane %v1923, 0
        %v2341 = vperm.slane %v1923, 1
        %v2362 = vunpack.c.l.b16 %v1905
        %v2363 = vunpack.c.h.b16 %v1905
        %v2364 = vunpack.c.l.b16 %v1906
        %v2365 = vunpack.c.h.b16 %v1906
        %v2366 = vunpack.c.l.b16 %v1907
        %v2367 = vunpack.c.h.b16 %v1907
        %v2368 = vunpack.c.l.b16 %v1908
        %v2369 = vunpack.c.h.b16 %v1908
        %v2370 = vunpack.c.l.b16 %v1909
        %v2371 = vunpack.c.h.b16 %v1909
        %v2372 = vunpack.c.l.b16 %v1910
        %v2373 = vunpack.c.h.b16 %v1910
        %v2374 = vunpack.c.l.b16 %v1911
        %v2375 = vunpack.c.h.b16 %v1911
        %v2376 = vunpack.c.l.b16 %v1912
        %v2377 = vunpack.c.h.b16 %v1912
        %v2378 = vunpack.c.l.b16 %v1913
        %v2379 = vunpack.c.h.b16 %v1913
        %v2380 = vunpack.c.l.b16 %v1914
        %v2381 = vunpack.c.h.b16 %v1914
        %v2382 = vunpack.c.l.b16 %v1915
        %v2383 = vunpack.c.h.b16 %v1915
        %v2384 = vunpack.c.l.b16 %v1916
        %v2385 = vunpack.c.h.b16 %v1916
        %v2386 = vunpack.c.l.b16 %v1917
        %v2387 = vunpack.c.h.b16 %v1917
        %v2388 = vunpack.c.l.b16 %v1918
        %v2389 = vunpack.c.h.b16 %v1918
        %v2390 = vunpack.c.l.b16 %v1919
        %v2391 = vunpack.c.h.b16 %v1919
        %v2392 = vunpack.c.l.b16 %v1920
        %v2393 = vunpack.c.h.b16 %v1920
        %v2394 = vunpack.c.l.b16 %v1921
        %v2395 = vunpack.c.h.b16 %v1921
        %v2396 = vunpack.c.l.b16 %v1922
        %v2397 = vunpack.c.h.b16 %v1922
        %v2398 = vpack.c.b16 %v2364, %v2362
        %v2399 = vpack.c.b16 %v2365, %v2363
        %v2400 = vpack.c.b16 %v2368, %v2366
        %v2401 = vpack.c.b16 %v2369, %v2367
        %v2402 = vpack.c.b16 %v2372, %v2370
        %v2403 = vpack.c.b16 %v2373, %v2371
        %v2404 = vpack.c.b16 %v2376, %v2374
        %v2405 = vpack.c.b16 %v2377, %v2375
        %v2406 = vpack.c.b16 %v2380, %v2378
        %v2407 = vpack.c.b16 %v2381, %v2379
        %v2408 = vpack.c.b16 %v2384, %v2382
        %v2409 = vpack.c.b16 %v2385, %v2383
        %v2410 = vpack.c.b16 %v2388, %v2386
        %v2411 = vpack.c.b16 %v2389, %v2387
        %v2412 = vpack.c.b16 %v2392, %v2390
        %v2413 = vpack.c.b16 %v2393, %v2391
        %v2414 = vpack.c.b16 %v2396, %v2394
        %v2415 = vpack.c.b16 %v2397, %v2395
        %v2435 = vsel %vm1259, %v2336, 0
        %v2438 = vsel %vm1259, %v2338, 0
        %2440 = vmatpush.bf16.msra.mxu0 %v2412
        %2441 = vmatpush.bf16.msra.mxu0 %v2410
        %2442 = vmatpush.bf16.msra.mxu0 %v2408
        %2443 = vmatpush.bf16.msra.mxu0 %v2406
        %2444 = vmatpush.bf16.msra.mxu0 %v2404
        %2445 = vmatpush.bf16.msra.mxu0 %v2402
        %2446 = vmatpush.bf16.msra.mxu0 %v2400
        %2447 = vmatpush.bf16.msra.mxu0 %v2398
        %2448 = vmatmul.bf16.gmra.mxu0 %v2335
        %v2449 = vpop.f32.mrf.mxu0
        %v2450 = vadd.f32 %v2340, %v2449
        %v2451 = vpop.f32.mrf.mxu0
        %v2452 = vadd.f32 %v2340, %v2451
        %2453 = vmatmul.bf16.gmra.mxu0 %v2337
        %v2454 = vpop.f32.mrf.mxu0
        %v2455 = vadd.f32 %v2340, %v2454
        %v2456 = vpop.f32.mrf.mxu0
        %v2457 = vadd.f32 %v2340, %v2456
        %2458 = vdwg.mxu0
        %2459 = vmatpush.bf16.msra.mxu0 0
        %2460 = vmatpush.bf16.msra.mxu0 0
        %2461 = vmatpush.bf16.msra.mxu0 0
        %2462 = vmatpush.bf16.msra.mxu0 0
        %2463 = vmatpush.bf16.msra.mxu0 0
        %2464 = vmatpush.bf16.msra.mxu0 0
        %2465 = vmatpush.bf16.msra.mxu0 0
        %2466 = vmatpush.bf16.msra.mxu0 %v2414
        %2467 = vmatmul.bf16.gmra.mxu0 %v2435
        %v2468 = vpop.f32.mrf.mxu0
        %v2469 = vadd.f32 %v2450, %v2468
        %v2470 = vpop.f32.mrf.mxu0
        %v2471 = vadd.f32 %v2452, %v2470
        %2472 = vmatmul.bf16.gmra.mxu0 %v2438
        %v2473 = vpop.f32.mrf.mxu0
        %v2474 = vadd.f32 %v2455, %v2473
        %v2475 = vpop.f32.mrf.mxu0
        %v2476 = vadd.f32 %v2457, %v2475
        %2477 = vdwg.mxu0
        %2478 = vmatpush.bf16.msra.mxu0 %v2413
        %2479 = vmatpush.bf16.msra.mxu0 %v2411
        %2480 = vmatpush.bf16.msra.mxu0 %v2409
        %2481 = vmatpush.bf16.msra.mxu0 %v2407
        %2482 = vmatpush.bf16.msra.mxu0 %v2405
        %2483 = vmatpush.bf16.msra.mxu0 %v2403
        %2484 = vmatpush.bf16.msra.mxu0 %v2401
        %2485 = vmatpush.bf16.msra.mxu0 %v2399
        %2486 = vmatmul.bf16.gmra.mxu0 %v2335
        %v2487 = vpop.f32.mrf.mxu0
        %v2488 = vadd.f32 %v2341, %v2487
        %v2489 = vpop.f32.mrf.mxu0
        %v2490 = vadd.f32 %v2341, %v2489
        %2491 = vmatmul.bf16.gmra.mxu0 %v2337
        %v2492 = vpop.f32.mrf.mxu0
        %v2493 = vadd.f32 %v2341, %v2492
        %v2494 = vpop.f32.mrf.mxu0
        %v2495 = vadd.f32 %v2341, %v2494
        %2496 = vdwg.mxu0
        %2497 = vmatpush.bf16.msra.mxu0 0
        %2498 = vmatpush.bf16.msra.mxu0 0
        %2499 = vmatpush.bf16.msra.mxu0 0
        %2500 = vmatpush.bf16.msra.mxu0 0
        %2501 = vmatpush.bf16.msra.mxu0 0
        %2502 = vmatpush.bf16.msra.mxu0 0
        %2503 = vmatpush.bf16.msra.mxu0 0
        %2504 = vmatpush.bf16.msra.mxu0 %v2415
        %2505 = vmatmul.bf16.gmra.mxu0 %v2435
        %v2506 = vpop.f32.mrf.mxu0
        %v2507 = vadd.f32 %v2488, %v2506
        %v2508 = vpop.f32.mrf.mxu0
        %v2509 = vadd.f32 %v2490, %v2508
        %2510 = vmatmul.bf16.gmra.mxu0 %v2438
        %v2511 = vpop.f32.mrf.mxu0
        %v2512 = vadd.f32 %v2493, %v2511
        %v2513 = vpop.f32.mrf.mxu0
        %v2514 = vadd.f32 %v2495, %v2513
        %2515 = vdwg.mxu0
        %v2516 = vld [vmem:[%s720] sm:$0x3]
        %v2517 = vld [vmem:[%s725] sm:$0x3]
        %v2518 = vadd.f32 %v2469, %v2471
        %v2519 = vrot.slane %v2518, 4
        %v2520 = vadd.f32 %v2518, %v2519
        %v2521 = vrot.slane %v2520, 2
        %v2522 = vadd.f32 %v2520, %v2521
        %v2523 = vrot.slane %v2522, 1
        %v2524 = vadd.f32 %v2522, %v2523
        %v2525 = vadd.f32 %v2507, %v2509
        %v2526 = vrot.slane %v2525, 4
        %v2527 = vadd.f32 %v2525, %v2526
        %v2528 = vrot.slane %v2527, 2
        %v2529 = vadd.f32 %v2527, %v2528
        %v2530 = vrot.slane %v2529, 1
        %v2531 = vadd.f32 %v2529, %v2530
        %v2532 = vadd.f32 %v2474, %v2476
        %v2533 = vrot.slane %v2532, 4
        %v2534 = vadd.f32 %v2532, %v2533
        %v2535 = vrot.slane %v2534, 2
        %v2536 = vadd.f32 %v2534, %v2535
        %v2537 = vrot.slane %v2536, 1
        %v2538 = vadd.f32 %v2536, %v2537
        %v2539 = vadd.f32 %v2512, %v2514
        %v2540 = vrot.slane %v2539, 4
        %v2541 = vadd.f32 %v2539, %v2540
        %v2542 = vrot.slane %v2541, 2
        %v2543 = vadd.f32 %v2541, %v2542
        %v2544 = vrot.slane %v2543, 1
        %v2545 = vadd.f32 %v2543, %v2544
        %v2550 = vsel %vm1508, %v2538, %v2524
        %v2551 = vsel %vm1508, %v2545, %v2531
        %2554 = vmatpush.msra.mxu0 %v745
        %2555 = vmatpush.msra.mxu0 %v744
        %2556 = vmatpush.msra.mxu0 %v743
        %2557 = vmatpush.msra.mxu0 %v742
        %2558 = vmatpush.msra.mxu0 %v741
        %2559 = vmatpush.msra.mxu0 %v740
        %2560 = vmatpush.msra.mxu0 %v739
        %2561 = vmatpush.msra.mxu0 %v738
        %2562 = vmatpush.msra.mxu0 %v737
        %2563 = vmatpush.msra.mxu0 %v736
        %2564 = vmatpush.msra.mxu0 %v735
        %2565 = vmatpush.msra.mxu0 %v734
        %2566 = vmatpush.msra.mxu0 %v733
        %2567 = vmatpush.msra.mxu0 %v732
        %2568 = vmatpush.msra.mxu0 %v731
        %2569 = vmatpush.msra.mxu0 %v730
        %2570 = vmatmul.f32.gmra.mxu0 %v2550
        %v2571 = vpop.f32.mrf.mxu0
        %v2572 = vadd.f32 0.0, %v2571
        %2573 = vdwg.mxu0
        %2574 = vmatpush.msra.mxu0 %v761
        %2575 = vmatpush.msra.mxu0 %v760
        %2576 = vmatpush.msra.mxu0 %v759
        %2577 = vmatpush.msra.mxu0 %v758
        %2578 = vmatpush.msra.mxu0 %v757
        %2579 = vmatpush.msra.mxu0 %v756
        %2580 = vmatpush.msra.mxu0 %v755
        %2581 = vmatpush.msra.mxu0 %v754
        %2582 = vmatpush.msra.mxu0 %v753
        %2583 = vmatpush.msra.mxu0 %v752
        %2584 = vmatpush.msra.mxu0 %v751
        %2585 = vmatpush.msra.mxu0 %v750
        %2586 = vmatpush.msra.mxu0 %v749
        %2587 = vmatpush.msra.mxu0 %v748
        %2588 = vmatpush.msra.mxu0 %v747
        %2589 = vmatpush.msra.mxu0 %v746
        %2590 = vmatmul.f32.gmra.mxu0 %v2551
        %v2591 = vpop.f32.mrf.mxu0
        %v2592 = vadd.f32 %v2572, %v2591
        %2593 = vdwg.mxu0
        %v2594 = vmul.f32 %v2592, %v1559
        %v2596 = vsel %vm1561, %v2594, 0
        %2598 = vmatpush.msra.mxu0 0.0
        %2599 = vmatpush.msra.mxu0 0.0
        %2600 = vmatpush.msra.mxu0 0.0
        %2601 = vmatpush.msra.mxu0 0.0
        %2602 = vmatpush.msra.mxu0 0.0
        %2603 = vmatpush.msra.mxu0 0.0
        %2604 = vmatpush.msra.mxu0 0.0
        %2605 = vmatpush.msra.mxu0 0.0
        %2606 = vmatpush.msra.mxu0 0.0
        %2607 = vmatpush.msra.mxu0 0.0
        %2608 = vmatpush.msra.mxu0 0.0
        %2609 = vmatpush.msra.mxu0 0.0
        %2610 = vmatpush.msra.mxu0 0.0
        %2611 = vmatpush.msra.mxu0 0.0
        %2612 = vmatpush.msra.mxu0 0.0
        %2613 = vmatpush.msra.mxu0 %v762
        %2614 = vmatmul.f32.gmra.mxu0 %v2596
        %v2615 = vpop.f32.mrf.mxu0
        %v2616 = vadd.f32 0.0, %v2615
        %2617 = vdwg.mxu0
        %2618 = vmatpush.msra.mxu0 0.0
        %2619 = vmatpush.msra.mxu0 0.0
        %2620 = vmatpush.msra.mxu0 0.0
        %2621 = vmatpush.msra.mxu0 0.0
        %2622 = vmatpush.msra.mxu0 0.0
        %2623 = vmatpush.msra.mxu0 0.0
        %2624 = vmatpush.msra.mxu0 0.0
        %2625 = vmatpush.msra.mxu0 0.0
        %2626 = vmatpush.msra.mxu0 0.0
        %2627 = vmatpush.msra.mxu0 0.0
        %2628 = vmatpush.msra.mxu0 0.0
        %2629 = vmatpush.msra.mxu0 0.0
        %2630 = vmatpush.msra.mxu0 0.0
        %2631 = vmatpush.msra.mxu0 0.0
        %2632 = vmatpush.msra.mxu0 0.0
        %2633 = vmatpush.msra.mxu0 %v763
        %2634 = vmatmul.f32.gmra.mxu0 %v2596
        %v2635 = vpop.f32.mrf.mxu0
        %v2636 = vadd.f32 0.0, %v2635
        %2637 = vdwg.mxu0
        %v2640 = vrot.slane %v2636, 7
        %v2641 = vsel %vm1608, %v2616, %v2640
        %v2642 = vsel %vm1508, %v2616, %v2640
        %v2643 = vrot.slane %v2642, 1
        %v2644 = vperm.slane %v2641, 0
        %v2645 = vperm.slane %v2641, 1
        %v2646 = vperm.slane %v2643, 0
        %v2647 = vperm.slane %v2643, 1
        %v2652 = vsub.f32 %v2469, %v2644
        %v2653 = vsub.f32 %v2507, %v2645
        %v2654 = vsub.f32 %v2471, %v2644
        %v2655 = vsub.f32 %v2509, %v2645
        %v2656 = vsub.f32 %v2474, %v2646
        %v2657 = vsub.f32 %v2512, %v2647
        %v2658 = vsub.f32 %v2476, %v2646
        %v2659 = vsub.f32 %v2514, %v2647
        %v2660 = vmul.f32 %v2652, %v2652
        %v2661 = vmul.f32 %v2653, %v2653
        %v2662 = vmul.f32 %v2654, %v2654
        %v2663 = vmul.f32 %v2655, %v2655
        %v2664 = vmul.f32 %v2656, %v2656
        %v2665 = vmul.f32 %v2657, %v2657
        %v2666 = vmul.f32 %v2658, %v2658
        %v2667 = vmul.f32 %v2659, %v2659
        %v2668 = vadd.f32 %v2660, %v2662
        %v2669 = vrot.slane %v2668, 4
        %v2670 = vadd.f32 %v2668, %v2669
        %v2671 = vrot.slane %v2670, 2
        %v2672 = vadd.f32 %v2670, %v2671
        %v2673 = vrot.slane %v2672, 1
        %v2674 = vadd.f32 %v2672, %v2673
        %v2675 = vadd.f32 %v2661, %v2663
        %v2676 = vrot.slane %v2675, 4
        %v2677 = vadd.f32 %v2675, %v2676
        %v2678 = vrot.slane %v2677, 2
        %v2679 = vadd.f32 %v2677, %v2678
        %v2680 = vrot.slane %v2679, 1
        %v2681 = vadd.f32 %v2679, %v2680
        %v2682 = vadd.f32 %v2664, %v2666
        %v2683 = vrot.slane %v2682, 4
        %v2684 = vadd.f32 %v2682, %v2683
        %v2685 = vrot.slane %v2684, 2
        %v2686 = vadd.f32 %v2684, %v2685
        %v2687 = vrot.slane %v2686, 1
        %v2688 = vadd.f32 %v2686, %v2687
        %v2689 = vadd.f32 %v2665, %v2667
        %v2690 = vrot.slane %v2689, 4
        %v2691 = vadd.f32 %v2689, %v2690
        %v2692 = vrot.slane %v2691, 2
        %v2693 = vadd.f32 %v2691, %v2692
        %v2694 = vrot.slane %v2693, 1
        %v2695 = vadd.f32 %v2693, %v2694
        %v2700 = vsel %vm1508, %v2688, %v2674
        %v2701 = vsel %vm1508, %v2695, %v2681
        %2704 = vmatpush.msra.mxu0 %v745
        %2705 = vmatpush.msra.mxu0 %v744
        %2706 = vmatpush.msra.mxu0 %v743
        %2707 = vmatpush.msra.mxu0 %v742
        %2708 = vmatpush.msra.mxu0 %v741
        %2709 = vmatpush.msra.mxu0 %v740
        %2710 = vmatpush.msra.mxu0 %v739
        %2711 = vmatpush.msra.mxu0 %v738
        %2712 = vmatpush.msra.mxu0 %v737
        %2713 = vmatpush.msra.mxu0 %v736
        %2714 = vmatpush.msra.mxu0 %v735
        %2715 = vmatpush.msra.mxu0 %v734
        %2716 = vmatpush.msra.mxu0 %v733
        %2717 = vmatpush.msra.mxu0 %v732
        %2718 = vmatpush.msra.mxu0 %v731
        %2719 = vmatpush.msra.mxu0 %v730
        %2720 = vmatmul.f32.gmra.mxu0 %v2700
        %v2721 = vpop.f32.mrf.mxu0
        %v2722 = vadd.f32 0.0, %v2721
        %2723 = vdwg.mxu0
        %2724 = vmatpush.msra.mxu0 %v761
        %2725 = vmatpush.msra.mxu0 %v760
        %2726 = vmatpush.msra.mxu0 %v759
        %2727 = vmatpush.msra.mxu0 %v758
        %2728 = vmatpush.msra.mxu0 %v757
        %2729 = vmatpush.msra.mxu0 %v756
        %2730 = vmatpush.msra.mxu0 %v755
        %2731 = vmatpush.msra.mxu0 %v754
        %2732 = vmatpush.msra.mxu0 %v753
        %2733 = vmatpush.msra.mxu0 %v752
        %2734 = vmatpush.msra.mxu0 %v751
        %2735 = vmatpush.msra.mxu0 %v750
        %2736 = vmatpush.msra.mxu0 %v749
        %2737 = vmatpush.msra.mxu0 %v748
        %2738 = vmatpush.msra.mxu0 %v747
        %2739 = vmatpush.msra.mxu0 %v746
        %2740 = vmatmul.f32.gmra.mxu0 %v2701
        %v2741 = vpop.f32.mrf.mxu0
        %v2742 = vadd.f32 %v2722, %v2741
        %2743 = vdwg.mxu0
        %v2744 = vmul.f32 %v2742, %v1559
        %v2745 = vadd.f32 %v2744, 1e-05
        %v2746 = vrsqrt.pop %v2745
        %v2747 = vmul.f32 %v2746, %v2745
        %v2748 = vmul.f32 %v2747, %v2746
        %v2749 = vmul.f32 0.5, %v2748
        %v2750 = vsub.f32 1.5, %v2749
        %v2751 = vmul.f32 %v2746, %v2750
        %vm2752 = vweird.f32 %v2745
        %vm2753 = vweird.f32 %v2746
        %vm2754 = vmor %vm2752, %vm2753
        %v2755 = vsel %vm2754, %v2746, %v2751
        %v2757 = vsel %vm1561, %v2755, 0
        %2759 = vmatpush.msra.mxu0 0.0
        %2760 = vmatpush.msra.mxu0 0.0
        %2761 = vmatpush.msra.mxu0 0.0
        %2762 = vmatpush.msra.mxu0 0.0
        %2763 = vmatpush.msra.mxu0 0.0
        %2764 = vmatpush.msra.mxu0 0.0
        %2765 = vmatpush.msra.mxu0 0.0
        %2766 = vmatpush.msra.mxu0 0.0
        %2767 = vmatpush.msra.mxu0 0.0
        %2768 = vmatpush.msra.mxu0 0.0
        %2769 = vmatpush.msra.mxu0 0.0
        %2770 = vmatpush.msra.mxu0 0.0
        %2771 = vmatpush.msra.mxu0 0.0
        %2772 = vmatpush.msra.mxu0 0.0
        %2773 = vmatpush.msra.mxu0 0.0
        %2774 = vmatpush.msra.mxu0 %v762
        %2775 = vmatmul.f32.gmra.mxu0 %v2757
        %v2776 = vpop.f32.mrf.mxu0
        %v2777 = vadd.f32 0.0, %v2776
        %2778 = vdwg.mxu0
        %2779 = vmatpush.msra.mxu0 0.0
        %2780 = vmatpush.msra.mxu0 0.0
        %2781 = vmatpush.msra.mxu0 0.0
        %2782 = vmatpush.msra.mxu0 0.0
        %2783 = vmatpush.msra.mxu0 0.0
        %2784 = vmatpush.msra.mxu0 0.0
        %2785 = vmatpush.msra.mxu0 0.0
        %2786 = vmatpush.msra.mxu0 0.0
        %2787 = vmatpush.msra.mxu0 0.0
        %2788 = vmatpush.msra.mxu0 0.0
        %2789 = vmatpush.msra.mxu0 0.0
        %2790 = vmatpush.msra.mxu0 0.0
        %2791 = vmatpush.msra.mxu0 0.0
        %2792 = vmatpush.msra.mxu0 0.0
        %2793 = vmatpush.msra.mxu0 0.0
        %2794 = vmatpush.msra.mxu0 %v763
        %2795 = vmatmul.f32.gmra.mxu0 %v2757
        %v2796 = vpop.f32.mrf.mxu0
        %v2797 = vadd.f32 0.0, %v2796
        %2798 = vdwg.mxu0
        %v2801 = vrot.slane %v2797, 7
        %v2802 = vsel %vm1608, %v2777, %v2801
        %v2803 = vsel %vm1508, %v2777, %v2801
        %v2804 = vrot.slane %v2803, 1
        %v2805 = vperm.slane %v2802, 0
        %v2806 = vperm.slane %v2802, 1
        %v2807 = vperm.slane %v2804, 0
        %v2808 = vperm.slane %v2804, 1
        %v2813 = vmul.f32 %v2652, %v2805
        %v2814 = vmul.f32 %v2653, %v2806
        %v2815 = vmul.f32 %v2654, %v2805
        %v2816 = vmul.f32 %v2655, %v2806
        %v2817 = vmul.f32 %v2656, %v2807
        %v2818 = vmul.f32 %v2657, %v2808
        %v2819 = vmul.f32 %v2658, %v2807
        %v2820 = vmul.f32 %v2659, %v2808
        %v2822 = vperm.slane %v2516, 0
        %v2823 = vperm.slane %v2516, 1
        %v2826 = vmul.f32 %v2813, %v2822
        %v2827 = vmul.f32 %v2814, %v2823
        %v2828 = vmul.f32 %v2815, %v2822
        %v2829 = vmul.f32 %v2816, %v2823
        %v2830 = vmul.f32 %v2817, %v2822
        %v2831 = vmul.f32 %v2818, %v2823
        %v2832 = vmul.f32 %v2819, %v2822
        %v2833 = vmul.f32 %v2820, %v2823
        %v2835 = vperm.slane %v2517, 0
        %v2836 = vperm.slane %v2517, 1
        %v2839 = vadd.f32 %v2826, %v2835
        %v2840 = vadd.f32 %v2827, %v2836
        %v2841 = vadd.f32 %v2828, %v2835
        %v2842 = vadd.f32 %v2829, %v2836
        %v2843 = vadd.f32 %v2830, %v2835
        %v2844 = vadd.f32 %v2831, %v2836
        %v2845 = vadd.f32 %v2832, %v2835
        %v2846 = vadd.f32 %v2833, %v2836
        %v2847 = vmax.f32 %v2839, 0.0
        %v2848 = vmax.f32 %v2840, 0.0
        %v2849 = vmax.f32 %v2841, 0.0
        %v2850 = vmax.f32 %v2842, 0.0
        %v2851 = vmax.f32 %v2843, 0.0
        %v2852 = vmax.f32 %v2844, 0.0
        %v2853 = vmax.f32 %v2845, 0.0
        %v2854 = vmax.f32 %v2846, 0.0
        %v2855 = vadd.f32 %v1815, %v2847
        %v2856 = vadd.f32 %v1816, %v2848
        %v2857 = vadd.f32 %v1817, %v2849
        %v2858 = vadd.f32 %v1818, %v2850
        %v2859 = vadd.f32 %v1819, %v2851
        %v2860 = vadd.f32 %v1820, %v2852
        %v2861 = vadd.f32 %v1821, %v2853
        %v2862 = vadd.f32 %v1822, %v2854
        %2863 = vst [vmem:[%s694] sm:$0xff] %v2855
        %2864 = vst [vmem:[%s694 + $0x8] sm:$0xff] %v2856
        %2865 = vst [vmem:[%s694 + $0x10] sm:$0xff] %v2857
        %2866 = vst [vmem:[%s694 + $0x18] sm:$0xff] %v2858
        %2867 = vst [vmem:[%s694 + $0x20] sm:$0xff] %v2859
        %2868 = vst [vmem:[%s694 + $0x28] sm:$0xff] %v2860
        %2869 = vst [vmem:[%s694 + $0x30] sm:$0xff] %v2861
        %2870 = vst [vmem:[%s694 + $0x38] sm:$0xff] %v2862
        %s2871 = sand.u32 %s442, 1
        %s2872 = scalar_lea.sflag [#allocation4], %s2871
        %s2873 = sand.u32 %s442, 1
        %s2874 = smul.addr %s2873, 64
        %s2875 = scalar_lea.vmem [#allocation7], %s2874
        // Predicated region
        $region97: #{tpu_custom_call.1} parent=87 // pred_check
          %p2876 = pneg %p452
        $region98: #{tpu_custom_call.1} parent=87 // pred_check_branch
          %2878 = sbr.rel (%p2876) target = $region100
        $region99: #{tpu_custom_call.1} parent=87 // pred_region
          %s2879 = smul.u32 2, %s37
          %2881 = vsyncadd %s2872, 0
          %s2882 = smul.addr %s2879, 8
          %s2883 = scalar_lea.hbm %s17, %s2882
          %s2884 = sshll.u32 %s2875, 4
          %s2885 = int_to_ptr.vmem [resolvable:$true] %s2884
          %s2886 = sshll.u32 %s2883, 4
          %s2887 = int_to_ptr.hbm [resolvable:$true] %s2886
          %2892 = dma.vmem_to_hbm [thread:$0]  %s2885, 1024, %s2887, %s2872, 256, 1024, 16
        $region100: #{tpu_custom_call.1} parent=87 // pred_fallthru
          _
      $region88: #{tpu_custom_call.1} parent=5 // pred_fallthru
        _
      %p2893 = scmp.le.s32.totalorder 2, %s32
      // Predicated region
      $region101: #{tpu_custom_call.1} parent=5 // pred_check
        %p2894 = pneg %p2893
      $region102: #{tpu_custom_call.1} parent=5 // pred_check_branch
        %2896 = sbr.rel (%p2894) target = $region104
      $region103: #{tpu_custom_call.1} parent=5 // pred_region
        %s2897 = ssub.s32 %s32, 2
        // Predicated region
        $region105: #{tpu_custom_call.1} parent=103 // pred_check
          %p2898 = pneg %p458
        $region106: #{tpu_custom_call.1} parent=103 // pred_check_branch
          %2900 = sbr.rel (%p2898) target = $region108
        $region107: #{tpu_custom_call.1} parent=103 // pred_region
          %s2901 = sand.u32 %s443, 1
          %s2902 = scalar_lea.sflag [#allocation4], %s2901
          %s2903 = sand.u32 %s443, 1
          %s2904 = smul.addr %s2903, 64
          %s2905 = scalar_lea.vmem [#allocation7], %s2904
          %2907 = dma.done %s2902, 1024
        $region108: #{tpu_custom_call.1} parent=103 // pred_fallthru
          _
      $region104: #{tpu_custom_call.1} parent=5 // pred_fallthru
        _
    $region6: #{tpu_custom_call.1} parent=1 // loop_footer
      %s36 = sadd.s32 1, %s32
    $region7: #{tpu_custom_call.1} parent=1 // loop_footer_branch
      %31 = sbr.rel target = $region3
    $region8: #{tpu_custom_call.1} parent=1 // loop_exit
      _
    %2908 = vsyncpa [#allocation3], 1
    %s2909 = scalar_lea.sflag [#allocation3], 1
    %2910 = vsyncpa %s2909, 1
    %2911 = vsyncpa [#allocation6], 1
    %s2912 = scalar_lea.sflag [#allocation6], 1
    %2913 = vsyncpa %s2912, 1
    %2914 = vsyncpa [#allocation4], 1
    %s2915 = scalar_lea.sflag [#allocation4], 1
    %2916 = vsyncpa %s2915, 1

</llo_original>
